<compile_context>
chip_gen: v6e
topology: v6e:2x2x1
jax: 0.10.0
libtpu: 0.0.40
codegen_flags: <defaults>
</compile_context>

<pallas_src>
import math
import functools

import numpy as np
import jax
import jax.numpy as jnp
from jax import lax
from jax.experimental import pallas as pl
from jax.experimental.pallas import tpu as pltpu

LN_EPS = 1e-5  # PyTorch nn.LayerNorm default


def _layer_norm(v, g, b):
    mu = jnp.mean(v, axis=-1, keepdims=True)
    var = jnp.mean(jnp.square(v - mu), axis=-1, keepdims=True)
    return (v - mu) * lax.rsqrt(var + LN_EPS) * g + b


# ----------------------------------------------------------------------------
# Pallas kernel: whole encoder layer for one batch element.
# ----------------------------------------------------------------------------
def _encoder_layer_kernel(
    x_ref,                               # (1, S, D)  f32
    cos_ref, sine_ref, sino_ref,         # (S, Dh)    f32 rotary tables
    wqkv_ref, wout_ref,                  # (D, 3D), (D, D)   bf16
    w1_ref, b1_ref,                      # (D, F) bf16, (1, F) f32
    w2_ref, b2_ref,                      # (F, D) bf16, (1, D) f32
    g1_ref, be1_ref, g2_ref, be2_ref,    # (1, D) f32
    out_ref,                             # (1, S, D)  f32
    attn_scratch,                        # (S, D) f32 VMEM scratch
    *, nhead: int, is_causal: bool,
):
    x = x_ref[0]                          # (S, D) f32
    S, D = x.shape
    Dh = D // nhead
    scale = 1.0 / math.sqrt(Dh)
    bf16 = jnp.bfloat16

    # ---------------- self-attention block ----------------
    xn = _layer_norm(x, g1_ref[...], be1_ref[...])                          # f32
    qkv = jnp.dot(xn.astype(bf16), wqkv_ref[...],
                  preferred_element_type=jnp.float32)                       # (S, 3D) f32

    # Head-batched (H, S, Dh) views, built once from static lane slices.
    def heads(base):
        return jnp.stack(
            [qkv[:, base + h * Dh: base + (h + 1) * Dh] for h in range(nhead)],
            axis=0)

    q3 = heads(0)                                                            # (H, S, Dh) f32
    k3 = heads(D)
    v3 = heads(2 * D).astype(bf16)

    # Interleaved rotary (lucidrains default, theta=10000):
    #   out[2j]   = x[2j]*cos_j - x[2j+1]*sin_j
    #   out[2j+1] = x[2j+1]*cos_j + x[2j]*sin_j
    # Permute-free: the parity select and the sign are folded into the tables,
    # so wrap-around elements of the shifts are multiplied by zero.
    cos = cos_ref[...]                    # (S, Dh), broadcasts over heads
    sin_e = sine_ref[...]                 # -sin at even lanes, 0 at odd lanes
    sin_o = sino_ref[...]                 # +sin at odd lanes, 0 at even lanes

    def rope(t):                          # t: (H, S, Dh) f32
        tl = jnp.concatenate([t[..., 1:], t[..., :1]], axis=-1)    # x[i+1]
        tr = jnp.concatenate([t[..., -1:], t[..., :-1]], axis=-1)  # x[i-1]
        return t * cos + tl * sin_e + tr * sin_o

    q3 = rope(q3).astype(bf16)
    k3 = rope(k3).astype(bf16)

    # Batched attention scores for all heads at once (f32 accumulate).
    s = jnp.einsum('hqd,hkd->hqk', q3, k3,
                   preferred_element_type=jnp.float32) * scale               # (H, S, S) f32
    if is_causal:
        row = lax.broadcasted_iota(jnp.int32, (nhead, S, S), 1)
        col = lax.broadcasted_iota(jnp.int32, (nhead, S, S), 2)
        s = jnp.where(row >= col, s, -1e30)
    # TODO(synk): arbitrary src_mask / src_key_padding_mask (non-None) not
    #             supported; only is_causal=True/False with no extra mask.

    s = s - jnp.max(s, axis=-1, keepdims=True)
    p = jnp.exp(s)                                                           # f32
    p = p * pl.reciprocal(jnp.sum(p, axis=-1, keepdims=True), approx=True)

    o3 = jnp.einsum('hqk,hkd->hqd', p.astype(bf16), v3,
                    preferred_element_type=jnp.float32)                      # (H, S, Dh) f32

    # Merge heads by writing into the VMEM scratch at static offsets.
    for h in range(nhead):
        attn_scratch[:, h * Dh:(h + 1) * Dh] = o3[h]

    attn = jnp.dot(attn_scratch[...].astype(bf16), wout_ref[...],
                   preferred_element_type=jnp.float32)                       # (S, D) f32

    x1 = x + attn                                                            # residual 1

    # ---------------- feed-forward block ----------------
    xn2 = _layer_norm(x1, g2_ref[...], be2_ref[...])
    h1 = jnp.dot(xn2.astype(bf16), w1_ref[...],
                 preferred_element_type=jnp.float32) + b1_ref[...]
    h1 = h1 * jax.nn.sigmoid(h1)                                             # SiLU, f32
    h2 = jnp.dot(h1.astype(bf16), w2_ref[...],
                 preferred_element_type=jnp.float32) + b2_ref[...]

    out_ref[0] = (x1 + h2).astype(out_ref.dtype)                             # residual 2


# ----------------------------------------------------------------------------
# Prep-time rotary tables (per-head, (S, head_dim), parity/sign folded in).
# ----------------------------------------------------------------------------
def _rotary_tables(S, head_dim):
    inv_freq = 1.0 / (10000.0 ** (np.arange(0, head_dim, 2, dtype=np.float32) / head_dim))
    ang = np.arange(S, dtype=np.float32)[:, None] * inv_freq[None, :]        # (S, Dh/2)
    cos2 = np.repeat(np.cos(ang), 2, axis=-1).astype(np.float32)             # (S, Dh)
    sin2 = np.repeat(np.sin(ang), 2, axis=-1).astype(np.float32)
    is_even = (np.arange(head_dim) % 2 == 0)
    sin_e = np.where(is_even, -sin2, 0.0).astype(np.float32)                 # -sin on even lanes
    sin_o = np.where(~is_even, sin2, 0.0).astype(np.float32)                 # +sin on odd lanes
    return (jnp.asarray(cos2), jnp.asarray(sin_e), jnp.asarray(sin_o))


# ----------------------------------------------------------------------------
# Wrapper around pallas_call.
# ----------------------------------------------------------------------------
def transformer_encoder_rot_layer(x, params, *, nhead, is_causal,
                                  single_buffer_weights=True):
    B, S, D = x.shape
    F = params["w1_t"].shape[1]
    Dh = D // nhead
    cos2, sin_e, sin_o = _rotary_tables(S, Dh)

    bf16 = jnp.bfloat16
    wqkv = params["wqkv_t"].astype(bf16)
    wout = params["wout_t"].astype(bf16)
    w1 = params["w1_t"].astype(bf16)
    w2 = params["w2_t"].astype(bf16)

    def invariant(shape):
        # Grid-invariant input: fetched once; single-buffer it to save VMEM.
        kwargs = {}
        if single_buffer_weights:
            kwargs["pipeline_mode"] = pl.Buffered(1)
        return pl.BlockSpec(shape, lambda b: (0, 0), **kwargs)

    kernel = functools.partial(_encoder_layer_kernel, nhead=nhead, is_causal=is_causal)
    return pl.pallas_call(
        kernel,
        out_shape=jax.ShapeDtypeStruct((B, S, D), x.dtype),
        grid_spec=pltpu.PrefetchScalarGridSpec(
            num_scalar_prefetch=0,
            grid=(B,),
            in_specs=[
                pl.BlockSpec((1, S, D), lambda b: (b, 0, 0)),   # x (double-buffered)
                invariant((S, Dh)), invariant((S, Dh)), invariant((S, Dh)),  # rotary tables
                invariant((D, 3 * D)), invariant((D, D)),       # Wqkv^T, Wout^T (bf16)
                invariant((D, F)), invariant((1, F)),           # W1^T (bf16), b1
                invariant((F, D)), invariant((1, D)),           # W2^T (bf16), b2
                invariant((1, D)), invariant((1, D)),           # gamma1, beta1
                invariant((1, D)), invariant((1, D)),           # gamma2, beta2
            ],
            out_specs=pl.BlockSpec((1, S, D), lambda b: (b, 0, 0)),
            scratch_shapes=[pltpu.VMEM((S, D), jnp.float32)],
        ),
        compiler_params=pltpu.CompilerParams(
            dimension_semantics=("parallel",),
            vmem_limit_bytes=32 * 1024 * 1024,
        ),
    )(x, cos2, sin_e, sin_o, wqkv, wout,
      w1, params["b1"], w2, params["b2"],
      params["gamma1"], params["beta1"], params["gamma2"], params["beta2"])


# ----------------------------------------------------------------------------
# Pure-JAX f32 reference (mirrors the PyTorch forward, eval mode), using an
# independent formulation of the rotary (explicit rotate_half matrix).
# ----------------------------------------------------------------------------
def _reference_rotary(S, D, nhead):
    Dh = D // nhead
    inv_freq = 1.0 / (10000.0 ** (np.arange(0, Dh, 2, dtype=np.float32) / Dh))
    ang = np.arange(S, dtype=np.float32)[:, None] * inv_freq[None, :]
    cos_full = np.tile(np.repeat(np.cos(ang), 2, axis=-1), (1, nhead))
    sin_full = np.tile(np.repeat(np.sin(ang), 2, axis=-1), (1, nhead))
    R = np.zeros((D, D), np.float32)      # rotate_half: y[2j] = -x[2j+1], y[2j+1] = x[2j]
    R[np.arange(1, D, 2), np.arange(0, D, 2)] = -1.0
    R[np.arange(0, D, 2), np.arange(1, D, 2)] = 1.0
    return (jnp.asarray(cos_full, jnp.float32),
            jnp.asarray(sin_full, jnp.float32),
            jnp.asarray(R, jnp.float32))


def reference_forward(x, params, *, nhead, is_causal):
    B, S, D = x.shape
    head_dim = D // nhead
    cos, sin, R = _reference_rotary(S, D, nhead)

    def ln(v, g, b):
        mu = v.mean(-1, keepdims=True)
        var = ((v - mu) ** 2).mean(-1, keepdims=True)
        return (v - mu) / jnp.sqrt(var + LN_EPS) * g + b

    xn = ln(x, params["gamma1"], params["beta1"])
    qkv = xn @ params["wqkv_t"]
    q, k, v = qkv[..., :D], qkv[..., D:2 * D], qkv[..., 2 * D:]
    q = q * cos + (q @ R) * sin
    k = k * cos + (k @ R) * sin

    def heads(t):
        return t.reshape(B, S, nhead, head_dim).transpose(0, 2, 1, 3)

    qh, kh, vh = heads(q), heads(k), heads(v)
    s = jnp.einsum('bhqd,bhkd->bhqk', qh, kh) / math.sqrt(head_dim)
    if is_causal:
        mask = jnp.asarray(np.tril(np.ones((S, S), dtype=bool)))
        s = jnp.where(mask, s, -1e30)
    p = jax.nn.softmax(s, axis=-1)
    o = jnp.einsum('bhqk,bhkd->bhqd', p, vh).transpose(0, 2, 1, 3).reshape(B, S, D)
    o = o @ params["wout_t"]
    x1 = x + o
    xn2 = ln(x1, params["gamma2"], params["beta2"])
    h = xn2 @ params["w1_t"] + params["b1"]
    h = h * jax.nn.sigmoid(h)
    return x1 + h @ params["w2_t"] + params["b2"]


if __name__ == "__main__":
    B, S, D, H, F = 2, 8, 32, 4, 64   # batch, seq, d_model, nhead, dim_feedforward

    key = jax.random.PRNGKey(0)
    ks = jax.random.split(key, 7)
    x = jax.random.normal(ks[0], (B, S, D), jnp.float32)

    params = {
        # linear_qkv / linear_out have bias=False in the module
        "wqkv_t": jax.random.normal(ks[1], (D, 3 * D), jnp.float32) / math.sqrt(D),
        "wout_t": jax.random.normal(ks[2], (D, D), jnp.float32) / math.sqrt(D),
        "w1_t":   jax.random.normal(ks[3], (D, F), jnp.float32) / math.sqrt(D),
        "b1":     jax.random.normal(ks[4], (1, F), jnp.float32) * 0.01,
        "w2_t":   jax.random.normal(ks[5], (F, D), jnp.float32) / math.sqrt(F),
        "b2":     jax.random.normal(ks[6], (1, D), jnp.float32) * 0.01,
        # LayerNorm default init
        "gamma1": jnp.ones((1, D), jnp.float32),
        "beta1":  jnp.zeros((1, D), jnp.float32),
        "gamma2": jnp.ones((1, D), jnp.float32),
        "beta2":  jnp.zeros((1, D), jnp.float32),
    }

    try:
        out = transformer_encoder_rot_layer(x, params, nhead=H, is_causal=True,
                                            single_buffer_weights=True)
        out = jax.block_until_ready(out)
    except Exception:
        # Fallback if this jax version rejects pipeline_mode=pl.Buffered(1).
        out = transformer_encoder_rot_layer(x, params, nhead=H, is_causal=True,
                                            single_buffer_weights=False)
        out = jax.block_until_ready(out)

    ref = reference_forward(x, params, nhead=H, is_causal=True)
    # Tolerance reflects bf16 matmul operands (f32 accumulation) vs. f32 reference.
    np.testing.assert_allclose(np.asarray(out), np.asarray(ref), rtol=5e-2, atol=5e-2)

    print("KERNEL_OK")
</pallas_src>

<mosaic_0001>
module attributes {stable_mosaic.version = 11 : i64} {
  func.func @_encoder_layer_kernel(%arg0: i32, %arg1: memref<1x8x32xf32, #tpu.memory_space<vmem>>, %arg2: memref<8x8xf32, #tpu.memory_space<vmem>>, %arg3: memref<8x8xf32, #tpu.memory_space<vmem>>, %arg4: memref<8x8xf32, #tpu.memory_space<vmem>>, %arg5: memref<32x96xbf16, #tpu.memory_space<vmem>>, %arg6: memref<32x32xbf16, #tpu.memory_space<vmem>>, %arg7: memref<32x64xbf16, #tpu.memory_space<vmem>>, %arg8: memref<1x64xf32, #tpu.memory_space<vmem>>, %arg9: memref<64x32xbf16, #tpu.memory_space<vmem>>, %arg10: memref<1x32xf32, #tpu.memory_space<vmem>>, %arg11: memref<1x32xf32, #tpu.memory_space<vmem>>, %arg12: memref<1x32xf32, #tpu.memory_space<vmem>>, %arg13: memref<1x32xf32, #tpu.memory_space<vmem>>, %arg14: memref<1x32xf32, #tpu.memory_space<vmem>>, %arg15: memref<1x8x32xf32, #tpu.memory_space<vmem>>, %arg16: memref<8x32xf32, #tpu.memory_space<vmem>>) attributes {dimension_semantics = [#tpu.dimension_semantics<parallel>], iteration_bounds = array<i64: 2>, scalar_prefetch = 0 : i64, scratch_operands = 1 : i64, tpu.core_type = #tpu.core_type<tc>, window_params = [{transform_indices = @transform_0, window_bounds = array<i64: 1, 8, 32>}, {pipeline_mode = #tpu.pipeline_mode<synchronous>, transform_indices = @transform_1, window_bounds = array<i64: 8, 8>}, {pipeline_mode = #tpu.pipeline_mode<synchronous>, transform_indices = @transform_2, window_bounds = array<i64: 8, 8>}, {pipeline_mode = #tpu.pipeline_mode<synchronous>, transform_indices = @transform_3, window_bounds = array<i64: 8, 8>}, {pipeline_mode = #tpu.pipeline_mode<synchronous>, transform_indices = @transform_4, window_bounds = array<i64: 32, 96>}, {pipeline_mode = #tpu.pipeline_mode<synchronous>, transform_indices = @transform_5, window_bounds = array<i64: 32, 32>}, {pipeline_mode = #tpu.pipeline_mode<synchronous>, transform_indices = @transform_6, window_bounds = array<i64: 32, 64>}, {pipeline_mode = #tpu.pipeline_mode<synchronous>, transform_indices = @transform_7, window_bounds = array<i64: 1, 64>}, {pipeline_mode = #tpu.pipeline_mode<synchronous>, transform_indices = @transform_8, window_bounds = array<i64: 64, 32>}, {pipeline_mode = #tpu.pipeline_mode<synchronous>, transform_indices = @transform_9, window_bounds = array<i64: 1, 32>}, {pipeline_mode = #tpu.pipeline_mode<synchronous>, transform_indices = @transform_10, window_bounds = array<i64: 1, 32>}, {pipeline_mode = #tpu.pipeline_mode<synchronous>, transform_indices = @transform_11, window_bounds = array<i64: 1, 32>}, {pipeline_mode = #tpu.pipeline_mode<synchronous>, transform_indices = @transform_12, window_bounds = array<i64: 1, 32>}, {pipeline_mode = #tpu.pipeline_mode<synchronous>, transform_indices = @transform_13, window_bounds = array<i64: 1, 32>}, {transform_indices = @transform_14, window_bounds = array<i64: 1, 8, 32>}]} {
    %c0 = arith.constant 0 : index
    %c0_0 = arith.constant 0 : index
    %c0_1 = arith.constant 0 : index
    %0 = vector.load %arg1[%c0, %c0_0, %c0_1] : memref<1x8x32xf32, #tpu.memory_space<vmem>>, vector<1x8x32xf32>
    %1 = vector.shape_cast %0 : vector<1x8x32xf32> to vector<8x32xf32>
    %c0_2 = arith.constant 0 : index
    %c0_3 = arith.constant 0 : index
    %2 = vector.load %arg11[%c0_2, %c0_3] : memref<1x32xf32, #tpu.memory_space<vmem>>, vector<1x32xf32>
    %c0_4 = arith.constant 0 : index
    %c0_5 = arith.constant 0 : index
    %3 = vector.load %arg12[%c0_4, %c0_5] : memref<1x32xf32, #tpu.memory_space<vmem>>, vector<1x32xf32>
    %cst = arith.constant dense<0.000000e+00> : vector<8xf32>
    %4 = vector.multi_reduction <add>, %1, %cst [1] : vector<8x32xf32> to vector<8xf32>
    %5 = vector.shape_cast %4 : vector<8xf32> to vector<8x1xf32>
    %cst_6 = arith.constant 3.200000e+01 : f32
    %6 = vector.broadcast %cst_6 : f32 to vector<8x1xf32>
    %7 = arith.divf %5, %6 : vector<8x1xf32>
    %8 = vector.broadcast %7 : vector<8x1xf32> to vector<8x32xf32>
    %9 = arith.subf %1, %8 : vector<8x32xf32>
    %10 = arith.mulf %9, %9 : vector<8x32xf32>
    %cst_7 = arith.constant dense<0.000000e+00> : vector<8xf32>
    %11 = vector.multi_reduction <add>, %10, %cst_7 [1] : vector<8x32xf32> to vector<8xf32>
    %12 = vector.shape_cast %11 : vector<8xf32> to vector<8x1xf32>
    %cst_8 = arith.constant 3.200000e+01 : f32
    %13 = vector.broadcast %cst_8 : f32 to vector<8x1xf32>
    %14 = arith.divf %12, %13 : vector<8x1xf32>
    %15 = vector.broadcast %7 : vector<8x1xf32> to vector<8x32xf32>
    %16 = arith.subf %1, %15 : vector<8x32xf32>
    %cst_9 = arith.constant 9.99999974E-6 : f32
    %17 = vector.broadcast %cst_9 : f32 to vector<8x1xf32>
    %18 = arith.addf %14, %17 : vector<8x1xf32>
    %19 = math.rsqrt %18 : vector<8x1xf32>
    %20 = vector.broadcast %19 : vector<8x1xf32> to vector<8x32xf32>
    %21 = arith.mulf %16, %20 : vector<8x32xf32>
    %22 = vector.broadcast %2 : vector<1x32xf32> to vector<8x32xf32>
    %23 = arith.mulf %21, %22 : vector<8x32xf32>
    %24 = vector.broadcast %3 : vector<1x32xf32> to vector<8x32xf32>
    %25 = arith.addf %23, %24 : vector<8x32xf32>
    %26 = arith.truncf %25 : vector<8x32xf32> to vector<8x32xbf16>
    %c0_10 = arith.constant 0 : index
    %c0_11 = arith.constant 0 : index
    %27 = vector.load %arg5[%c0_10, %c0_11] : memref<32x96xbf16, #tpu.memory_space<vmem>>, vector<32x96xbf16>
    %cst_12 = arith.constant dense<0.000000e+00> : vector<8x96xf32>
    %28 = tpu.matmul %26, %27, %cst_12 {dimension_numbers = #tpu.dot_dimension_numbers<[1], [0], [0], [1], [0, 0, 1, 1], [], []>} : vector<8x32xbf16>, vector<32x96xbf16>, vector<8x96xf32> -> vector<8x96xf32>
    %29 = vector.extract_strided_slice %28 {offsets = [0, 0], sizes = [8, 8], strides = [1, 1]} : vector<8x96xf32> to vector<8x8xf32>
    %30 = vector.extract_strided_slice %28 {offsets = [0, 8], sizes = [8, 8], strides = [1, 1]} : vector<8x96xf32> to vector<8x8xf32>
    %31 = vector.extract_strided_slice %28 {offsets = [0, 16], sizes = [8, 8], strides = [1, 1]} : vector<8x96xf32> to vector<8x8xf32>
    %32 = vector.extract_strided_slice %28 {offsets = [0, 24], sizes = [8, 8], strides = [1, 1]} : vector<8x96xf32> to vector<8x8xf32>
    %33 = vector.shape_cast %29 : vector<8x8xf32> to vector<1x8x8xf32>
    %34 = vector.shape_cast %30 : vector<8x8xf32> to vector<1x8x8xf32>
    %35 = vector.shape_cast %31 : vector<8x8xf32> to vector<1x8x8xf32>
    %36 = vector.shape_cast %32 : vector<8x8xf32> to vector<1x8x8xf32>
    %37 = tpu.concatenate %33, %34, %35, %36 in 0 : vector<1x8x8xf32>, vector<1x8x8xf32>, vector<1x8x8xf32>, vector<1x8x8xf32> -> vector<4x8x8xf32>
    %38 = vector.extract_strided_slice %28 {offsets = [0, 32], sizes = [8, 8], strides = [1, 1]} : vector<8x96xf32> to vector<8x8xf32>
    %39 = vector.extract_strided_slice %28 {offsets = [0, 40], sizes = [8, 8], strides = [1, 1]} : vector<8x96xf32> to vector<8x8xf32>
    %40 = vector.extract_strided_slice %28 {offsets = [0, 48], sizes = [8, 8], strides = [1, 1]} : vector<8x96xf32> to vector<8x8xf32>
    %41 = vector.extract_strided_slice %28 {offsets = [0, 56], sizes = [8, 8], strides = [1, 1]} : vector<8x96xf32> to vector<8x8xf32>
    %42 = vector.shape_cast %38 : vector<8x8xf32> to vector<1x8x8xf32>
    %43 = vector.shape_cast %39 : vector<8x8xf32> to vector<1x8x8xf32>
    %44 = vector.shape_cast %40 : vector<8x8xf32> to vector<1x8x8xf32>
    %45 = vector.shape_cast %41 : vector<8x8xf32> to vector<1x8x8xf32>
    %46 = tpu.concatenate %42, %43, %44, %45 in 0 : vector<1x8x8xf32>, vector<1x8x8xf32>, vector<1x8x8xf32>, vector<1x8x8xf32> -> vector<4x8x8xf32>
    %47 = vector.extract_strided_slice %28 {offsets = [0, 64], sizes = [8, 8], strides = [1, 1]} : vector<8x96xf32> to vector<8x8xf32>
    %48 = vector.extract_strided_slice %28 {offsets = [0, 72], sizes = [8, 8], strides = [1, 1]} : vector<8x96xf32> to vector<8x8xf32>
    %49 = vector.extract_strided_slice %28 {offsets = [0, 80], sizes = [8, 8], strides = [1, 1]} : vector<8x96xf32> to vector<8x8xf32>
    %50 = vector.extract_strided_slice %28 {offsets = [0, 88], sizes = [8, 8], strides = [1, 1]} : vector<8x96xf32> to vector<8x8xf32>
    %51 = vector.shape_cast %47 : vector<8x8xf32> to vector<1x8x8xf32>
    %52 = vector.shape_cast %48 : vector<8x8xf32> to vector<1x8x8xf32>
    %53 = vector.shape_cast %49 : vector<8x8xf32> to vector<1x8x8xf32>
    %54 = vector.shape_cast %50 : vector<8x8xf32> to vector<1x8x8xf32>
    %55 = tpu.concatenate %51, %52, %53, %54 in 0 : vector<1x8x8xf32>, vector<1x8x8xf32>, vector<1x8x8xf32>, vector<1x8x8xf32> -> vector<4x8x8xf32>
    %56 = arith.truncf %55 : vector<4x8x8xf32> to vector<4x8x8xbf16>
    %c0_13 = arith.constant 0 : index
    %c0_14 = arith.constant 0 : index
    %57 = vector.load %arg2[%c0_13, %c0_14] : memref<8x8xf32, #tpu.memory_space<vmem>>, vector<8x8xf32>
    %c0_15 = arith.constant 0 : index
    %c0_16 = arith.constant 0 : index
    %58 = vector.load %arg3[%c0_15, %c0_16] : memref<8x8xf32, #tpu.memory_space<vmem>>, vector<8x8xf32>
    %c0_17 = arith.constant 0 : index
    %c0_18 = arith.constant 0 : index
    %59 = vector.load %arg4[%c0_17, %c0_18] : memref<8x8xf32, #tpu.memory_space<vmem>>, vector<8x8xf32>
    %60 = vector.extract_strided_slice %37 {offsets = [0, 0, 1], sizes = [4, 8, 7], strides = [1, 1, 1]} : vector<4x8x8xf32> to vector<4x8x7xf32>
    %61 = vector.extract_strided_slice %37 {offsets = [0, 0, 0], sizes = [4, 8, 1], strides = [1, 1, 1]} : vector<4x8x8xf32> to vector<4x8x1xf32>
    %62 = tpu.concatenate %60, %61 in 2 : vector<4x8x7xf32>, vector<4x8x1xf32> -> vector<4x8x8xf32>
    %63 = vector.extract_strided_slice %37 {offsets = [0, 0, 7], sizes = [4, 8, 1], strides = [1, 1, 1]} : vector<4x8x8xf32> to vector<4x8x1xf32>
    %64 = vector.extract_strided_slice %37 {offsets = [0, 0, 0], sizes = [4, 8, 7], strides = [1, 1, 1]} : vector<4x8x8xf32> to vector<4x8x7xf32>
    %65 = tpu.concatenate %63, %64 in 2 : vector<4x8x1xf32>, vector<4x8x7xf32> -> vector<4x8x8xf32>
    %66 = vector.shape_cast %57 : vector<8x8xf32> to vector<1x8x8xf32>
    %67 = vector.broadcast %66 : vector<1x8x8xf32> to vector<4x8x8xf32>
    %68 = arith.mulf %37, %67 : vector<4x8x8xf32>
    %69 = vector.shape_cast %58 : vector<8x8xf32> to vector<1x8x8xf32>
    %70 = vector.broadcast %69 : vector<1x8x8xf32> to vector<4x8x8xf32>
    %71 = arith.mulf %62, %70 : vector<4x8x8xf32>
    %72 = arith.addf %68, %71 : vector<4x8x8xf32>
    %73 = vector.shape_cast %59 : vector<8x8xf32> to vector<1x8x8xf32>
    %74 = vector.broadcast %73 : vector<1x8x8xf32> to vector<4x8x8xf32>
    %75 = arith.mulf %65, %74 : vector<4x8x8xf32>
    %76 = arith.addf %72, %75 : vector<4x8x8xf32>
    %77 = arith.truncf %76 : vector<4x8x8xf32> to vector<4x8x8xbf16>
    %78 = vector.extract_strided_slice %46 {offsets = [0, 0, 1], sizes = [4, 8, 7], strides = [1, 1, 1]} : vector<4x8x8xf32> to vector<4x8x7xf32>
    %79 = vector.extract_strided_slice %46 {offsets = [0, 0, 0], sizes = [4, 8, 1], strides = [1, 1, 1]} : vector<4x8x8xf32> to vector<4x8x1xf32>
    %80 = tpu.concatenate %78, %79 in 2 : vector<4x8x7xf32>, vector<4x8x1xf32> -> vector<4x8x8xf32>
    %81 = vector.extract_strided_slice %46 {offsets = [0, 0, 7], sizes = [4, 8, 1], strides = [1, 1, 1]} : vector<4x8x8xf32> to vector<4x8x1xf32>
    %82 = vector.extract_strided_slice %46 {offsets = [0, 0, 0], sizes = [4, 8, 7], strides = [1, 1, 1]} : vector<4x8x8xf32> to vector<4x8x7xf32>
    %83 = tpu.concatenate %81, %82 in 2 : vector<4x8x1xf32>, vector<4x8x7xf32> -> vector<4x8x8xf32>
    %84 = vector.shape_cast %57 : vector<8x8xf32> to vector<1x8x8xf32>
    %85 = vector.broadcast %84 : vector<1x8x8xf32> to vector<4x8x8xf32>
    %86 = arith.mulf %46, %85 : vector<4x8x8xf32>
    %87 = vector.shape_cast %58 : vector<8x8xf32> to vector<1x8x8xf32>
    %88 = vector.broadcast %87 : vector<1x8x8xf32> to vector<4x8x8xf32>
    %89 = arith.mulf %80, %88 : vector<4x8x8xf32>
    %90 = arith.addf %86, %89 : vector<4x8x8xf32>
    %91 = vector.shape_cast %59 : vector<8x8xf32> to vector<1x8x8xf32>
    %92 = vector.broadcast %91 : vector<1x8x8xf32> to vector<4x8x8xf32>
    %93 = arith.mulf %83, %92 : vector<4x8x8xf32>
    %94 = arith.addf %90, %93 : vector<4x8x8xf32>
    %95 = arith.truncf %94 : vector<4x8x8xf32> to vector<4x8x8xbf16>
    "tpu.trace_start"() <{level = 10 : i32, message = "hqd,hkd->hqk"}> : () -> ()
    %cst_19 = arith.constant dense<0.000000e+00> : vector<4x8x8xf32>
    %96 = tpu.matmul %77, %95, %cst_19 {dimension_numbers = #tpu.dot_dimension_numbers<[2], [2], [1], [1], [0, 0, 0, 1, 1, 1], [0], [0]>} : vector<4x8x8xbf16>, vector<4x8x8xbf16>, vector<4x8x8xf32> -> vector<4x8x8xf32>
    "tpu.trace_stop"() : () -> ()
    %cst_20 = arith.constant 0.353553385 : f32
    %97 = vector.broadcast %cst_20 : f32 to vector<4x8x8xf32>
    %98 = arith.mulf %96, %97 : vector<4x8x8xf32>
    %99 = tpu.iota {dimensions = array<i32: 1>} : vector<4x8x8xi32>
    %100 = tpu.iota {dimensions = array<i32: 2>} : vector<4x8x8xi32>
    %101 = arith.cmpi sge, %99, %100 : vector<4x8x8xi32>
    %cst_21 = arith.constant -1.000000e+30 : f32
    %102 = vector.broadcast %cst_21 : f32 to vector<4x8x8xf32>
    %103 = arith.select %101, %98, %102 : vector<4x8x8xi1>, vector<4x8x8xf32>
    %cst_22 = arith.constant dense<0xFF800000> : vector<4x8xf32>
    %104 = vector.multi_reduction <maximumf>, %103, %cst_22 [2] : vector<4x8x8xf32> to vector<4x8xf32>
    %105 = vector.shape_cast %104 : vector<4x8xf32> to vector<4x8x1xf32>
    %106 = vector.broadcast %105 : vector<4x8x1xf32> to vector<4x8x8xf32>
    %107 = arith.subf %103, %106 : vector<4x8x8xf32>
    %108 = math.exp %107 : vector<4x8x8xf32>
    %cst_23 = arith.constant dense<0.000000e+00> : vector<4x8xf32>
    %109 = vector.multi_reduction <add>, %108, %cst_23 [2] : vector<4x8x8xf32> to vector<4x8xf32>
    %110 = vector.shape_cast %109 : vector<4x8xf32> to vector<4x8x1xf32>
    %111 = tpu.reciprocal %110 {approx = true} : vector<4x8x1xf32> -> vector<4x8x1xf32>
    %112 = vector.broadcast %111 : vector<4x8x1xf32> to vector<4x8x8xf32>
    %113 = arith.mulf %108, %112 : vector<4x8x8xf32>
    %114 = arith.truncf %113 : vector<4x8x8xf32> to vector<4x8x8xbf16>
    "tpu.trace_start"() <{level = 10 : i32, message = "hqk,hkd->hqd"}> : () -> ()
    %cst_24 = arith.constant dense<0.000000e+00> : vector<4x8x8xf32>
    %115 = tpu.matmul %114, %56, %cst_24 {dimension_numbers = #tpu.dot_dimension_numbers<[2], [1], [1], [2], [0, 0, 0, 1, 1, 2], [0], [0]>} : vector<4x8x8xbf16>, vector<4x8x8xbf16>, vector<4x8x8xf32> -> vector<4x8x8xf32>
    "tpu.trace_stop"() : () -> ()
    %116 = vector.extract_strided_slice %115 {offsets = [0, 0, 0], sizes = [1, 8, 8], strides = [1, 1, 1]} : vector<4x8x8xf32> to vector<1x8x8xf32>
    %117 = vector.shape_cast %116 : vector<1x8x8xf32> to vector<8x8xf32>
    %c0_25 = arith.constant 0 : index
    %c0_26 = arith.constant 0 : index
    %118 = vector.load %arg16[%c0_25, %c0_26] : memref<8x32xf32, #tpu.memory_space<vmem>>, vector<8x8xf32>
    tpu.vector_store %arg16[%c0_25, %c0_26], %117 {strides = array<i32>} : memref<8x32xf32, #tpu.memory_space<vmem>>, vector<8x8xf32>,
    %119 = vector.extract_strided_slice %115 {offsets = [1, 0, 0], sizes = [1, 8, 8], strides = [1, 1, 1]} : vector<4x8x8xf32> to vector<1x8x8xf32>
    %120 = vector.shape_cast %119 : vector<1x8x8xf32> to vector<8x8xf32>
    %c0_27 = arith.constant 0 : index
    %c8 = arith.constant 8 : index
    %121 = vector.load %arg16[%c0_27, %c8] : memref<8x32xf32, #tpu.memory_space<vmem>>, vector<8x8xf32>
    tpu.vector_store %arg16[%c0_27, %c8], %120 {strides = array<i32>} : memref<8x32xf32, #tpu.memory_space<vmem>>, vector<8x8xf32>,
    %122 = vector.extract_strided_slice %115 {offsets = [2, 0, 0], sizes = [1, 8, 8], strides = [1, 1, 1]} : vector<4x8x8xf32> to vector<1x8x8xf32>
    %123 = vector.shape_cast %122 : vector<1x8x8xf32> to vector<8x8xf32>
    %c0_28 = arith.constant 0 : index
    %c16 = arith.constant 16 : index
    %124 = vector.load %arg16[%c0_28, %c16] : memref<8x32xf32, #tpu.memory_space<vmem>>, vector<8x8xf32>
    tpu.vector_store %arg16[%c0_28, %c16], %123 {strides = array<i32>} : memref<8x32xf32, #tpu.memory_space<vmem>>, vector<8x8xf32>,
    %125 = vector.extract_strided_slice %115 {offsets = [3, 0, 0], sizes = [1, 8, 8], strides = [1, 1, 1]} : vector<4x8x8xf32> to vector<1x8x8xf32>
    %126 = vector.shape_cast %125 : vector<1x8x8xf32> to vector<8x8xf32>
    %c0_29 = arith.constant 0 : index
    %c24 = arith.constant 24 : index
    %127 = vector.load %arg16[%c0_29, %c24] : memref<8x32xf32, #tpu.memory_space<vmem>>, vector<8x8xf32>
    tpu.vector_store %arg16[%c0_29, %c24], %126 {strides = array<i32>} : memref<8x32xf32, #tpu.memory_space<vmem>>, vector<8x8xf32>,
    %c0_30 = arith.constant 0 : index
    %c0_31 = arith.constant 0 : index
    %128 = vector.load %arg16[%c0_30, %c0_31] : memref<8x32xf32, #tpu.memory_space<vmem>>, vector<8x32xf32>
    %129 = arith.truncf %128 : vector<8x32xf32> to vector<8x32xbf16>
    %c0_32 = arith.constant 0 : index
    %c0_33 = arith.constant 0 : index
    %130 = vector.load %arg6[%c0_32, %c0_33] : memref<32x32xbf16, #tpu.memory_space<vmem>>, vector<32x32xbf16>
    %cst_34 = arith.constant dense<0.000000e+00> : vector<8x32xf32>
    %131 = tpu.matmul %129, %130, %cst_34 {dimension_numbers = #tpu.dot_dimension_numbers<[1], [0], [0], [1], [0, 0, 1, 1], [], []>} : vector<8x32xbf16>, vector<32x32xbf16>, vector<8x32xf32> -> vector<8x32xf32>
    %132 = arith.addf %1, %131 : vector<8x32xf32>
    %c0_35 = arith.constant 0 : index
    %c0_36 = arith.constant 0 : index
    %133 = vector.load %arg13[%c0_35, %c0_36] : memref<1x32xf32, #tpu.memory_space<vmem>>, vector<1x32xf32>
    %c0_37 = arith.constant 0 : index
    %c0_38 = arith.constant 0 : index
    %134 = vector.load %arg14[%c0_37, %c0_38] : memref<1x32xf32, #tpu.memory_space<vmem>>, vector<1x32xf32>
    %cst_39 = arith.constant dense<0.000000e+00> : vector<8xf32>
    %135 = vector.multi_reduction <add>, %132, %cst_39 [1] : vector<8x32xf32> to vector<8xf32>
    %136 = vector.shape_cast %135 : vector<8xf32> to vector<8x1xf32>
    %cst_40 = arith.constant 3.200000e+01 : f32
    %137 = vector.broadcast %cst_40 : f32 to vector<8x1xf32>
    %138 = arith.divf %136, %137 : vector<8x1xf32>
    %139 = vector.broadcast %138 : vector<8x1xf32> to vector<8x32xf32>
    %140 = arith.subf %132, %139 : vector<8x32xf32>
    %141 = arith.mulf %140, %140 : vector<8x32xf32>
    %cst_41 = arith.constant dense<0.000000e+00> : vector<8xf32>
    %142 = vector.multi_reduction <add>, %141, %cst_41 [1] : vector<8x32xf32> to vector<8xf32>
    %143 = vector.shape_cast %142 : vector<8xf32> to vector<8x1xf32>
    %cst_42 = arith.constant 3.200000e+01 : f32
    %144 = vector.broadcast %cst_42 : f32 to vector<8x1xf32>
    %145 = arith.divf %143, %144 : vector<8x1xf32>
    %146 = vector.broadcast %138 : vector<8x1xf32> to vector<8x32xf32>
    %147 = arith.subf %132, %146 : vector<8x32xf32>
    %cst_43 = arith.constant 9.99999974E-6 : f32
    %148 = vector.broadcast %cst_43 : f32 to vector<8x1xf32>
    %149 = arith.addf %145, %148 : vector<8x1xf32>
    %150 = math.rsqrt %149 : vector<8x1xf32>
    %151 = vector.broadcast %150 : vector<8x1xf32> to vector<8x32xf32>
    %152 = arith.mulf %147, %151 : vector<8x32xf32>
    %153 = vector.broadcast %133 : vector<1x32xf32> to vector<8x32xf32>
    %154 = arith.mulf %152, %153 : vector<8x32xf32>
    %155 = vector.broadcast %134 : vector<1x32xf32> to vector<8x32xf32>
    %156 = arith.addf %154, %155 : vector<8x32xf32>
    %157 = arith.truncf %156 : vector<8x32xf32> to vector<8x32xbf16>
    %c0_44 = arith.constant 0 : index
    %c0_45 = arith.constant 0 : index
    %158 = vector.load %arg7[%c0_44, %c0_45] : memref<32x64xbf16, #tpu.memory_space<vmem>>, vector<32x64xbf16>
    %cst_46 = arith.constant dense<0.000000e+00> : vector<8x64xf32>
    %159 = tpu.matmul %157, %158, %cst_46 {dimension_numbers = #tpu.dot_dimension_numbers<[1], [0], [0], [1], [0, 0, 1, 1], [], []>} : vector<8x32xbf16>, vector<32x64xbf16>, vector<8x64xf32> -> vector<8x64xf32>
    %c0_47 = arith.constant 0 : index
    %c0_48 = arith.constant 0 : index
    %160 = vector.load %arg8[%c0_47, %c0_48] : memref<1x64xf32, #tpu.memory_space<vmem>>, vector<1x64xf32>
    %161 = vector.broadcast %160 : vector<1x64xf32> to vector<8x64xf32>
    %162 = arith.addf %159, %161 : vector<8x64xf32>
    %163 = arith.negf %162 : vector<8x64xf32>
    %164 = math.exp %163 : vector<8x64xf32>
    %cst_49 = arith.constant 1.000000e+00 : f32
    %165 = vector.broadcast %cst_49 : f32 to vector<8x64xf32>
    %166 = arith.addf %165, %164 : vector<8x64xf32>
    %167 = arith.divf %165, %166 : vector<8x64xf32>
    %168 = arith.mulf %162, %167 : vector<8x64xf32>
    %169 = arith.truncf %168 : vector<8x64xf32> to vector<8x64xbf16>
    %c0_50 = arith.constant 0 : index
    %c0_51 = arith.constant 0 : index
    %170 = vector.load %arg9[%c0_50, %c0_51] : memref<64x32xbf16, #tpu.memory_space<vmem>>, vector<64x32xbf16>
    %cst_52 = arith.constant dense<0.000000e+00> : vector<8x32xf32>
    %171 = tpu.matmul %169, %170, %cst_52 {dimension_numbers = #tpu.dot_dimension_numbers<[1], [0], [0], [1], [0, 0, 1, 1], [], []>} : vector<8x64xbf16>, vector<64x32xbf16>, vector<8x32xf32> -> vector<8x32xf32>
    %c0_53 = arith.constant 0 : index
    %c0_54 = arith.constant 0 : index
    %172 = vector.load %arg10[%c0_53, %c0_54] : memref<1x32xf32, #tpu.memory_space<vmem>>, vector<1x32xf32>
    %173 = vector.broadcast %172 : vector<1x32xf32> to vector<8x32xf32>
    %174 = arith.addf %171, %173 : vector<8x32xf32>
    %175 = arith.addf %132, %174 : vector<8x32xf32>
    %c0_55 = arith.constant 0 : index
    %c0_56 = arith.constant 0 : index
    %c0_57 = arith.constant 0 : index
    %176 = vector.load %arg15[%c0_55, %c0_56, %c0_57] : memref<1x8x32xf32, #tpu.memory_space<vmem>>, vector<1x8x32xf32>
    %177 = vector.shape_cast %176 : vector<1x8x32xf32> to vector<8x32xf32>
    %178 = vector.shape_cast %175 : vector<8x32xf32> to vector<1x8x32xf32>
    tpu.vector_store %arg15[%c0_55, %c0_56, %c0_57], %178 {strides = array<i32>} : memref<1x8x32xf32, #tpu.memory_space<vmem>>, vector<1x8x32xf32>,
    return
  }
  func.func @transform_0(%arg0: i32) -> (i32, i32, i32) {
    %c0_i32 = arith.constant 0 : i32
    %c0_i32_0 = arith.constant 0 : i32
    %c0_i32_1 = arith.constant 0 : i32
    return %arg0, %c0_i32, %c0_i32_0 : i32, i32, i32
  }
  func.func @transform_1(%arg0: i32) -> (i32, i32) {
    %c0_i32 = arith.constant 0 : i32
    %c0_i32_0 = arith.constant 0 : i32
    %c0_i32_1 = arith.constant 0 : i32
    return %c0_i32, %c0_i32_0 : i32, i32
  }
  func.func @transform_2(%arg0: i32) -> (i32, i32) {
    %c0_i32 = arith.constant 0 : i32
    %c0_i32_0 = arith.constant 0 : i32
    %c0_i32_1 = arith.constant 0 : i32
    return %c0_i32, %c0_i32_0 : i32, i32
  }
  func.func @transform_3(%arg0: i32) -> (i32, i32) {
    %c0_i32 = arith.constant 0 : i32
    %c0_i32_0 = arith.constant 0 : i32
    %c0_i32_1 = arith.constant 0 : i32
    return %c0_i32, %c0_i32_0 : i32, i32
  }
  func.func @transform_4(%arg0: i32) -> (i32, i32) {
    %c0_i32 = arith.constant 0 : i32
    %c0_i32_0 = arith.constant 0 : i32
    %c0_i32_1 = arith.constant 0 : i32
    return %c0_i32, %c0_i32_0 : i32, i32
  }
  func.func @transform_5(%arg0: i32) -> (i32, i32) {
    %c0_i32 = arith.constant 0 : i32
    %c0_i32_0 = arith.constant 0 : i32
    %c0_i32_1 = arith.constant 0 : i32
    return %c0_i32, %c0_i32_0 : i32, i32
  }
  func.func @transform_6(%arg0: i32) -> (i32, i32) {
    %c0_i32 = arith.constant 0 : i32
    %c0_i32_0 = arith.constant 0 : i32
    %c0_i32_1 = arith.constant 0 : i32
    return %c0_i32, %c0_i32_0 : i32, i32
  }
  func.func @transform_7(%arg0: i32) -> (i32, i32) {
    %c0_i32 = arith.constant 0 : i32
    %c0_i32_0 = arith.constant 0 : i32
    %c0_i32_1 = arith.constant 0 : i32
    return %c0_i32, %c0_i32_0 : i32, i32
  }
  func.func @transform_8(%arg0: i32) -> (i32, i32) {
    %c0_i32 = arith.constant 0 : i32
    %c0_i32_0 = arith.constant 0 : i32
    %c0_i32_1 = arith.constant 0 : i32
    return %c0_i32, %c0_i32_0 : i32, i32
  }
  func.func @transform_9(%arg0: i32) -> (i32, i32) {
    %c0_i32 = arith.constant 0 : i32
    %c0_i32_0 = arith.constant 0 : i32
    %c0_i32_1 = arith.constant 0 : i32
    return %c0_i32, %c0_i32_0 : i32, i32
  }
  func.func @transform_10(%arg0: i32) -> (i32, i32) {
    %c0_i32 = arith.constant 0 : i32
    %c0_i32_0 = arith.constant 0 : i32
    %c0_i32_1 = arith.constant 0 : i32
    return %c0_i32, %c0_i32_0 : i32, i32
  }
  func.func @transform_11(%arg0: i32) -> (i32, i32) {
    %c0_i32 = arith.constant 0 : i32
    %c0_i32_0 = arith.constant 0 : i32
    %c0_i32_1 = arith.constant 0 : i32
    return %c0_i32, %c0_i32_0 : i32, i32
  }
  func.func @transform_12(%arg0: i32) -> (i32, i32) {
    %c0_i32 = arith.constant 0 : i32
    %c0_i32_0 = arith.constant 0 : i32
    %c0_i32_1 = arith.constant 0 : i32
    return %c0_i32, %c0_i32_0 : i32, i32
  }
  func.func @transform_13(%arg0: i32) -> (i32, i32) {
    %c0_i32 = arith.constant 0 : i32
    %c0_i32_0 = arith.constant 0 : i32
    %c0_i32_1 = arith.constant 0 : i32
    return %c0_i32, %c0_i32_0 : i32, i32
  }
  func.func @transform_14(%arg0: i32) -> (i32, i32, i32) {
    %c0_i32 = arith.constant 0 : i32
    %c0_i32_0 = arith.constant 0 : i32
    %c0_i32_1 = arith.constant 0 : i32
    return %arg0, %c0_i32, %c0_i32_0 : i32, i32, i32
  }
}

module attributes {stable_mosaic.version = 11 : i64} {
  func.func @_encoder_layer_kernel(%arg0: i32, %arg1: memref<1x8x32xf32, #tpu.memory_space<vmem>>, %arg2: memref<8x8xf32, #tpu.memory_space<vmem>>, %arg3: memref<8x8xf32, #tpu.memory_space<vmem>>, %arg4: memref<8x8xf32, #tpu.memory_space<vmem>>, %arg5: memref<32x96xbf16, #tpu.memory_space<vmem>>, %arg6: memref<32x32xbf16, #tpu.memory_space<vmem>>, %arg7: memref<32x64xbf16, #tpu.memory_space<vmem>>, %arg8: memref<1x64xf32, #tpu.memory_space<vmem>>, %arg9: memref<64x32xbf16, #tpu.memory_space<vmem>>, %arg10: memref<1x32xf32, #tpu.memory_space<vmem>>, %arg11: memref<1x32xf32, #tpu.memory_space<vmem>>, %arg12: memref<1x32xf32, #tpu.memory_space<vmem>>, %arg13: memref<1x32xf32, #tpu.memory_space<vmem>>, %arg14: memref<1x32xf32, #tpu.memory_space<vmem>>, %arg15: memref<1x8x32xf32, #tpu.memory_space<vmem>>, %arg16: memref<8x32xf32, #tpu.memory_space<vmem>>) attributes {dimension_semantics = [#tpu.dimension_semantics<parallel>], iteration_bounds = array<i64: 2>, scalar_prefetch = 0 : i64, scratch_operands = 1 : i64, tpu.core_type = #tpu.core_type<tc>, window_params = [{transform_indices = @transform_0, window_bounds = array<i64: 1, 8, 32>}, {pipeline_mode = #tpu.pipeline_mode<synchronous>, transform_indices = @transform_1, window_bounds = array<i64: 8, 8>}, {pipeline_mode = #tpu.pipeline_mode<synchronous>, transform_indices = @transform_2, window_bounds = array<i64: 8, 8>}, {pipeline_mode = #tpu.pipeline_mode<synchronous>, transform_indices = @transform_3, window_bounds = array<i64: 8, 8>}, {pipeline_mode = #tpu.pipeline_mode<synchronous>, transform_indices = @transform_4, window_bounds = array<i64: 32, 96>}, {pipeline_mode = #tpu.pipeline_mode<synchronous>, transform_indices = @transform_5, window_bounds = array<i64: 32, 32>}, {pipeline_mode = #tpu.pipeline_mode<synchronous>, transform_indices = @transform_6, window_bounds = array<i64: 32, 64>}, {pipeline_mode = #tpu.pipeline_mode<synchronous>, transform_indices = @transform_7, window_bounds = array<i64: 1, 64>}, {pipeline_mode = #tpu.pipeline_mode<synchronous>, transform_indices = @transform_8, window_bounds = array<i64: 64, 32>}, {pipeline_mode = #tpu.pipeline_mode<synchronous>, transform_indices = @transform_9, window_bounds = array<i64: 1, 32>}, {pipeline_mode = #tpu.pipeline_mode<synchronous>, transform_indices = @transform_10, window_bounds = array<i64: 1, 32>}, {pipeline_mode = #tpu.pipeline_mode<synchronous>, transform_indices = @transform_11, window_bounds = array<i64: 1, 32>}, {pipeline_mode = #tpu.pipeline_mode<synchronous>, transform_indices = @transform_12, window_bounds = array<i64: 1, 32>}, {pipeline_mode = #tpu.pipeline_mode<synchronous>, transform_indices = @transform_13, window_bounds = array<i64: 1, 32>}, {transform_indices = @transform_14, window_bounds = array<i64: 1, 8, 32>}]} {
    %c0 = arith.constant 0 : index
    %c0_0 = arith.constant 0 : index
    %c0_1 = arith.constant 0 : index
    %0 = vector.load %arg1[%c0, %c0_0, %c0_1] : memref<1x8x32xf32, #tpu.memory_space<vmem>>, vector<1x8x32xf32>
    %1 = vector.shape_cast %0 : vector<1x8x32xf32> to vector<8x32xf32>
    %c0_2 = arith.constant 0 : index
    %c0_3 = arith.constant 0 : index
    %2 = vector.load %arg11[%c0_2, %c0_3] : memref<1x32xf32, #tpu.memory_space<vmem>>, vector<1x32xf32>
    %c0_4 = arith.constant 0 : index
    %c0_5 = arith.constant 0 : index
    %3 = vector.load %arg12[%c0_4, %c0_5] : memref<1x32xf32, #tpu.memory_space<vmem>>, vector<1x32xf32>
    %cst = arith.constant dense<0.000000e+00> : vector<8xf32>
    %4 = vector.multi_reduction <add>, %1, %cst [1] : vector<8x32xf32> to vector<8xf32>
    %5 = vector.shape_cast %4 : vector<8xf32> to vector<8x1xf32>
    %cst_6 = arith.constant 3.200000e+01 : f32
    %6 = vector.broadcast %cst_6 : f32 to vector<8x1xf32>
    %7 = arith.divf %5, %6 : vector<8x1xf32>
    %8 = vector.broadcast %7 : vector<8x1xf32> to vector<8x32xf32>
    %9 = arith.subf %1, %8 : vector<8x32xf32>
    %10 = arith.mulf %9, %9 : vector<8x32xf32>
    %cst_7 = arith.constant dense<0.000000e+00> : vector<8xf32>
    %11 = vector.multi_reduction <add>, %10, %cst_7 [1] : vector<8x32xf32> to vector<8xf32>
    %12 = vector.shape_cast %11 : vector<8xf32> to vector<8x1xf32>
    %cst_8 = arith.constant 3.200000e+01 : f32
    %13 = vector.broadcast %cst_8 : f32 to vector<8x1xf32>
    %14 = arith.divf %12, %13 : vector<8x1xf32>
    %15 = vector.broadcast %7 : vector<8x1xf32> to vector<8x32xf32>
    %16 = arith.subf %1, %15 : vector<8x32xf32>
    %cst_9 = arith.constant 9.99999974E-6 : f32
    %17 = vector.broadcast %cst_9 : f32 to vector<8x1xf32>
    %18 = arith.addf %14, %17 : vector<8x1xf32>
    %19 = math.rsqrt %18 : vector<8x1xf32>
    %20 = vector.broadcast %19 : vector<8x1xf32> to vector<8x32xf32>
    %21 = arith.mulf %16, %20 : vector<8x32xf32>
    %22 = vector.broadcast %2 : vector<1x32xf32> to vector<8x32xf32>
    %23 = arith.mulf %21, %22 : vector<8x32xf32>
    %24 = vector.broadcast %3 : vector<1x32xf32> to vector<8x32xf32>
    %25 = arith.addf %23, %24 : vector<8x32xf32>
    %26 = arith.truncf %25 : vector<8x32xf32> to vector<8x32xbf16>
    %c0_10 = arith.constant 0 : index
    %c0_11 = arith.constant 0 : index
    %27 = vector.load %arg5[%c0_10, %c0_11] : memref<32x96xbf16, #tpu.memory_space<vmem>>, vector<32x96xbf16>
    %cst_12 = arith.constant dense<0.000000e+00> : vector<8x96xf32>
    %28 = tpu.matmul %26, %27, %cst_12 {dimension_numbers = #tpu.dot_dimension_numbers<[1], [0], [0], [1], [0, 0, 1, 1], [], []>} : vector<8x32xbf16>, vector<32x96xbf16>, vector<8x96xf32> -> vector<8x96xf32>
    %29 = vector.extract_strided_slice %28 {offsets = [0, 0], sizes = [8, 8], strides = [1, 1]} : vector<8x96xf32> to vector<8x8xf32>
    %30 = vector.extract_strided_slice %28 {offsets = [0, 8], sizes = [8, 8], strides = [1, 1]} : vector<8x96xf32> to vector<8x8xf32>
    %31 = vector.extract_strided_slice %28 {offsets = [0, 16], sizes = [8, 8], strides = [1, 1]} : vector<8x96xf32> to vector<8x8xf32>
    %32 = vector.extract_strided_slice %28 {offsets = [0, 24], sizes = [8, 8], strides = [1, 1]} : vector<8x96xf32> to vector<8x8xf32>
    %33 = vector.shape_cast %29 : vector<8x8xf32> to vector<1x8x8xf32>
    %34 = vector.shape_cast %30 : vector<8x8xf32> to vector<1x8x8xf32>
    %35 = vector.shape_cast %31 : vector<8x8xf32> to vector<1x8x8xf32>
    %36 = vector.shape_cast %32 : vector<8x8xf32> to vector<1x8x8xf32>
    %37 = tpu.concatenate %33, %34, %35, %36 in 0 : vector<1x8x8xf32>, vector<1x8x8xf32>, vector<1x8x8xf32>, vector<1x8x8xf32> -> vector<4x8x8xf32>
    %38 = vector.extract_strided_slice %28 {offsets = [0, 32], sizes = [8, 8], strides = [1, 1]} : vector<8x96xf32> to vector<8x8xf32>
    %39 = vector.extract_strided_slice %28 {offsets = [0, 40], sizes = [8, 8], strides = [1, 1]} : vector<8x96xf32> to vector<8x8xf32>
    %40 = vector.extract_strided_slice %28 {offsets = [0, 48], sizes = [8, 8], strides = [1, 1]} : vector<8x96xf32> to vector<8x8xf32>
    %41 = vector.extract_strided_slice %28 {offsets = [0, 56], sizes = [8, 8], strides = [1, 1]} : vector<8x96xf32> to vector<8x8xf32>
    %42 = vector.shape_cast %38 : vector<8x8xf32> to vector<1x8x8xf32>
    %43 = vector.shape_cast %39 : vector<8x8xf32> to vector<1x8x8xf32>
    %44 = vector.shape_cast %40 : vector<8x8xf32> to vector<1x8x8xf32>
    %45 = vector.shape_cast %41 : vector<8x8xf32> to vector<1x8x8xf32>
    %46 = tpu.concatenate %42, %43, %44, %45 in 0 : vector<1x8x8xf32>, vector<1x8x8xf32>, vector<1x8x8xf32>, vector<1x8x8xf32> -> vector<4x8x8xf32>
    %47 = vector.extract_strided_slice %28 {offsets = [0, 64], sizes = [8, 8], strides = [1, 1]} : vector<8x96xf32> to vector<8x8xf32>
    %48 = vector.extract_strided_slice %28 {offsets = [0, 72], sizes = [8, 8], strides = [1, 1]} : vector<8x96xf32> to vector<8x8xf32>
    %49 = vector.extract_strided_slice %28 {offsets = [0, 80], sizes = [8, 8], strides = [1, 1]} : vector<8x96xf32> to vector<8x8xf32>
    %50 = vector.extract_strided_slice %28 {offsets = [0, 88], sizes = [8, 8], strides = [1, 1]} : vector<8x96xf32> to vector<8x8xf32>
    %51 = vector.shape_cast %47 : vector<8x8xf32> to vector<1x8x8xf32>
    %52 = vector.shape_cast %48 : vector<8x8xf32> to vector<1x8x8xf32>
    %53 = vector.shape_cast %49 : vector<8x8xf32> to vector<1x8x8xf32>
    %54 = vector.shape_cast %50 : vector<8x8xf32> to vector<1x8x8xf32>
    %55 = tpu.concatenate %51, %52, %53, %54 in 0 : vector<1x8x8xf32>, vector<1x8x8xf32>, vector<1x8x8xf32>, vector<1x8x8xf32> -> vector<4x8x8xf32>
    %56 = arith.truncf %55 : vector<4x8x8xf32> to vector<4x8x8xbf16>
    %c0_13 = arith.constant 0 : index
    %c0_14 = arith.constant 0 : index
    %57 = vector.load %arg2[%c0_13, %c0_14] : memref<8x8xf32, #tpu.memory_space<vmem>>, vector<8x8xf32>
    %c0_15 = arith.constant 0 : index
    %c0_16 = arith.constant 0 : index
    %58 = vector.load %arg3[%c0_15, %c0_16] : memref<8x8xf32, #tpu.memory_space<vmem>>, vector<8x8xf32>
    %c0_17 = arith.constant 0 : index
    %c0_18 = arith.constant 0 : index
    %59 = vector.load %arg4[%c0_17, %c0_18] : memref<8x8xf32, #tpu.memory_space<vmem>>, vector<8x8xf32>
    %60 = vector.extract_strided_slice %37 {offsets = [0, 0, 1], sizes = [4, 8, 7], strides = [1, 1, 1]} : vector<4x8x8xf32> to vector<4x8x7xf32>
    %61 = vector.extract_strided_slice %37 {offsets = [0, 0, 0], sizes = [4, 8, 1], strides = [1, 1, 1]} : vector<4x8x8xf32> to vector<4x8x1xf32>
    %62 = tpu.concatenate %60, %61 in 2 : vector<4x8x7xf32>, vector<4x8x1xf32> -> vector<4x8x8xf32>
    %63 = vector.extract_strided_slice %37 {offsets = [0, 0, 7], sizes = [4, 8, 1], strides = [1, 1, 1]} : vector<4x8x8xf32> to vector<4x8x1xf32>
    %64 = vector.extract_strided_slice %37 {offsets = [0, 0, 0], sizes = [4, 8, 7], strides = [1, 1, 1]} : vector<4x8x8xf32> to vector<4x8x7xf32>
    %65 = tpu.concatenate %63, %64 in 2 : vector<4x8x1xf32>, vector<4x8x7xf32> -> vector<4x8x8xf32>
    %66 = vector.shape_cast %57 : vector<8x8xf32> to vector<1x8x8xf32>
    %67 = vector.broadcast %66 : vector<1x8x8xf32> to vector<4x8x8xf32>
    %68 = arith.mulf %37, %67 : vector<4x8x8xf32>
    %69 = vector.shape_cast %58 : vector<8x8xf32> to vector<1x8x8xf32>
    %70 = vector.broadcast %69 : vector<1x8x8xf32> to vector<4x8x8xf32>
    %71 = arith.mulf %62, %70 : vector<4x8x8xf32>
    %72 = arith.addf %68, %71 : vector<4x8x8xf32>
    %73 = vector.shape_cast %59 : vector<8x8xf32> to vector<1x8x8xf32>
    %74 = vector.broadcast %73 : vector<1x8x8xf32> to vector<4x8x8xf32>
    %75 = arith.mulf %65, %74 : vector<4x8x8xf32>
    %76 = arith.addf %72, %75 : vector<4x8x8xf32>
    %77 = arith.truncf %76 : vector<4x8x8xf32> to vector<4x8x8xbf16>
    %78 = vector.extract_strided_slice %46 {offsets = [0, 0, 1], sizes = [4, 8, 7], strides = [1, 1, 1]} : vector<4x8x8xf32> to vector<4x8x7xf32>
    %79 = vector.extract_strided_slice %46 {offsets = [0, 0, 0], sizes = [4, 8, 1], strides = [1, 1, 1]} : vector<4x8x8xf32> to vector<4x8x1xf32>
    %80 = tpu.concatenate %78, %79 in 2 : vector<4x8x7xf32>, vector<4x8x1xf32> -> vector<4x8x8xf32>
    %81 = vector.extract_strided_slice %46 {offsets = [0, 0, 7], sizes = [4, 8, 1], strides = [1, 1, 1]} : vector<4x8x8xf32> to vector<4x8x1xf32>
    %82 = vector.extract_strided_slice %46 {offsets = [0, 0, 0], sizes = [4, 8, 7], strides = [1, 1, 1]} : vector<4x8x8xf32> to vector<4x8x7xf32>
    %83 = tpu.concatenate %81, %82 in 2 : vector<4x8x1xf32>, vector<4x8x7xf32> -> vector<4x8x8xf32>
    %84 = vector.shape_cast %57 : vector<8x8xf32> to vector<1x8x8xf32>
    %85 = vector.broadcast %84 : vector<1x8x8xf32> to vector<4x8x8xf32>
    %86 = arith.mulf %46, %85 : vector<4x8x8xf32>
    %87 = vector.shape_cast %58 : vector<8x8xf32> to vector<1x8x8xf32>
    %88 = vector.broadcast %87 : vector<1x8x8xf32> to vector<4x8x8xf32>
    %89 = arith.mulf %80, %88 : vector<4x8x8xf32>
    %90 = arith.addf %86, %89 : vector<4x8x8xf32>
    %91 = vector.shape_cast %59 : vector<8x8xf32> to vector<1x8x8xf32>
    %92 = vector.broadcast %91 : vector<1x8x8xf32> to vector<4x8x8xf32>
    %93 = arith.mulf %83, %92 : vector<4x8x8xf32>
    %94 = arith.addf %90, %93 : vector<4x8x8xf32>
    %95 = arith.truncf %94 : vector<4x8x8xf32> to vector<4x8x8xbf16>
    "tpu.trace_start"() <{level = 10 : i32, message = "hqd,hkd->hqk"}> : () -> ()
    %cst_19 = arith.constant dense<0.000000e+00> : vector<4x8x8xf32>
    %96 = tpu.matmul %77, %95, %cst_19 {dimension_numbers = #tpu.dot_dimension_numbers<[2], [2], [1], [1], [0, 0, 0, 1, 1, 1], [0], [0]>} : vector<4x8x8xbf16>, vector<4x8x8xbf16>, vector<4x8x8xf32> -> vector<4x8x8xf32>
    "tpu.trace_stop"() : () -> ()
    %cst_20 = arith.constant 0.353553385 : f32
    %97 = vector.broadcast %cst_20 : f32 to vector<4x8x8xf32>
    %98 = arith.mulf %96, %97 : vector<4x8x8xf32>
    %99 = tpu.iota {dimensions = array<i32: 1>} : vector<4x8x8xi32>
    %100 = tpu.iota {dimensions = array<i32: 2>} : vector<4x8x8xi32>
    %101 = arith.cmpi sge, %99, %100 : vector<4x8x8xi32>
    %cst_21 = arith.constant -1.000000e+30 : f32
    %102 = vector.broadcast %cst_21 : f32 to vector<4x8x8xf32>
    %103 = arith.select %101, %98, %102 : vector<4x8x8xi1>, vector<4x8x8xf32>
    %cst_22 = arith.constant dense<0xFF800000> : vector<4x8xf32>
    %104 = vector.multi_reduction <maximumf>, %103, %cst_22 [2] : vector<4x8x8xf32> to vector<4x8xf32>
    %105 = vector.shape_cast %104 : vector<4x8xf32> to vector<4x8x1xf32>
    %106 = vector.broadcast %105 : vector<4x8x1xf32> to vector<4x8x8xf32>
    %107 = arith.subf %103, %106 : vector<4x8x8xf32>
    %108 = math.exp %107 : vector<4x8x8xf32>
    %cst_23 = arith.constant dense<0.000000e+00> : vector<4x8xf32>
    %109 = vector.multi_reduction <add>, %108, %cst_23 [2] : vector<4x8x8xf32> to vector<4x8xf32>
    %110 = vector.shape_cast %109 : vector<4x8xf32> to vector<4x8x1xf32>
    %111 = tpu.reciprocal %110 {approx = true} : vector<4x8x1xf32> -> vector<4x8x1xf32>
    %112 = vector.broadcast %111 : vector<4x8x1xf32> to vector<4x8x8xf32>
    %113 = arith.mulf %108, %112 : vector<4x8x8xf32>
    %114 = arith.truncf %113 : vector<4x8x8xf32> to vector<4x8x8xbf16>
    "tpu.trace_start"() <{level = 10 : i32, message = "hqk,hkd->hqd"}> : () -> ()
    %cst_24 = arith.constant dense<0.000000e+00> : vector<4x8x8xf32>
    %115 = tpu.matmul %114, %56, %cst_24 {dimension_numbers = #tpu.dot_dimension_numbers<[2], [1], [1], [2], [0, 0, 0, 1, 1, 2], [0], [0]>} : vector<4x8x8xbf16>, vector<4x8x8xbf16>, vector<4x8x8xf32> -> vector<4x8x8xf32>
    "tpu.trace_stop"() : () -> ()
    %116 = vector.extract_strided_slice %115 {offsets = [0, 0, 0], sizes = [1, 8, 8], strides = [1, 1, 1]} : vector<4x8x8xf32> to vector<1x8x8xf32>
    %117 = vector.shape_cast %116 : vector<1x8x8xf32> to vector<8x8xf32>
    %c0_25 = arith.constant 0 : index
    %c0_26 = arith.constant 0 : index
    %118 = vector.load %arg16[%c0_25, %c0_26] : memref<8x32xf32, #tpu.memory_space<vmem>>, vector<8x8xf32>
    tpu.vector_store %arg16[%c0_25, %c0_26], %117 {strides = array<i32>} : memref<8x32xf32, #tpu.memory_space<vmem>>, vector<8x8xf32>,
    %119 = vector.extract_strided_slice %115 {offsets = [1, 0, 0], sizes = [1, 8, 8], strides = [1, 1, 1]} : vector<4x8x8xf32> to vector<1x8x8xf32>
    %120 = vector.shape_cast %119 : vector<1x8x8xf32> to vector<8x8xf32>
    %c0_27 = arith.constant 0 : index
    %c8 = arith.constant 8 : index
    %121 = vector.load %arg16[%c0_27, %c8] : memref<8x32xf32, #tpu.memory_space<vmem>>, vector<8x8xf32>
    tpu.vector_store %arg16[%c0_27, %c8], %120 {strides = array<i32>} : memref<8x32xf32, #tpu.memory_space<vmem>>, vector<8x8xf32>,
    %122 = vector.extract_strided_slice %115 {offsets = [2, 0, 0], sizes = [1, 8, 8], strides = [1, 1, 1]} : vector<4x8x8xf32> to vector<1x8x8xf32>
    %123 = vector.shape_cast %122 : vector<1x8x8xf32> to vector<8x8xf32>
    %c0_28 = arith.constant 0 : index
    %c16 = arith.constant 16 : index
    %124 = vector.load %arg16[%c0_28, %c16] : memref<8x32xf32, #tpu.memory_space<vmem>>, vector<8x8xf32>
    tpu.vector_store %arg16[%c0_28, %c16], %123 {strides = array<i32>} : memref<8x32xf32, #tpu.memory_space<vmem>>, vector<8x8xf32>,
    %125 = vector.extract_strided_slice %115 {offsets = [3, 0, 0], sizes = [1, 8, 8], strides = [1, 1, 1]} : vector<4x8x8xf32> to vector<1x8x8xf32>
    %126 = vector.shape_cast %125 : vector<1x8x8xf32> to vector<8x8xf32>
    %c0_29 = arith.constant 0 : index
    %c24 = arith.constant 24 : index
    %127 = vector.load %arg16[%c0_29, %c24] : memref<8x32xf32, #tpu.memory_space<vmem>>, vector<8x8xf32>
    tpu.vector_store %arg16[%c0_29, %c24], %126 {strides = array<i32>} : memref<8x32xf32, #tpu.memory_space<vmem>>, vector<8x8xf32>,
    %c0_30 = arith.constant 0 : index
    %c0_31 = arith.constant 0 : index
    %128 = vector.load %arg16[%c0_30, %c0_31] : memref<8x32xf32, #tpu.memory_space<vmem>>, vector<8x32xf32>
    %129 = arith.truncf %128 : vector<8x32xf32> to vector<8x32xbf16>
    %c0_32 = arith.constant 0 : index
    %c0_33 = arith.constant 0 : index
    %130 = vector.load %arg6[%c0_32, %c0_33] : memref<32x32xbf16, #tpu.memory_space<vmem>>, vector<32x32xbf16>
    %cst_34 = arith.constant dense<0.000000e+00> : vector<8x32xf32>
    %131 = tpu.matmul %129, %130, %cst_34 {dimension_numbers = #tpu.dot_dimension_numbers<[1], [0], [0], [1], [0, 0, 1, 1], [], []>} : vector<8x32xbf16>, vector<32x32xbf16>, vector<8x32xf32> -> vector<8x32xf32>
    %132 = arith.addf %1, %131 : vector<8x32xf32>
    %c0_35 = arith.constant 0 : index
    %c0_36 = arith.constant 0 : index
    %133 = vector.load %arg13[%c0_35, %c0_36] : memref<1x32xf32, #tpu.memory_space<vmem>>, vector<1x32xf32>
    %c0_37 = arith.constant 0 : index
    %c0_38 = arith.constant 0 : index
    %134 = vector.load %arg14[%c0_37, %c0_38] : memref<1x32xf32, #tpu.memory_space<vmem>>, vector<1x32xf32>
    %cst_39 = arith.constant dense<0.000000e+00> : vector<8xf32>
    %135 = vector.multi_reduction <add>, %132, %cst_39 [1] : vector<8x32xf32> to vector<8xf32>
    %136 = vector.shape_cast %135 : vector<8xf32> to vector<8x1xf32>
    %cst_40 = arith.constant 3.200000e+01 : f32
    %137 = vector.broadcast %cst_40 : f32 to vector<8x1xf32>
    %138 = arith.divf %136, %137 : vector<8x1xf32>
    %139 = vector.broadcast %138 : vector<8x1xf32> to vector<8x32xf32>
    %140 = arith.subf %132, %139 : vector<8x32xf32>
    %141 = arith.mulf %140, %140 : vector<8x32xf32>
    %cst_41 = arith.constant dense<0.000000e+00> : vector<8xf32>
    %142 = vector.multi_reduction <add>, %141, %cst_41 [1] : vector<8x32xf32> to vector<8xf32>
    %143 = vector.shape_cast %142 : vector<8xf32> to vector<8x1xf32>
    %cst_42 = arith.constant 3.200000e+01 : f32
    %144 = vector.broadcast %cst_42 : f32 to vector<8x1xf32>
    %145 = arith.divf %143, %144 : vector<8x1xf32>
    %146 = vector.broadcast %138 : vector<8x1xf32> to vector<8x32xf32>
    %147 = arith.subf %132, %146 : vector<8x32xf32>
    %cst_43 = arith.constant 9.99999974E-6 : f32
    %148 = vector.broadcast %cst_43 : f32 to vector<8x1xf32>
    %149 = arith.addf %145, %148 : vector<8x1xf32>
    %150 = math.rsqrt %149 : vector<8x1xf32>
    %151 = vector.broadcast %150 : vector<8x1xf32> to vector<8x32xf32>
    %152 = arith.mulf %147, %151 : vector<8x32xf32>
    %153 = vector.broadcast %133 : vector<1x32xf32> to vector<8x32xf32>
    %154 = arith.mulf %152, %153 : vector<8x32xf32>
    %155 = vector.broadcast %134 : vector<1x32xf32> to vector<8x32xf32>
    %156 = arith.addf %154, %155 : vector<8x32xf32>
    %157 = arith.truncf %156 : vector<8x32xf32> to vector<8x32xbf16>
    %c0_44 = arith.constant 0 : index
    %c0_45 = arith.constant 0 : index
    %158 = vector.load %arg7[%c0_44, %c0_45] : memref<32x64xbf16, #tpu.memory_space<vmem>>, vector<32x64xbf16>
    %cst_46 = arith.constant dense<0.000000e+00> : vector<8x64xf32>
    %159 = tpu.matmul %157, %158, %cst_46 {dimension_numbers = #tpu.dot_dimension_numbers<[1], [0], [0], [1], [0, 0, 1, 1], [], []>} : vector<8x32xbf16>, vector<32x64xbf16>, vector<8x64xf32> -> vector<8x64xf32>
    %c0_47 = arith.constant 0 : index
    %c0_48 = arith.constant 0 : index
    %160 = vector.load %arg8[%c0_47, %c0_48] : memref<1x64xf32, #tpu.memory_space<vmem>>, vector<1x64xf32>
    %161 = vector.broadcast %160 : vector<1x64xf32> to vector<8x64xf32>
    %162 = arith.addf %159, %161 : vector<8x64xf32>
    %163 = arith.negf %162 : vector<8x64xf32>
    %164 = math.exp %163 : vector<8x64xf32>
    %cst_49 = arith.constant 1.000000e+00 : f32
    %165 = vector.broadcast %cst_49 : f32 to vector<8x64xf32>
    %166 = arith.addf %165, %164 : vector<8x64xf32>
    %167 = arith.divf %165, %166 : vector<8x64xf32>
    %168 = arith.mulf %162, %167 : vector<8x64xf32>
    %169 = arith.truncf %168 : vector<8x64xf32> to vector<8x64xbf16>
    %c0_50 = arith.constant 0 : index
    %c0_51 = arith.constant 0 : index
    %170 = vector.load %arg9[%c0_50, %c0_51] : memref<64x32xbf16, #tpu.memory_space<vmem>>, vector<64x32xbf16>
    %cst_52 = arith.constant dense<0.000000e+00> : vector<8x32xf32>
    %171 = tpu.matmul %169, %170, %cst_52 {dimension_numbers = #tpu.dot_dimension_numbers<[1], [0], [0], [1], [0, 0, 1, 1], [], []>} : vector<8x64xbf16>, vector<64x32xbf16>, vector<8x32xf32> -> vector<8x32xf32>
    %c0_53 = arith.constant 0 : index
    %c0_54 = arith.constant 0 : index
    %172 = vector.load %arg10[%c0_53, %c0_54] : memref<1x32xf32, #tpu.memory_space<vmem>>, vector<1x32xf32>
    %173 = vector.broadcast %172 : vector<1x32xf32> to vector<8x32xf32>
    %174 = arith.addf %171, %173 : vector<8x32xf32>
    %175 = arith.addf %132, %174 : vector<8x32xf32>
    %c0_55 = arith.constant 0 : index
    %c0_56 = arith.constant 0 : index
    %c0_57 = arith.constant 0 : index
    %176 = vector.load %arg15[%c0_55, %c0_56, %c0_57] : memref<1x8x32xf32, #tpu.memory_space<vmem>>, vector<1x8x32xf32>
    %177 = vector.shape_cast %176 : vector<1x8x32xf32> to vector<8x32xf32>
    %178 = vector.shape_cast %175 : vector<8x32xf32> to vector<1x8x32xf32>
    tpu.vector_store %arg15[%c0_55, %c0_56, %c0_57], %178 {strides = array<i32>} : memref<1x8x32xf32, #tpu.memory_space<vmem>>, vector<1x8x32xf32>,
    return
  }
  func.func @transform_0(%arg0: i32) -> (i32, i32, i32) {
    %c0_i32 = arith.constant 0 : i32
    %c0_i32_0 = arith.constant 0 : i32
    %c0_i32_1 = arith.constant 0 : i32
    return %arg0, %c0_i32, %c0_i32_0 : i32, i32, i32
  }
  func.func @transform_1(%arg0: i32) -> (i32, i32) {
    %c0_i32 = arith.constant 0 : i32
    %c0_i32_0 = arith.constant 0 : i32
    %c0_i32_1 = arith.constant 0 : i32
    return %c0_i32, %c0_i32_0 : i32, i32
  }
  func.func @transform_2(%arg0: i32) -> (i32, i32) {
    %c0_i32 = arith.constant 0 : i32
    %c0_i32_0 = arith.constant 0 : i32
    %c0_i32_1 = arith.constant 0 : i32
    return %c0_i32, %c0_i32_0 : i32, i32
  }
  func.func @transform_3(%arg0: i32) -> (i32, i32) {
    %c0_i32 = arith.constant 0 : i32
    %c0_i32_0 = arith.constant 0 : i32
    %c0_i32_1 = arith.constant 0 : i32
    return %c0_i32, %c0_i32_0 : i32, i32
  }
  func.func @transform_4(%arg0: i32) -> (i32, i32) {
    %c0_i32 = arith.constant 0 : i32
    %c0_i32_0 = arith.constant 0 : i32
    %c0_i32_1 = arith.constant 0 : i32
    return %c0_i32, %c0_i32_0 : i32, i32
  }
  func.func @transform_5(%arg0: i32) -> (i32, i32) {
    %c0_i32 = arith.constant 0 : i32
    %c0_i32_0 = arith.constant 0 : i32
    %c0_i32_1 = arith.constant 0 : i32
    return %c0_i32, %c0_i32_0 : i32, i32
  }
  func.func @transform_6(%arg0: i32) -> (i32, i32) {
    %c0_i32 = arith.constant 0 : i32
    %c0_i32_0 = arith.constant 0 : i32
    %c0_i32_1 = arith.constant 0 : i32
    return %c0_i32, %c0_i32_0 : i32, i32
  }
  func.func @transform_7(%arg0: i32) -> (i32, i32) {
    %c0_i32 = arith.constant 0 : i32
    %c0_i32_0 = arith.constant 0 : i32
    %c0_i32_1 = arith.constant 0 : i32
    return %c0_i32, %c0_i32_0 : i32, i32
  }
  func.func @transform_8(%arg0: i32) -> (i32, i32) {
    %c0_i32 = arith.constant 0 : i32
    %c0_i32_0 = arith.constant 0 : i32
    %c0_i32_1 = arith.constant 0 : i32
    return %c0_i32, %c0_i32_0 : i32, i32
  }
  func.func @transform_9(%arg0: i32) -> (i32, i32) {
    %c0_i32 = arith.constant 0 : i32
    %c0_i32_0 = arith.constant 0 : i32
    %c0_i32_1 = arith.constant 0 : i32
    return %c0_i32, %c0_i32_0 : i32, i32
  }
  func.func @transform_10(%arg0: i32) -> (i32, i32) {
    %c0_i32 = arith.constant 0 : i32
    %c0_i32_0 = arith.constant 0 : i32
    %c0_i32_1 = arith.constant 0 : i32
    return %c0_i32, %c0_i32_0 : i32, i32
  }
  func.func @transform_11(%arg0: i32) -> (i32, i32) {
    %c0_i32 = arith.constant 0 : i32
    %c0_i32_0 = arith.constant 0 : i32
    %c0_i32_1 = arith.constant 0 : i32
    return %c0_i32, %c0_i32_0 : i32, i32
  }
  func.func @transform_12(%arg0: i32) -> (i32, i32) {
    %c0_i32 = arith.constant 0 : i32
    %c0_i32_0 = arith.constant 0 : i32
    %c0_i32_1 = arith.constant 0 : i32
    return %c0_i32, %c0_i32_0 : i32, i32
  }
  func.func @transform_13(%arg0: i32) -> (i32, i32) {
    %c0_i32 = arith.constant 0 : i32
    %c0_i32_0 = arith.constant 0 : i32
    %c0_i32_1 = arith.constant 0 : i32
    return %c0_i32, %c0_i32_0 : i32, i32
  }
  func.func @transform_14(%arg0: i32) -> (i32, i32, i32) {
    %c0_i32 = arith.constant 0 : i32
    %c0_i32_0 = arith.constant 0 : i32
    %c0_i32_1 = arith.constant 0 : i32
    return %arg0, %c0_i32, %c0_i32_0 : i32, i32, i32
  }
}

</mosaic_0001>

<llo_original>
// kernel: tpu_custom_call.1
$region0: #{tpu_custom_call.1}
  #allocation0 [shape = 'u32[]', space=smem, size = 0x4, offset = 0x4, fixed_abs, tag = 'smem constant byte address 0x4 - core index']
  #allocation1 [shape = 'u32[144,128]{1,0:T(1,128)}', space=vmem, size = 0x12000, scoped, tag = 'internal scratch']
  #allocation2 [shape = 'f32[8,32]{1,0:T(8,128)}', space=vmem, size = 0x1000, scoped, tag = 'scratch operand']
  %s0 = inlined_call_operand.vmem [shape: f32[2,8,32], index: 0, kind: input, shape index: {}]
  %s1 = inlined_call_operand.hbm [shape: f32[8,8], index: 1, kind: input, shape index: {}]
  %s2 = inlined_call_operand.hbm [shape: f32[8,8], index: 2, kind: input, shape index: {}]
  %s3 = inlined_call_operand.hbm [shape: f32[8,8], index: 3, kind: input, shape index: {}]
  %s4 = inlined_call_operand.vmem [shape: bf16[32,96], index: 4, kind: input, shape index: {}]
  %s5 = inlined_call_operand.vmem [shape: bf16[32,32], index: 5, kind: input, shape index: {}]
  %s6 = inlined_call_operand.hbm [shape: bf16[32,64], index: 6, kind: input, shape index: {}]
  %s7 = inlined_call_operand.vmem [shape: f32[1,64], index: 7, kind: input, shape index: {}]
  %s8 = inlined_call_operand.vmem [shape: bf16[64,32], index: 8, kind: input, shape index: {}]
  %s9 = inlined_call_operand.vmem [shape: f32[1,32], index: 9, kind: input, shape index: {}]
  %s10 = inlined_call_operand.vmem [shape: f32[1,32], index: 10, kind: input, shape index: {}]
  %s11 = inlined_call_operand.vmem [shape: f32[1,32], index: 11, kind: input, shape index: {}]
  %s12 = inlined_call_operand.vmem [shape: f32[1,32], index: 12, kind: input, shape index: {}]
  %s13 = inlined_call_operand.vmem [shape: f32[1,32], index: 13, kind: input, shape index: {}]
  %s14 = inlined_call_operand.hbm [shape: f32[2,8,32], index: 14, kind: output, shape index: {}]
  %s15 = sld [smem:[#allocation0]]
  $region105: #{tpu_custom_call.1} parent=0
    _
  %s17 = ssub.s32 1, %s15
  %s18 = scalar_select 0, %s17, %s15
  $region1: #{tpu_custom_call.1} parent=0
    #allocation3 [shape = 'u8[4096]{0}', space=vmem, size = 0x1000, scoped, tag = 'input window, operand 1, single buffered']
    #allocation4 [shape = 's32[2]{0}', space=sflag, size = 0x8, scoped, tag = 'scoped memory for tpu_custom_call.1']
    #allocation5 [shape = 's32[2]{0}', space=sflag, size = 0x8, scoped, tag = 'scoped memory for tpu_custom_call.1']
    #allocation6 [shape = 'u8[4096]{0}', space=vmem, size = 0x1000, scoped, tag = 'input window, operand 2, single buffered']
    #allocation7 [shape = 's32[1]{0}', space=sflag, size = 0x4, scoped, tag = 'scoped memory for tpu_custom_call.1']
    #allocation8 [shape = 'u8[4096]{0}', space=vmem, size = 0x1000, scoped, tag = 'input window, operand 3, single buffered']
    #allocation9 [shape = 'u8[8192]{0}', space=vmem, size = 0x2000, scoped, tag = 'input window, operand 6, single buffered']
    #allocation10 [shape = 's32[1]{0}', space=sflag, size = 0x4, scoped, tag = 'scoped memory for tpu_custom_call.1']
    #allocation11 [shape = 'u8[8192]{0}', space=vmem, size = 0x2000, scoped, tag = 'output window, operand 0']
    %19 = vsyncpa [#allocation4], 0
    %20 = vsyncpa [#allocation7], 0
    %21 = vsyncpa [#allocation10], 0
    %22 = vsyncpa [#allocation5], 0
    %s23 = scalar_lea.sflag [#allocation5], 1
    %24 = vsyncpa %s23, 0
    loop: start=0, step=1, limit=4
    $region2: #{tpu_custom_call.1} parent=1 // loop_pre_header
      _
    $region3: #{tpu_custom_call.1} parent=1 // loop_header
      %s26 = sphi 0, %s30
      %p27 = scmp.ge.s32.totalorder %s26, 4
      %s36 = sphi 0, %s38
      %s39 = sphi 0, %s36
      %s40 = sphi 0, %s39
      %s56 = sphi 0, %s40
      %s60 = sphi 0, %s60
      %s62 = sphi 0, %s60
      %s63 = sphi 0, %s62
      %s77 = sphi 0, %s63
      %s81 = sphi 0, %s81
      %s83 = sphi 0, %s81
      %s84 = sphi 0, %s83
      %s98 = sphi 0, %s84
      %s102 = sphi 0, %s102
      %s104 = sphi 0, %s102
      %s105 = sphi 0, %s104
      %s119 = sphi 0, %s105
      %s123 = sphi 0, %s123
      %s125 = sphi 0, %s123
      %s126 = sphi 0, %s125
      %s140 = sphi 0, %s126
      %s144 = sphi 0, %s144
      %s146 = sphi 0, %s144
      %s147 = sphi 0, %s146
      %s161 = sphi 0, %s147
      %s165 = sphi 0, %s165
      %s167 = sphi 0, %s165
      %s168 = sphi 0, %s167
      %s182 = sphi 0, %s168
      %s186 = sphi 0, %s186
      %s188 = sphi 0, %s186
      %s189 = sphi 0, %s188
      %s203 = sphi 0, %s189
      %s207 = sphi 0, %s207
      %s209 = sphi 0, %s207
      %s210 = sphi 0, %s209
      %s224 = sphi 0, %s210
      %s228 = sphi 0, %s228
      %s230 = sphi 0, %s228
      %s231 = sphi 0, %s230
      %s245 = sphi 0, %s231
      %s249 = sphi 0, %s249
      %s251 = sphi 0, %s249
      %s252 = sphi 0, %s251
      %s266 = sphi 0, %s252
      %s270 = sphi 0, %s270
      %s272 = sphi 0, %s270
      %s273 = sphi 0, %s272
      %s287 = sphi 0, %s273
      %s291 = sphi 0, %s291
      %s293 = sphi 0, %s291
      %s294 = sphi 0, %s293
      %s308 = sphi 0, %s294
      %s312 = sphi 0, %s312
      %s314 = sphi 0, %s312
      %s315 = sphi 0, %s314
      %s329 = sphi 0, %s315
      %s335 = sphi 0, %s337
      %s338 = sphi 0, %s335
      %s339 = sphi 0, %s338
      %s355 = sphi 0, %s339
    $region4: #{tpu_custom_call.1} parent=1 // loop_header_branch
      %29 = sbr.rel (%p27) target = $region8
    $region5: #{tpu_custom_call.1} parent=1 // loop_body
      %s31 = ssub.s32 %s26, 1
      %s32 = ssub.s32 %s26, 2
      %s33 = sadd.s32 %s26, 1
      %s34 = ssub.s32 %s26, %s33
      %p35 = scmp.eq.s32.totalorder %s34, 0
      %s37 = sadd.s32 %s36, 1
      %s38 = scalar_select %p35, %s36, %s37
      %p41 = pneg %p35
      %p42 = scmp.eq.s32.totalorder %s26, 1
      %p43 = por %p41, %p42
      %p44 = scmp.ne.s32.totalorder %s36, %s39
      %p45 = scmp.eq.s32.totalorder %s26, 0
      %p46 = por %p44, %p45
      %p47 = scmp.ne.s32.totalorder %s36, %s39
      %p48 = scmp.eq.s32.totalorder %s31, 1
      %p49 = por %p47, %p48
      %p50 = scmp.ne.s32.totalorder %s39, %s40
      %p51 = scmp.eq.s32.totalorder %s31, 0
      %p52 = por %p50, %p51
      %p53 = scmp.ne.s32.totalorder %s39, %s40
      %p54 = scmp.eq.s32.totalorder %s32, 1
      %p55 = por %p53, %p54
      %p57 = scmp.ne.s32.totalorder %s40, %s56
      %p58 = scmp.eq.s32.totalorder %s32, 0
      %p59 = por %p57, %p58
      %s61 = sadd.s32 %s60, 1
      %p64 = scmp.eq.s32.totalorder %s26, 1
      %p65 = scmp.ne.s32.totalorder %s60, %s62
      %p66 = scmp.eq.s32.totalorder %s26, 0
      %p67 = por %p65, %p66
      %p68 = scmp.ne.s32.totalorder %s60, %s62
      %p69 = scmp.eq.s32.totalorder %s31, 1
      %p70 = por %p68, %p69
      %p71 = scmp.ne.s32.totalorder %s62, %s63
      %p72 = scmp.eq.s32.totalorder %s31, 0
      %p73 = por %p71, %p72
      %p74 = scmp.ne.s32.totalorder %s62, %s63
      %p75 = scmp.eq.s32.totalorder %s32, 1
      %p76 = por %p74, %p75
      %p78 = scmp.ne.s32.totalorder %s63, %s77
      %p79 = scmp.eq.s32.totalorder %s32, 0
      %p80 = por %p78, %p79
      %s82 = sadd.s32 %s81, 1
      %p85 = scmp.eq.s32.totalorder %s26, 1
      %p86 = scmp.ne.s32.totalorder %s81, %s83
      %p87 = scmp.eq.s32.totalorder %s26, 0
      %p88 = por %p86, %p87
      %p89 = scmp.ne.s32.totalorder %s81, %s83
      %p90 = scmp.eq.s32.totalorder %s31, 1
      %p91 = por %p89, %p90
      %p92 = scmp.ne.s32.totalorder %s83, %s84
      %p93 = scmp.eq.s32.totalorder %s31, 0
      %p94 = por %p92, %p93
      %p95 = scmp.ne.s32.totalorder %s83, %s84
      %p96 = scmp.eq.s32.totalorder %s32, 1
      %p97 = por %p95, %p96
      %p99 = scmp.ne.s32.totalorder %s84, %s98
      %p100 = scmp.eq.s32.totalorder %s32, 0
      %p101 = por %p99, %p100
      %s103 = sadd.s32 %s102, 1
      %p106 = scmp.eq.s32.totalorder %s26, 1
      %p107 = scmp.ne.s32.totalorder %s102, %s104
      %p108 = scmp.eq.s32.totalorder %s26, 0
      %p109 = por %p107, %p108
      %p110 = scmp.ne.s32.totalorder %s102, %s104
      %p111 = scmp.eq.s32.totalorder %s31, 1
      %p112 = por %p110, %p111
      %p113 = scmp.ne.s32.totalorder %s104, %s105
      %p114 = scmp.eq.s32.totalorder %s31, 0
      %p115 = por %p113, %p114
      %p116 = scmp.ne.s32.totalorder %s104, %s105
      %p117 = scmp.eq.s32.totalorder %s32, 1
      %p118 = por %p116, %p117
      %p120 = scmp.ne.s32.totalorder %s105, %s119
      %p121 = scmp.eq.s32.totalorder %s32, 0
      %p122 = por %p120, %p121
      %s124 = sadd.s32 %s123, 1
      %p127 = scmp.eq.s32.totalorder %s26, 1
      %p128 = scmp.ne.s32.totalorder %s123, %s125
      %p129 = scmp.eq.s32.totalorder %s26, 0
      %p130 = por %p128, %p129
      %p131 = scmp.ne.s32.totalorder %s123, %s125
      %p132 = scmp.eq.s32.totalorder %s31, 1
      %p133 = por %p131, %p132
      %p134 = scmp.ne.s32.totalorder %s125, %s126
      %p135 = scmp.eq.s32.totalorder %s31, 0
      %p136 = por %p134, %p135
      %p137 = scmp.ne.s32.totalorder %s125, %s126
      %p138 = scmp.eq.s32.totalorder %s32, 1
      %p139 = por %p137, %p138
      %p141 = scmp.ne.s32.totalorder %s126, %s140
      %p142 = scmp.eq.s32.totalorder %s32, 0
      %p143 = por %p141, %p142
      %s145 = sadd.s32 %s144, 1
      %p148 = scmp.eq.s32.totalorder %s26, 1
      %p149 = scmp.ne.s32.totalorder %s144, %s146
      %p150 = scmp.eq.s32.totalorder %s26, 0
      %p151 = por %p149, %p150
      %p152 = scmp.ne.s32.totalorder %s144, %s146
      %p153 = scmp.eq.s32.totalorder %s31, 1
      %p154 = por %p152, %p153
      %p155 = scmp.ne.s32.totalorder %s146, %s147
      %p156 = scmp.eq.s32.totalorder %s31, 0
      %p157 = por %p155, %p156
      %p158 = scmp.ne.s32.totalorder %s146, %s147
      %p159 = scmp.eq.s32.totalorder %s32, 1
      %p160 = por %p158, %p159
      %p162 = scmp.ne.s32.totalorder %s147, %s161
      %p163 = scmp.eq.s32.totalorder %s32, 0
      %p164 = por %p162, %p163
      %s166 = sadd.s32 %s165, 1
      %p169 = scmp.eq.s32.totalorder %s26, 1
      %p170 = scmp.ne.s32.totalorder %s165, %s167
      %p171 = scmp.eq.s32.totalorder %s26, 0
      %p172 = por %p170, %p171
      %p173 = scmp.ne.s32.totalorder %s165, %s167
      %p174 = scmp.eq.s32.totalorder %s31, 1
      %p175 = por %p173, %p174
      %p176 = scmp.ne.s32.totalorder %s167, %s168
      %p177 = scmp.eq.s32.totalorder %s31, 0
      %p178 = por %p176, %p177
      %p179 = scmp.ne.s32.totalorder %s167, %s168
      %p180 = scmp.eq.s32.totalorder %s32, 1
      %p181 = por %p179, %p180
      %p183 = scmp.ne.s32.totalorder %s168, %s182
      %p184 = scmp.eq.s32.totalorder %s32, 0
      %p185 = por %p183, %p184
      %s187 = sadd.s32 %s186, 1
      %p190 = scmp.eq.s32.totalorder %s26, 1
      %p191 = scmp.ne.s32.totalorder %s186, %s188
      %p192 = scmp.eq.s32.totalorder %s26, 0
      %p193 = por %p191, %p192
      %p194 = scmp.ne.s32.totalorder %s186, %s188
      %p195 = scmp.eq.s32.totalorder %s31, 1
      %p196 = por %p194, %p195
      %p197 = scmp.ne.s32.totalorder %s188, %s189
      %p198 = scmp.eq.s32.totalorder %s31, 0
      %p199 = por %p197, %p198
      %p200 = scmp.ne.s32.totalorder %s188, %s189
      %p201 = scmp.eq.s32.totalorder %s32, 1
      %p202 = por %p200, %p201
      %p204 = scmp.ne.s32.totalorder %s189, %s203
      %p205 = scmp.eq.s32.totalorder %s32, 0
      %p206 = por %p204, %p205
      %s208 = sadd.s32 %s207, 1
      %p211 = scmp.eq.s32.totalorder %s26, 1
      %p212 = scmp.ne.s32.totalorder %s207, %s209
      %p213 = scmp.eq.s32.totalorder %s26, 0
      %p214 = por %p212, %p213
      %p215 = scmp.ne.s32.totalorder %s207, %s209
      %p216 = scmp.eq.s32.totalorder %s31, 1
      %p217 = por %p215, %p216
      %p218 = scmp.ne.s32.totalorder %s209, %s210
      %p219 = scmp.eq.s32.totalorder %s31, 0
      %p220 = por %p218, %p219
      %p221 = scmp.ne.s32.totalorder %s209, %s210
      %p222 = scmp.eq.s32.totalorder %s32, 1
      %p223 = por %p221, %p222
      %p225 = scmp.ne.s32.totalorder %s210, %s224
      %p226 = scmp.eq.s32.totalorder %s32, 0
      %p227 = por %p225, %p226
      %s229 = sadd.s32 %s228, 1
      %p232 = scmp.eq.s32.totalorder %s26, 1
      %p233 = scmp.ne.s32.totalorder %s228, %s230
      %p234 = scmp.eq.s32.totalorder %s26, 0
      %p235 = por %p233, %p234
      %p236 = scmp.ne.s32.totalorder %s228, %s230
      %p237 = scmp.eq.s32.totalorder %s31, 1
      %p238 = por %p236, %p237
      %p239 = scmp.ne.s32.totalorder %s230, %s231
      %p240 = scmp.eq.s32.totalorder %s31, 0
      %p241 = por %p239, %p240
      %p242 = scmp.ne.s32.totalorder %s230, %s231
      %p243 = scmp.eq.s32.totalorder %s32, 1
      %p244 = por %p242, %p243
      %p246 = scmp.ne.s32.totalorder %s231, %s245
      %p247 = scmp.eq.s32.totalorder %s32, 0
      %p248 = por %p246, %p247
      %s250 = sadd.s32 %s249, 1
      %p253 = scmp.eq.s32.totalorder %s26, 1
      %p254 = scmp.ne.s32.totalorder %s249, %s251
      %p255 = scmp.eq.s32.totalorder %s26, 0
      %p256 = por %p254, %p255
      %p257 = scmp.ne.s32.totalorder %s249, %s251
      %p258 = scmp.eq.s32.totalorder %s31, 1
      %p259 = por %p257, %p258
      %p260 = scmp.ne.s32.totalorder %s251, %s252
      %p261 = scmp.eq.s32.totalorder %s31, 0
      %p262 = por %p260, %p261
      %p263 = scmp.ne.s32.totalorder %s251, %s252
      %p264 = scmp.eq.s32.totalorder %s32, 1
      %p265 = por %p263, %p264
      %p267 = scmp.ne.s32.totalorder %s252, %s266
      %p268 = scmp.eq.s32.totalorder %s32, 0
      %p269 = por %p267, %p268
      %s271 = sadd.s32 %s270, 1
      %p274 = scmp.eq.s32.totalorder %s26, 1
      %p275 = scmp.ne.s32.totalorder %s270, %s272
      %p276 = scmp.eq.s32.totalorder %s26, 0
      %p277 = por %p275, %p276
      %p278 = scmp.ne.s32.totalorder %s270, %s272
      %p279 = scmp.eq.s32.totalorder %s31, 1
      %p280 = por %p278, %p279
      %p281 = scmp.ne.s32.totalorder %s272, %s273
      %p282 = scmp.eq.s32.totalorder %s31, 0
      %p283 = por %p281, %p282
      %p284 = scmp.ne.s32.totalorder %s272, %s273
      %p285 = scmp.eq.s32.totalorder %s32, 1
      %p286 = por %p284, %p285
      %p288 = scmp.ne.s32.totalorder %s273, %s287
      %p289 = scmp.eq.s32.totalorder %s32, 0
      %p290 = por %p288, %p289
      %s292 = sadd.s32 %s291, 1
      %p295 = scmp.eq.s32.totalorder %s26, 1
      %p296 = scmp.ne.s32.totalorder %s291, %s293
      %p297 = scmp.eq.s32.totalorder %s26, 0
      %p298 = por %p296, %p297
      %p299 = scmp.ne.s32.totalorder %s291, %s293
      %p300 = scmp.eq.s32.totalorder %s31, 1
      %p301 = por %p299, %p300
      %p302 = scmp.ne.s32.totalorder %s293, %s294
      %p303 = scmp.eq.s32.totalorder %s31, 0
      %p304 = por %p302, %p303
      %p305 = scmp.ne.s32.totalorder %s293, %s294
      %p306 = scmp.eq.s32.totalorder %s32, 1
      %p307 = por %p305, %p306
      %p309 = scmp.ne.s32.totalorder %s294, %s308
      %p310 = scmp.eq.s32.totalorder %s32, 0
      %p311 = por %p309, %p310
      %s313 = sadd.s32 %s312, 1
      %p316 = scmp.eq.s32.totalorder %s26, 1
      %p317 = scmp.ne.s32.totalorder %s312, %s314
      %p318 = scmp.eq.s32.totalorder %s26, 0
      %p319 = por %p317, %p318
      %p320 = scmp.ne.s32.totalorder %s312, %s314
      %p321 = scmp.eq.s32.totalorder %s31, 1
      %p322 = por %p320, %p321
      %p323 = scmp.ne.s32.totalorder %s314, %s315
      %p324 = scmp.eq.s32.totalorder %s31, 0
      %p325 = por %p323, %p324
      %p326 = scmp.ne.s32.totalorder %s314, %s315
      %p327 = scmp.eq.s32.totalorder %s32, 1
      %p328 = por %p326, %p327
      %p330 = scmp.ne.s32.totalorder %s315, %s329
      %p331 = scmp.eq.s32.totalorder %s32, 0
      %p332 = por %p330, %p331
      %s333 = ssub.s32 %s26, %s33
      %p334 = scmp.eq.s32.totalorder %s333, 0
      %s336 = sadd.s32 %s335, 1
      %s337 = scalar_select %p334, %s335, %s336
      %p340 = pneg %p334
      %p341 = scmp.eq.s32.totalorder %s26, 1
      %p342 = por %p340, %p341
      %p343 = scmp.ne.s32.totalorder %s335, %s338
      %p344 = scmp.eq.s32.totalorder %s26, 0
      %p345 = por %p343, %p344
      %p346 = scmp.ne.s32.totalorder %s335, %s338
      %p347 = scmp.eq.s32.totalorder %s31, 1
      %p348 = por %p346, %p347
      %p349 = scmp.ne.s32.totalorder %s338, %s339
      %p350 = scmp.eq.s32.totalorder %s31, 0
      %p351 = por %p349, %p350
      %p352 = scmp.ne.s32.totalorder %s338, %s339
      %p353 = scmp.eq.s32.totalorder %s32, 1
      %p354 = por %p352, %p353
      %p356 = scmp.ne.s32.totalorder %s339, %s355
      %p357 = scmp.eq.s32.totalorder %s32, 0
      %p358 = por %p356, %p357
      %p359 = scmp.le.s32.totalorder 1, %s26
      %p360 = scmp.lt.s32.totalorder %s26, 3
      %p361 = pnand %p359, %p360
      %p362 = pneg %p361
      // Predicated region
      $region9: #{tpu_custom_call.1} parent=5 // pred_check
        _
      $region10: #{tpu_custom_call.1} parent=5 // pred_check_branch
        %364 = sbr.rel (%p361) target = $region12
      $region11: #{tpu_custom_call.1} parent=5 // pred_region
        %s365 = ssub.s32 %s26, 1
        // Predicated region
        $region13: #{tpu_custom_call.1} parent=11 // pred_check
          %p366 = pneg %p73
        $region14: #{tpu_custom_call.1} parent=11 // pred_check_branch
          %368 = sbr.rel (%p366) target = $region16
        $region15: #{tpu_custom_call.1} parent=11 // pred_region
          %s370 = ssub.s32 128, 128
          %371 = vsyncadd [#allocation4], %s370
          %s373 = sshll.u32 [#allocation3], 4
          %s374 = int_to_ptr.vmem [resolvable:$true] %s373
          %376 = dma.hbm_to_vmem [thread:$0]  %s1, 128, %s374, [#allocation4]
        $region16: #{tpu_custom_call.1} parent=11 // pred_fallthru
          _
        // Predicated region
        $region17: #{tpu_custom_call.1} parent=11 // pred_check
          %p377 = pneg %p94
        $region18: #{tpu_custom_call.1} parent=11 // pred_check_branch
          %379 = sbr.rel (%p377) target = $region20
        $region19: #{tpu_custom_call.1} parent=11 // pred_region
          %s381 = ssub.s32 128, 128
          %382 = vsyncadd [#allocation7], %s381
          %s384 = sshll.u32 [#allocation6], 4
          %s385 = int_to_ptr.vmem [resolvable:$true] %s384
          %387 = dma.hbm_to_vmem [thread:$0]  %s2, 128, %s385, [#allocation7]
        $region20: #{tpu_custom_call.1} parent=11 // pred_fallthru
          _
        // Predicated region
        $region21: #{tpu_custom_call.1} parent=11 // pred_check
          %p388 = pneg %p115
        $region22: #{tpu_custom_call.1} parent=11 // pred_check_branch
          %390 = sbr.rel (%p388) target = $region24
        $region23: #{tpu_custom_call.1} parent=11 // pred_region
          %s392 = ssub.s32 128, 128
          %393 = vsyncadd [#allocation7], %s392
          %s395 = sshll.u32 [#allocation8], 4
          %s396 = int_to_ptr.vmem [resolvable:$true] %s395
          %398 = dma.hbm_to_vmem [thread:$0]  %s3, 128, %s396, [#allocation7]
        $region24: #{tpu_custom_call.1} parent=11 // pred_fallthru
          _
        // Predicated region
        $region25: #{tpu_custom_call.1} parent=11 // pred_check
          %p399 = pneg %p136
        $region26: #{tpu_custom_call.1} parent=11 // pred_check_branch
          %401 = sbr.rel (%p399) target = $region28
        $region27: #{tpu_custom_call.1} parent=11 // pred_region
          _
        $region28: #{tpu_custom_call.1} parent=11 // pred_fallthru
          _
        // Predicated region
        $region29: #{tpu_custom_call.1} parent=11 // pred_check
          %p402 = pneg %p157
        $region30: #{tpu_custom_call.1} parent=11 // pred_check_branch
          %404 = sbr.rel (%p402) target = $region32
        $region31: #{tpu_custom_call.1} parent=11 // pred_region
          _
        $region32: #{tpu_custom_call.1} parent=11 // pred_fallthru
          _
        // Predicated region
        $region33: #{tpu_custom_call.1} parent=11 // pred_check
          %p405 = pneg %p178
        $region34: #{tpu_custom_call.1} parent=11 // pred_check_branch
          %407 = sbr.rel (%p405) target = $region36
        $region35: #{tpu_custom_call.1} parent=11 // pred_region
          %s409 = ssub.s32 256, 256
          %410 = vsyncadd [#allocation10], %s409
          %s411 = sshll.u32 [#allocation9], 4
          %s412 = int_to_ptr.vmem [resolvable:$true] %s411
          %417 = dma.hbm_to_vmem [thread:$0]  %s6, 256, %s412, [#allocation10], 64, 64, 4
        $region36: #{tpu_custom_call.1} parent=11 // pred_fallthru
          _
        // Predicated region
        $region37: #{tpu_custom_call.1} parent=11 // pred_check
          %p418 = pneg %p199
        $region38: #{tpu_custom_call.1} parent=11 // pred_check_branch
          %420 = sbr.rel (%p418) target = $region40
        $region39: #{tpu_custom_call.1} parent=11 // pred_region
          _
        $region40: #{tpu_custom_call.1} parent=11 // pred_fallthru
          _
        // Predicated region
        $region41: #{tpu_custom_call.1} parent=11 // pred_check
          %p421 = pneg %p220
        $region42: #{tpu_custom_call.1} parent=11 // pred_check_branch
          %423 = sbr.rel (%p421) target = $region44
        $region43: #{tpu_custom_call.1} parent=11 // pred_region
          _
        $region44: #{tpu_custom_call.1} parent=11 // pred_fallthru
          _
        // Predicated region
        $region45: #{tpu_custom_call.1} parent=11 // pred_check
          %p424 = pneg %p241
        $region46: #{tpu_custom_call.1} parent=11 // pred_check_branch
          %426 = sbr.rel (%p424) target = $region48
        $region47: #{tpu_custom_call.1} parent=11 // pred_region
          _
        $region48: #{tpu_custom_call.1} parent=11 // pred_fallthru
          _
        // Predicated region
        $region49: #{tpu_custom_call.1} parent=11 // pred_check
          %p427 = pneg %p262
        $region50: #{tpu_custom_call.1} parent=11 // pred_check_branch
          %429 = sbr.rel (%p427) target = $region52
        $region51: #{tpu_custom_call.1} parent=11 // pred_region
          _
        $region52: #{tpu_custom_call.1} parent=11 // pred_fallthru
          _
        // Predicated region
        $region53: #{tpu_custom_call.1} parent=11 // pred_check
          %p430 = pneg %p283
        $region54: #{tpu_custom_call.1} parent=11 // pred_check_branch
          %432 = sbr.rel (%p430) target = $region56
        $region55: #{tpu_custom_call.1} parent=11 // pred_region
          _
        $region56: #{tpu_custom_call.1} parent=11 // pred_fallthru
          _
        // Predicated region
        $region57: #{tpu_custom_call.1} parent=11 // pred_check
          %p433 = pneg %p304
        $region58: #{tpu_custom_call.1} parent=11 // pred_check_branch
          %435 = sbr.rel (%p433) target = $region60
        $region59: #{tpu_custom_call.1} parent=11 // pred_region
          _
        $region60: #{tpu_custom_call.1} parent=11 // pred_fallthru
          _
        // Predicated region
        $region61: #{tpu_custom_call.1} parent=11 // pred_check
          %p436 = pneg %p325
        $region62: #{tpu_custom_call.1} parent=11 // pred_check_branch
          %438 = sbr.rel (%p436) target = $region64
        $region63: #{tpu_custom_call.1} parent=11 // pred_region
          _
        $region64: #{tpu_custom_call.1} parent=11 // pred_fallthru
          _
      $region12: #{tpu_custom_call.1} parent=5 // pred_fallthru
        _
      %p439 = scmp.lt.s32.totalorder %s26, 2
      // Predicated region
      $region65: #{tpu_custom_call.1} parent=5 // pred_check
        %p440 = pneg %p439
      $region66: #{tpu_custom_call.1} parent=5 // pred_check_branch
        %442 = sbr.rel (%p440) target = $region68
      $region67: #{tpu_custom_call.1} parent=5 // pred_region
        // Predicated region
        $region69: #{tpu_custom_call.1} parent=67 // pred_check
          %p443 = pneg %p46
        $region70: #{tpu_custom_call.1} parent=67 // pred_check_branch
          %445 = sbr.rel (%p443) target = $region72
        $region71: #{tpu_custom_call.1} parent=67 // pred_region
          %p446 = scmp.lt.s32.totalorder %s26, 1
          %s447 = scalar_select %p446, %s26, 1
          %s448 = smul.addr %s447, 8
          %s449 = scalar_lea.vmem %s0, %s448
        $region72: #{tpu_custom_call.1} parent=67 // pred_fallthru
          _
      $region68: #{tpu_custom_call.1} parent=5 // pred_fallthru
        _
      %p450 = scmp.le.s32.totalorder 1, %s26
      %p451 = scmp.lt.s32.totalorder %s26, 3
      %p452 = pnand %p450, %p451
      %p453 = pneg %p452
      // Predicated region
      $region73: #{tpu_custom_call.1} parent=5 // pred_check
        _
      $region74: #{tpu_custom_call.1} parent=5 // pred_check_branch
        %455 = sbr.rel (%p452) target = $region76
      $region75: #{tpu_custom_call.1} parent=5 // pred_region
        %s456 = ssub.s32 %s26, 1
        // Predicated region
        $region77: #{tpu_custom_call.1} parent=75 // pred_check
          %p457 = pneg %p73
        $region78: #{tpu_custom_call.1} parent=75 // pred_check_branch
          %459 = sbr.rel (%p457) target = $region80
        $region79: #{tpu_custom_call.1} parent=75 // pred_region
          %460 = dma.done [#allocation4], 128
        $region80: #{tpu_custom_call.1} parent=75 // pred_fallthru
          _
        // Predicated region
        $region81: #{tpu_custom_call.1} parent=75 // pred_check
          %p461 = pneg %p94
        $region82: #{tpu_custom_call.1} parent=75 // pred_check_branch
          %463 = sbr.rel (%p461) target = $region84
        $region83: #{tpu_custom_call.1} parent=75 // pred_region
          %464 = dma.done [#allocation7], 128
        $region84: #{tpu_custom_call.1} parent=75 // pred_fallthru
          _
        // Predicated region
        $region85: #{tpu_custom_call.1} parent=75 // pred_check
          %p465 = pneg %p115
        $region86: #{tpu_custom_call.1} parent=75 // pred_check_branch
          %467 = sbr.rel (%p465) target = $region88
        $region87: #{tpu_custom_call.1} parent=75 // pred_region
          %468 = dma.done [#allocation7], 128
        $region88: #{tpu_custom_call.1} parent=75 // pred_fallthru
          _
        // Predicated region
        $region89: #{tpu_custom_call.1} parent=75 // pred_check
          %p469 = pneg %p178
        $region90: #{tpu_custom_call.1} parent=75 // pred_check_branch
          %471 = sbr.rel (%p469) target = $region92
        $region91: #{tpu_custom_call.1} parent=75 // pred_region
          %472 = dma.done [#allocation10], 256
        $region92: #{tpu_custom_call.1} parent=75 // pred_fallthru
          _
        %p473 = scmp.lt.s32.totalorder %s31, 1
        %s474 = scalar_select %p473, %s31, 1
        %s475 = smul.addr %s474, 8
        %s476 = scalar_lea.vmem %s0, %s475
        %p477 = pneg %p52
        %p478 = pneg %p49
        %p479 = pneg %p73
        %p480 = pneg %p70
        %p481 = pneg %p94
        %p482 = pneg %p91
        %p483 = pneg %p115
        %p484 = pneg %p112
        %p485 = pneg %p136
        %p486 = pneg %p133
        %p487 = pneg %p157
        %p488 = pneg %p154
        %p489 = pneg %p178
        %p490 = pneg %p175
        %p491 = pneg %p199
        %p492 = pneg %p196
        %p493 = pneg %p220
        %p494 = pneg %p217
        %p495 = pneg %p241
        %p496 = pneg %p238
        %p497 = pneg %p262
        %p498 = pneg %p259
        %p499 = pneg %p283
        %p500 = pneg %p280
        %p501 = pneg %p304
        %p502 = pneg %p301
        %p503 = pneg %p325
        %p504 = pneg %p322
        %p505 = pneg %p351
        %p506 = pneg %p348
        %s507 = sand.u32 %s338, 1
        %s508 = scalar_lea.sflag [#allocation5], %s507
        %s509 = sand.u32 %s338, 1
        %s510 = smul.addr %s509, 8
        %s511 = scalar_lea.vmem [#allocation11], %s510
        %p512 = scmp.lt.s32.totalorder %s31, 1
        %s513 = scalar_select %p512, %s31, 1
        %s514 = smul.addr %s513, 8
        %s515 = scalar_lea.vmem %s0, %s514
        %v517 = vld [vmem:[%s515] sm:$0xff]
        %v518 = vld [vmem:[%s10] sm:$0x1]
        %v519 = vld [vmem:[%s11] sm:$0x1]
        %vm520 = vcmask 261120
        %v521 = vsel %vm520, %v517, 0.0
        %522 = vadd.xlane.f32.xlu0 %v521
        %v523 = vpop.xlane.xlu0 %522
        %v524 = vrcp.pop 32.0
        %v525 = vmul.f32 %v523, %v524
        %v526 = vsub.f32 %v517, %v525
        %v527 = vmul.f32 %v526, %v526
        %v528 = vsel %vm520, %v527, 0.0
        %529 = vadd.xlane.f32.xlu0 %v528
        %v530 = vpop.xlane.xlu0 %529
        %v531 = vmul.f32 %v530, %v524
        %v532 = vadd.f32 %v531, 1e-05
        %v533 = vrsqrt.pop %v532
        %v534 = vmul.f32 %v526, %v533
        %v536 = vlaneseq
        %v537 = vshrl.u32 %v536, 7
        %v538 = vsub.s32 0, %v537
        %v539 = vrot.slane %v518, %v538
        %v541 = vmul.f32 %v534, %v539
        %v543 = vlaneseq
        %v544 = vshrl.u32 %v543, 7
        %v545 = vsub.s32 0, %v544
        %v546 = vrot.slane %v519, %v545
        %v548 = vadd.f32 %v541, %v546
        %v549 = vpack.c.bf16 %v548, %v548
        %v550 = vld [vmem:[%s4] sm:$0xf]
        %v551 = vld [vmem:[%s4 + $0x4] sm:$0xf]
        %v552 = vld [vmem:[%s4 + $0x8] sm:$0xf]
        %v553 = vld [vmem:[%s4 + $0xc] sm:$0xf]
        %v558 = vunpack.c.l.b16 %v550
        %v559 = vunpack.c.l.b16 %v551
        %v560 = vunpack.c.l.b16 %v552
        %v561 = vunpack.c.l.b16 %v553
        %v562 = vpack.c.b16 %v559, %v558
        %v563 = vpack.c.b16 %v561, %v560
        %v567 = vsel %vm520, %v549, 0
        %569 = vmatprep.subr.bf16.mxu0 0
        %570 = vmatpush1.bf16.msra.mxu0 0
        %571 = vmatprep.subr.bf16.mxu0 0
        %572 = vmatpush1.bf16.msra.mxu0 0
        %573 = vmatprep.subr.bf16.mxu0 0
        %574 = vmatpush1.bf16.msra.mxu0 0
        %575 = vmatprep.subr.bf16.mxu0 0
        %576 = vmatpush1.bf16.msra.mxu0 0
        %577 = vmatprep.subr.bf16.mxu0 0
        %578 = vmatpush1.bf16.msra.mxu0 0
        %579 = vmatprep.subr.bf16.mxu0 0
        %580 = vmatpush1.bf16.msra.mxu0 0
        %581 = vmatprep.subr.bf16.mxu0 0
        %582 = vmatpush1.bf16.msra.mxu0 %v563
        %583 = vmatprep.subr.bf16.mxu0 0
        %584 = vmatpush1.bf16.msra.mxu0 %v562
        %585 = vmatprep.subr.bf16.mxu0 0
        %586 = vmatpush2.bf16.msra.mxu0 0
        %587 = vmatprep.subr.bf16.mxu0 0
        %588 = vmatpush2.bf16.msra.mxu0 0
        %589 = vmatprep.subr.bf16.mxu0 0
        %590 = vmatpush2.bf16.msra.mxu0 0
        %591 = vmatprep.subr.bf16.mxu0 0
        %592 = vmatpush2.bf16.msra.mxu0 0
        %593 = vmatprep.subr.bf16.mxu0 0
        %594 = vmatpush2.bf16.msra.mxu0 0
        %595 = vmatprep.subr.bf16.mxu0 0
        %596 = vmatpush2.bf16.msra.mxu0 0
        %597 = vmatprep.subr.bf16.mxu0 0
        %598 = vmatpush2.bf16.msra.mxu0 0
        %599 = vmatprep.subr.bf16.mxu0 0
        %600 = vmatpush2.bf16.msra.mxu0 0
        %601 = vmatprep.mubr.bf16.mxu0 0
        %602 = vmatmul.mubr.bf16.gmra.mxu0 %v567
        %v603 = vpop.f32.mrf.mxu0
        %v604 = vadd.f32 0.0, %v603
        %v605 = vpop.f32.mrf.mxu0
        %v606 = vpop.f32.mrf.mxu0
        %v607 = vpop.f32.mrf.mxu0
        %608 = vdwg.mxu0
        %610 = vrot.lane.b32.xlu0 %v604, 120
        %v611 = vpop.permute.xlu0 %610
        %613 = vrot.lane.b32.xlu0 %v604, 112
        %v614 = vpop.permute.xlu0 %613
        %616 = vrot.lane.b32.xlu0 %v604, 104
        %v617 = vpop.permute.xlu0 %616
        %v619 = vpack.c.bf16 %v604, %v604
        %v620 = vpack.c.bf16 %v611, %v611
        %v621 = vpack.c.bf16 %v614, %v614
        %v622 = vpack.c.bf16 %v617, %v617
        %v623 = vld [vmem:[#allocation3] sm:$0xff]
        %v624 = vld [vmem:[#allocation6] sm:$0xff]
        %v625 = vld [vmem:[#allocation8] sm:$0xff]
        %626 = vrot.lane.b32.xlu0 %v604, 127
        %v627 = vpop.permute.xlu0 %626
        %628 = vrot.lane.b32.xlu0 %v611, 127
        %v629 = vpop.permute.xlu0 %628
        %630 = vrot.lane.b32.xlu0 %v614, 127
        %v631 = vpop.permute.xlu0 %630
        %632 = vrot.lane.b32.xlu0 %v617, 127
        %v633 = vpop.permute.xlu0 %632
        %638 = vrot.lane.b32.xlu0 %v604, 7
        %v639 = vpop.permute.xlu0 %638
        %640 = vrot.lane.b32.xlu0 %v611, 7
        %v641 = vpop.permute.xlu0 %640
        %642 = vrot.lane.b32.xlu0 %v614, 7
        %v643 = vpop.permute.xlu0 %642
        %644 = vrot.lane.b32.xlu0 %v617, 7
        %v645 = vpop.permute.xlu0 %644
        %vm650 = vcmask 56320
        %v651 = vsel %vm650, %v627, %v639
        %v652 = vsel %vm650, %v629, %v641
        %v653 = vsel %vm650, %v631, %v643
        %v654 = vsel %vm650, %v633, %v645
        %655 = vrot.lane.b32.xlu0 %v604, 121
        %v656 = vpop.permute.xlu0 %655
        %657 = vrot.lane.b32.xlu0 %v611, 121
        %v658 = vpop.permute.xlu0 %657
        %659 = vrot.lane.b32.xlu0 %v614, 121
        %v660 = vpop.permute.xlu0 %659
        %661 = vrot.lane.b32.xlu0 %v617, 121
        %v662 = vpop.permute.xlu0 %661
        %667 = vrot.lane.b32.xlu0 %v604, 1
        %v668 = vpop.permute.xlu0 %667
        %669 = vrot.lane.b32.xlu0 %v611, 1
        %v670 = vpop.permute.xlu0 %669
        %671 = vrot.lane.b32.xlu0 %v614, 1
        %v672 = vpop.permute.xlu0 %671
        %673 = vrot.lane.b32.xlu0 %v617, 1
        %v674 = vpop.permute.xlu0 %673
        %vm679 = vcmask 7168
        %v680 = vsel %vm679, %v656, %v668
        %v681 = vsel %vm679, %v658, %v670
        %v682 = vsel %vm679, %v660, %v672
        %v683 = vsel %vm679, %v662, %v674
        %v684 = vmul.f32 %v604, %v623
        %v685 = vmul.f32 %v611, %v623
        %v686 = vmul.f32 %v614, %v623
        %v687 = vmul.f32 %v617, %v623
        %v688 = vmul.f32 %v651, %v624
        %v689 = vmul.f32 %v652, %v624
        %v690 = vmul.f32 %v653, %v624
        %v691 = vmul.f32 %v654, %v624
        %v692 = vadd.f32 %v684, %v688
        %v693 = vadd.f32 %v685, %v689
        %v694 = vadd.f32 %v686, %v690
        %v695 = vadd.f32 %v687, %v691
        %v696 = vmul.f32 %v680, %v625
        %v697 = vmul.f32 %v681, %v625
        %v698 = vmul.f32 %v682, %v625
        %v699 = vmul.f32 %v683, %v625
        %v700 = vadd.f32 %v692, %v696
        %v701 = vadd.f32 %v693, %v697
        %v702 = vadd.f32 %v694, %v698
        %v703 = vadd.f32 %v695, %v699
        %v704 = vpack.c.bf16 %v700, %v700
        %v705 = vpack.c.bf16 %v701, %v701
        %v706 = vpack.c.bf16 %v702, %v702
        %v707 = vpack.c.bf16 %v703, %v703
        %708 = vrot.lane.b32.xlu0 %v604, 95
        %v709 = vpop.permute.xlu0 %708
        %710 = vrot.lane.b32.xlu0 %v611, 95
        %v711 = vpop.permute.xlu0 %710
        %712 = vrot.lane.b32.xlu0 %v614, 95
        %v713 = vpop.permute.xlu0 %712
        %714 = vrot.lane.b32.xlu0 %v617, 95
        %v715 = vpop.permute.xlu0 %714
        %720 = vrot.lane.b32.xlu0 %v604, 103
        %v721 = vpop.permute.xlu0 %720
        %722 = vrot.lane.b32.xlu0 %v611, 103
        %v723 = vpop.permute.xlu0 %722
        %724 = vrot.lane.b32.xlu0 %v614, 103
        %v725 = vpop.permute.xlu0 %724
        %726 = vrot.lane.b32.xlu0 %v617, 103
        %v727 = vpop.permute.xlu0 %726
        %v732 = vsel %vm650, %v709, %v721
        %v733 = vsel %vm650, %v711, %v723
        %v734 = vsel %vm650, %v713, %v725
        %v735 = vsel %vm650, %v715, %v727
        %736 = vrot.lane.b32.xlu0 %v604, 89
        %v737 = vpop.permute.xlu0 %736
        %738 = vrot.lane.b32.xlu0 %v611, 89
        %v739 = vpop.permute.xlu0 %738
        %740 = vrot.lane.b32.xlu0 %v614, 89
        %v741 = vpop.permute.xlu0 %740
        %742 = vrot.lane.b32.xlu0 %v617, 89
        %v743 = vpop.permute.xlu0 %742
        %748 = vrot.lane.b32.xlu0 %v604, 97
        %v749 = vpop.permute.xlu0 %748
        %750 = vrot.lane.b32.xlu0 %v611, 97
        %v751 = vpop.permute.xlu0 %750
        %752 = vrot.lane.b32.xlu0 %v614, 97
        %v753 = vpop.permute.xlu0 %752
        %754 = vrot.lane.b32.xlu0 %v617, 97
        %v755 = vpop.permute.xlu0 %754
        %v760 = vsel %vm679, %v737, %v749
        %v761 = vsel %vm679, %v739, %v751
        %v762 = vsel %vm679, %v741, %v753
        %v763 = vsel %vm679, %v743, %v755
        %765 = vrot.lane.b32.xlu0 %v623, 32
        %v766 = vpop.permute.xlu0 %765
        %v768 = vmul.f32 %v604, %v766
        %v769 = vmul.f32 %v611, %v766
        %v770 = vmul.f32 %v614, %v766
        %v771 = vmul.f32 %v617, %v766
        %v772 = vmul.f32 %v732, %v624
        %v773 = vmul.f32 %v733, %v624
        %v774 = vmul.f32 %v734, %v624
        %v775 = vmul.f32 %v735, %v624
        %780 = vrot.lane.b32.xlu0 %v772, 32
        %v781 = vpop.permute.xlu0 %780
        %782 = vrot.lane.b32.xlu0 %v773, 32
        %v783 = vpop.permute.xlu0 %782
        %784 = vrot.lane.b32.xlu0 %v774, 32
        %v785 = vpop.permute.xlu0 %784
        %786 = vrot.lane.b32.xlu0 %v775, 32
        %v787 = vpop.permute.xlu0 %786
        %v792 = vadd.f32 %v768, %v781
        %v793 = vadd.f32 %v769, %v783
        %v794 = vadd.f32 %v770, %v785
        %v795 = vadd.f32 %v771, %v787
        %v796 = vmul.f32 %v760, %v625
        %v797 = vmul.f32 %v761, %v625
        %v798 = vmul.f32 %v762, %v625
        %v799 = vmul.f32 %v763, %v625
        %804 = vrot.lane.b32.xlu0 %v796, 32
        %v805 = vpop.permute.xlu0 %804
        %806 = vrot.lane.b32.xlu0 %v797, 32
        %v807 = vpop.permute.xlu0 %806
        %808 = vrot.lane.b32.xlu0 %v798, 32
        %v809 = vpop.permute.xlu0 %808
        %810 = vrot.lane.b32.xlu0 %v799, 32
        %v811 = vpop.permute.xlu0 %810
        %v816 = vadd.f32 %v792, %v805
        %v817 = vadd.f32 %v793, %v807
        %v818 = vadd.f32 %v794, %v809
        %v819 = vadd.f32 %v795, %v811
        %v820 = vpack.c.bf16 %v816, %v816
        %v821 = vpack.c.bf16 %v817, %v817
        %v822 = vpack.c.bf16 %v818, %v818
        %v823 = vpack.c.bf16 %v819, %v819
        %825 = vrot.lane.b32.xlu0 %v820, 96
        %v826 = vpop.permute.xlu0 %825
        %vm827 = vcmask 64512
        %v829 = vsel %vm827, %v704, 0
        %v832 = vsel %vm827, %v826, 0
        %834 = vmatprep.subr.bf16.mxu0 0
        %835 = vmatpush1.bf16.xpose.msra.mxu0 0
        %836 = vmatprep.subr.bf16.mxu0 0
        %837 = vmatpush1.bf16.xpose.msra.mxu0 0
        %838 = vmatprep.subr.bf16.mxu0 0
        %839 = vmatpush1.bf16.xpose.msra.mxu0 0
        %840 = vmatprep.subr.bf16.mxu0 0
        %841 = vmatpush1.bf16.xpose.msra.mxu0 0
        %842 = vmatprep.subr.bf16.mxu0 0
        %843 = vmatpush1.bf16.xpose.msra.mxu0 0
        %844 = vmatprep.subr.bf16.mxu0 0
        %845 = vmatpush1.bf16.xpose.msra.mxu0 0
        %846 = vmatprep.subr.bf16.mxu0 0
        %847 = vmatpush1.bf16.xpose.msra.mxu0 0
        %848 = vmatprep.subr.bf16.mxu0 0
        %849 = vmatpush1.bf16.xpose.msra.mxu0 %v832
        %850 = vmatprep.subr.bf16.mxu0 0
        %851 = vmatpush2.bf16.xpose.msra.mxu0 0
        %852 = vmatprep.subr.bf16.mxu0 0
        %853 = vmatpush2.bf16.xpose.msra.mxu0 0
        %854 = vmatprep.subr.bf16.mxu0 0
        %855 = vmatpush2.bf16.xpose.msra.mxu0 0
        %856 = vmatprep.subr.bf16.mxu0 0
        %857 = vmatpush2.bf16.xpose.msra.mxu0 0
        %858 = vmatprep.subr.bf16.mxu0 0
        %859 = vmatpush2.bf16.xpose.msra.mxu0 0
        %860 = vmatprep.subr.bf16.mxu0 0
        %861 = vmatpush2.bf16.xpose.msra.mxu0 0
        %862 = vmatprep.subr.bf16.mxu0 0
        %863 = vmatpush2.bf16.xpose.msra.mxu0 0
        %864 = vmatprep.subr.bf16.mxu0 0
        %865 = vmatpush2.bf16.xpose.msra.mxu0 0
        %866 = vmatprep.mubr.bf16.mxu0 0
        %867 = vmatmul.mubr.bf16.gmra.mxu0 %v829
        %v868 = vpop.f32.mrf.mxu0
        %v869 = vadd.f32 0.0, %v868
        %v870 = vpop.f32.mrf.mxu0
        %v871 = vpop.f32.mrf.mxu0
        %v872 = vpop.f32.mrf.mxu0
        %873 = vdwg.mxu0
        %875 = vrot.lane.b32.xlu0 %v821, 96
        %v876 = vpop.permute.xlu0 %875
        %v878 = vsel %vm827, %v705, 0
        %v881 = vsel %vm827, %v876, 0
        %883 = vmatprep.subr.bf16.mxu0 0
        %884 = vmatpush1.bf16.xpose.msra.mxu0 0
        %885 = vmatprep.subr.bf16.mxu0 0
        %886 = vmatpush1.bf16.xpose.msra.mxu0 0
        %887 = vmatprep.subr.bf16.mxu0 0
        %888 = vmatpush1.bf16.xpose.msra.mxu0 0
        %889 = vmatprep.subr.bf16.mxu0 0
        %890 = vmatpush1.bf16.xpose.msra.mxu0 0
        %891 = vmatprep.subr.bf16.mxu0 0
        %892 = vmatpush1.bf16.xpose.msra.mxu0 0
        %893 = vmatprep.subr.bf16.mxu0 0
        %894 = vmatpush1.bf16.xpose.msra.mxu0 0
        %895 = vmatprep.subr.bf16.mxu0 0
        %896 = vmatpush1.bf16.xpose.msra.mxu0 0
        %897 = vmatprep.subr.bf16.mxu0 0
        %898 = vmatpush1.bf16.xpose.msra.mxu0 %v881
        %899 = vmatprep.subr.bf16.mxu0 0
        %900 = vmatpush2.bf16.xpose.msra.mxu0 0
        %901 = vmatprep.subr.bf16.mxu0 0
        %902 = vmatpush2.bf16.xpose.msra.mxu0 0
        %903 = vmatprep.subr.bf16.mxu0 0
        %904 = vmatpush2.bf16.xpose.msra.mxu0 0
        %905 = vmatprep.subr.bf16.mxu0 0
        %906 = vmatpush2.bf16.xpose.msra.mxu0 0
        %907 = vmatprep.subr.bf16.mxu0 0
        %908 = vmatpush2.bf16.xpose.msra.mxu0 0
        %909 = vmatprep.subr.bf16.mxu0 0
        %910 = vmatpush2.bf16.xpose.msra.mxu0 0
        %911 = vmatprep.subr.bf16.mxu0 0
        %912 = vmatpush2.bf16.xpose.msra.mxu0 0
        %913 = vmatprep.subr.bf16.mxu0 0
        %914 = vmatpush2.bf16.xpose.msra.mxu0 0
        %915 = vmatprep.mubr.bf16.mxu0 0
        %916 = vmatmul.mubr.bf16.gmra.mxu0 %v878
        %v917 = vpop.f32.mrf.mxu0
        %v918 = vadd.f32 0.0, %v917
        %v919 = vpop.f32.mrf.mxu0
        %v920 = vpop.f32.mrf.mxu0
        %v921 = vpop.f32.mrf.mxu0
        %922 = vdwg.mxu0
        %924 = vrot.lane.b32.xlu0 %v822, 96
        %v925 = vpop.permute.xlu0 %924
        %v927 = vsel %vm827, %v706, 0
        %v930 = vsel %vm827, %v925, 0
        %932 = vmatprep.subr.bf16.mxu0 0
        %933 = vmatpush1.bf16.xpose.msra.mxu0 0
        %934 = vmatprep.subr.bf16.mxu0 0
        %935 = vmatpush1.bf16.xpose.msra.mxu0 0
        %936 = vmatprep.subr.bf16.mxu0 0
        %937 = vmatpush1.bf16.xpose.msra.mxu0 0
        %938 = vmatprep.subr.bf16.mxu0 0
        %939 = vmatpush1.bf16.xpose.msra.mxu0 0
        %940 = vmatprep.subr.bf16.mxu0 0
        %941 = vmatpush1.bf16.xpose.msra.mxu0 0
        %942 = vmatprep.subr.bf16.mxu0 0
        %943 = vmatpush1.bf16.xpose.msra.mxu0 0
        %944 = vmatprep.subr.bf16.mxu0 0
        %945 = vmatpush1.bf16.xpose.msra.mxu0 0
        %946 = vmatprep.subr.bf16.mxu0 0
        %947 = vmatpush1.bf16.xpose.msra.mxu0 %v930
        %948 = vmatprep.subr.bf16.mxu0 0
        %949 = vmatpush2.bf16.xpose.msra.mxu0 0
        %950 = vmatprep.subr.bf16.mxu0 0
        %951 = vmatpush2.bf16.xpose.msra.mxu0 0
        %952 = vmatprep.subr.bf16.mxu0 0
        %953 = vmatpush2.bf16.xpose.msra.mxu0 0
        %954 = vmatprep.subr.bf16.mxu0 0
        %955 = vmatpush2.bf16.xpose.msra.mxu0 0
        %956 = vmatprep.subr.bf16.mxu0 0
        %957 = vmatpush2.bf16.xpose.msra.mxu0 0
        %958 = vmatprep.subr.bf16.mxu0 0
        %959 = vmatpush2.bf16.xpose.msra.mxu0 0
        %960 = vmatprep.subr.bf16.mxu0 0
        %961 = vmatpush2.bf16.xpose.msra.mxu0 0
        %962 = vmatprep.subr.bf16.mxu0 0
        %963 = vmatpush2.bf16.xpose.msra.mxu0 0
        %964 = vmatprep.mubr.bf16.mxu0 0
        %965 = vmatmul.mubr.bf16.gmra.mxu0 %v927
        %v966 = vpop.f32.mrf.mxu0
        %v967 = vadd.f32 0.0, %v966
        %v968 = vpop.f32.mrf.mxu0
        %v969 = vpop.f32.mrf.mxu0
        %v970 = vpop.f32.mrf.mxu0
        %971 = vdwg.mxu0
        %973 = vrot.lane.b32.xlu0 %v823, 96
        %v974 = vpop.permute.xlu0 %973
        %v976 = vsel %vm827, %v707, 0
        %v979 = vsel %vm827, %v974, 0
        %981 = vmatprep.subr.bf16.mxu0 0
        %982 = vmatpush1.bf16.xpose.msra.mxu0 0
        %983 = vmatprep.subr.bf16.mxu0 0
        %984 = vmatpush1.bf16.xpose.msra.mxu0 0
        %985 = vmatprep.subr.bf16.mxu0 0
        %986 = vmatpush1.bf16.xpose.msra.mxu0 0
        %987 = vmatprep.subr.bf16.mxu0 0
        %988 = vmatpush1.bf16.xpose.msra.mxu0 0
        %989 = vmatprep.subr.bf16.mxu0 0
        %990 = vmatpush1.bf16.xpose.msra.mxu0 0
        %991 = vmatprep.subr.bf16.mxu0 0
        %992 = vmatpush1.bf16.xpose.msra.mxu0 0
        %993 = vmatprep.subr.bf16.mxu0 0
        %994 = vmatpush1.bf16.xpose.msra.mxu0 0
        %995 = vmatprep.subr.bf16.mxu0 0
        %996 = vmatpush1.bf16.xpose.msra.mxu0 %v979
        %997 = vmatprep.subr.bf16.mxu0 0
        %998 = vmatpush2.bf16.xpose.msra.mxu0 0
        %999 = vmatprep.subr.bf16.mxu0 0
        %1000 = vmatpush2.bf16.xpose.msra.mxu0 0
        %1001 = vmatprep.subr.bf16.mxu0 0
        %1002 = vmatpush2.bf16.xpose.msra.mxu0 0
        %1003 = vmatprep.subr.bf16.mxu0 0
        %1004 = vmatpush2.bf16.xpose.msra.mxu0 0
        %1005 = vmatprep.subr.bf16.mxu0 0
        %1006 = vmatpush2.bf16.xpose.msra.mxu0 0
        %1007 = vmatprep.subr.bf16.mxu0 0
        %1008 = vmatpush2.bf16.xpose.msra.mxu0 0
        %1009 = vmatprep.subr.bf16.mxu0 0
        %1010 = vmatpush2.bf16.xpose.msra.mxu0 0
        %1011 = vmatprep.subr.bf16.mxu0 0
        %1012 = vmatpush2.bf16.xpose.msra.mxu0 0
        %1013 = vmatprep.mubr.bf16.mxu0 0
        %1014 = vmatmul.mubr.bf16.gmra.mxu0 %v976
        %v1015 = vpop.f32.mrf.mxu0
        %v1016 = vadd.f32 0.0, %v1015
        %v1017 = vpop.f32.mrf.mxu0
        %v1018 = vpop.f32.mrf.mxu0
        %v1019 = vpop.f32.mrf.mxu0
        %1020 = vdwg.mxu0
        %v1021 = vmul.f32 %v869, 0.35355338
        %v1022 = vmul.f32 %v918, 0.35355338
        %v1023 = vmul.f32 %v967, 0.35355338
        %v1024 = vmul.f32 %v1016, 0.35355338
        %v1025 = vlaneseq
        %v1026 = vshrl.u32 %v1025, 7
        %v1027 = vlaneseq
        %v1028 = vand.u32 %v1027, 127
        %vm1029 = vcmp.ge.s32.totalorder %v1026, %v1028
        %v1030 = vsel %vm1029, %v1021, -1e+30
        %v1031 = vsel %vm1029, %v1022, -1e+30
        %v1032 = vsel %vm1029, %v1023, -1e+30
        %v1033 = vsel %vm1029, %v1024, -1e+30
        %v1034 = vsel %vm827, %v1030, -inf
        %1035 = vmax.xlane.f32.xlu0 %v1034
        %v1036 = vpop.xlane.xlu0 %1035
        %v1037 = vsel %vm827, %v1031, -inf
        %1038 = vmax.xlane.f32.xlu0 %v1037
        %v1039 = vpop.xlane.xlu0 %1038
        %v1040 = vsel %vm827, %v1032, -inf
        %1041 = vmax.xlane.f32.xlu0 %v1040
        %v1042 = vpop.xlane.xlu0 %1041
        %v1043 = vsel %vm827, %v1033, -inf
        %1044 = vmax.xlane.f32.xlu0 %v1043
        %v1045 = vpop.xlane.xlu0 %1044
        %v1046 = vsub.f32 %v1030, %v1036
        %v1047 = vsub.f32 %v1031, %v1039
        %v1048 = vsub.f32 %v1032, %v1042
        %v1049 = vsub.f32 %v1033, %v1045
        %v1050 = vmul.f32 %v1046, 1.442695
        %v1051 = vpow.pop %v1050
        %v1052 = vmul.f32 %v1047, 1.442695
        %v1053 = vpow.pop %v1052
        %v1054 = vmul.f32 %v1048, 1.442695
        %v1055 = vpow.pop %v1054
        %v1056 = vmul.f32 %v1049, 1.442695
        %v1057 = vpow.pop %v1056
        %v1058 = vsel %vm827, %v1051, 0.0
        %1059 = vadd.xlane.f32.xlu0 %v1058
        %v1060 = vpop.xlane.xlu0 %1059
        %v1061 = vsel %vm827, %v1053, 0.0
        %1062 = vadd.xlane.f32.xlu0 %v1061
        %v1063 = vpop.xlane.xlu0 %1062
        %v1064 = vsel %vm827, %v1055, 0.0
        %1065 = vadd.xlane.f32.xlu0 %v1064
        %v1066 = vpop.xlane.xlu0 %1065
        %v1067 = vsel %vm827, %v1057, 0.0
        %1068 = vadd.xlane.f32.xlu0 %v1067
        %v1069 = vpop.xlane.xlu0 %1068
        %v1070 = vrcp.pop %v1060
        %v1071 = vrcp.pop %v1063
        %v1072 = vrcp.pop %v1066
        %v1073 = vrcp.pop %v1069
        %v1074 = vmul.f32 %v1051, %v1070
        %v1075 = vmul.f32 %v1053, %v1071
        %v1076 = vmul.f32 %v1055, %v1072
        %v1077 = vmul.f32 %v1057, %v1073
        %v1078 = vpack.c.bf16 %v1074, %v1074
        %v1079 = vpack.c.bf16 %v1075, %v1075
        %v1080 = vpack.c.bf16 %v1076, %v1076
        %v1081 = vpack.c.bf16 %v1077, %v1077
        %1083 = vrot.lane.b32.xlu0 %v619, 64
        %v1084 = vpop.permute.xlu0 %1083
        %v1086 = vsel %vm827, %v1078, 0
        %vm1088 = vcmask 1043456
        %v1090 = vsel %vm1088, %v1084, 0
        %1092 = vmatprep.subr.bf16.mxu0 0
        %1093 = vmatpush1.bf16.msra.mxu0 0
        %1094 = vmatprep.subr.bf16.mxu0 0
        %1095 = vmatpush1.bf16.msra.mxu0 0
        %1096 = vmatprep.subr.bf16.mxu0 0
        %1097 = vmatpush1.bf16.msra.mxu0 0
        %1098 = vmatprep.subr.bf16.mxu0 0
        %1099 = vmatpush1.bf16.msra.mxu0 0
        %1100 = vmatprep.subr.bf16.mxu0 0
        %1101 = vmatpush1.bf16.msra.mxu0 0
        %1102 = vmatprep.subr.bf16.mxu0 0
        %1103 = vmatpush1.bf16.msra.mxu0 0
        %1104 = vmatprep.subr.bf16.mxu0 0
        %1105 = vmatpush1.bf16.msra.mxu0 0
        %1106 = vmatprep.subr.bf16.mxu0 0
        %1107 = vmatpush1.bf16.msra.mxu0 %v1090
        %1108 = vmatprep.subr.bf16.mxu0 0
        %1109 = vmatpush2.bf16.msra.mxu0 0
        %1110 = vmatprep.subr.bf16.mxu0 0
        %1111 = vmatpush2.bf16.msra.mxu0 0
        %1112 = vmatprep.subr.bf16.mxu0 0
        %1113 = vmatpush2.bf16.msra.mxu0 0
        %1114 = vmatprep.subr.bf16.mxu0 0
        %1115 = vmatpush2.bf16.msra.mxu0 0
        %1116 = vmatprep.subr.bf16.mxu0 0
        %1117 = vmatpush2.bf16.msra.mxu0 0
        %1118 = vmatprep.subr.bf16.mxu0 0
        %1119 = vmatpush2.bf16.msra.mxu0 0
        %1120 = vmatprep.subr.bf16.mxu0 0
        %1121 = vmatpush2.bf16.msra.mxu0 0
        %1122 = vmatprep.subr.bf16.mxu0 0
        %1123 = vmatpush2.bf16.msra.mxu0 0
        %1124 = vmatprep.mubr.bf16.mxu0 0
        %1125 = vmatmul.mubr.bf16.gmra.mxu0 %v1086
        %v1126 = vpop.f32.mrf.mxu0
        %v1127 = vadd.f32 0.0, %v1126
        %v1128 = vpop.f32.mrf.mxu0
        %v1129 = vpop.f32.mrf.mxu0
        %v1130 = vpop.f32.mrf.mxu0
        %1131 = vdwg.mxu0
        %1133 = vrot.lane.b32.xlu0 %v620, 64
        %v1134 = vpop.permute.xlu0 %1133
        %v1136 = vsel %vm827, %v1079, 0
        %v1139 = vsel %vm1088, %v1134, 0
        %1141 = vmatprep.subr.bf16.mxu0 0
        %1142 = vmatpush1.bf16.msra.mxu0 0
        %1143 = vmatprep.subr.bf16.mxu0 0
        %1144 = vmatpush1.bf16.msra.mxu0 0
        %1145 = vmatprep.subr.bf16.mxu0 0
        %1146 = vmatpush1.bf16.msra.mxu0 0
        %1147 = vmatprep.subr.bf16.mxu0 0
        %1148 = vmatpush1.bf16.msra.mxu0 0
        %1149 = vmatprep.subr.bf16.mxu0 0
        %1150 = vmatpush1.bf16.msra.mxu0 0
        %1151 = vmatprep.subr.bf16.mxu0 0
        %1152 = vmatpush1.bf16.msra.mxu0 0
        %1153 = vmatprep.subr.bf16.mxu0 0
        %1154 = vmatpush1.bf16.msra.mxu0 0
        %1155 = vmatprep.subr.bf16.mxu0 0
        %1156 = vmatpush1.bf16.msra.mxu0 %v1139
        %1157 = vmatprep.subr.bf16.mxu0 0
        %1158 = vmatpush2.bf16.msra.mxu0 0
        %1159 = vmatprep.subr.bf16.mxu0 0
        %1160 = vmatpush2.bf16.msra.mxu0 0
        %1161 = vmatprep.subr.bf16.mxu0 0
        %1162 = vmatpush2.bf16.msra.mxu0 0
        %1163 = vmatprep.subr.bf16.mxu0 0
        %1164 = vmatpush2.bf16.msra.mxu0 0
        %1165 = vmatprep.subr.bf16.mxu0 0
        %1166 = vmatpush2.bf16.msra.mxu0 0
        %1167 = vmatprep.subr.bf16.mxu0 0
        %1168 = vmatpush2.bf16.msra.mxu0 0
        %1169 = vmatprep.subr.bf16.mxu0 0
        %1170 = vmatpush2.bf16.msra.mxu0 0
        %1171 = vmatprep.subr.bf16.mxu0 0
        %1172 = vmatpush2.bf16.msra.mxu0 0
        %1173 = vmatprep.mubr.bf16.mxu0 0
        %1174 = vmatmul.mubr.bf16.gmra.mxu0 %v1136
        %v1175 = vpop.f32.mrf.mxu0
        %v1176 = vadd.f32 0.0, %v1175
        %v1177 = vpop.f32.mrf.mxu0
        %v1178 = vpop.f32.mrf.mxu0
        %v1179 = vpop.f32.mrf.mxu0
        %1180 = vdwg.mxu0
        %1182 = vrot.lane.b32.xlu0 %v621, 64
        %v1183 = vpop.permute.xlu0 %1182
        %v1185 = vsel %vm827, %v1080, 0
        %v1188 = vsel %vm1088, %v1183, 0
        %1190 = vmatprep.subr.bf16.mxu0 0
        %1191 = vmatpush1.bf16.msra.mxu0 0
        %1192 = vmatprep.subr.bf16.mxu0 0
        %1193 = vmatpush1.bf16.msra.mxu0 0
        %1194 = vmatprep.subr.bf16.mxu0 0
        %1195 = vmatpush1.bf16.msra.mxu0 0
        %1196 = vmatprep.subr.bf16.mxu0 0
        %1197 = vmatpush1.bf16.msra.mxu0 0
        %1198 = vmatprep.subr.bf16.mxu0 0
        %1199 = vmatpush1.bf16.msra.mxu0 0
        %1200 = vmatprep.subr.bf16.mxu0 0
        %1201 = vmatpush1.bf16.msra.mxu0 0
        %1202 = vmatprep.subr.bf16.mxu0 0
        %1203 = vmatpush1.bf16.msra.mxu0 0
        %1204 = vmatprep.subr.bf16.mxu0 0
        %1205 = vmatpush1.bf16.msra.mxu0 %v1188
        %1206 = vmatprep.subr.bf16.mxu0 0
        %1207 = vmatpush2.bf16.msra.mxu0 0
        %1208 = vmatprep.subr.bf16.mxu0 0
        %1209 = vmatpush2.bf16.msra.mxu0 0
        %1210 = vmatprep.subr.bf16.mxu0 0
        %1211 = vmatpush2.bf16.msra.mxu0 0
        %1212 = vmatprep.subr.bf16.mxu0 0
        %1213 = vmatpush2.bf16.msra.mxu0 0
        %1214 = vmatprep.subr.bf16.mxu0 0
        %1215 = vmatpush2.bf16.msra.mxu0 0
        %1216 = vmatprep.subr.bf16.mxu0 0
        %1217 = vmatpush2.bf16.msra.mxu0 0
        %1218 = vmatprep.subr.bf16.mxu0 0
        %1219 = vmatpush2.bf16.msra.mxu0 0
        %1220 = vmatprep.subr.bf16.mxu0 0
        %1221 = vmatpush2.bf16.msra.mxu0 0
        %1222 = vmatprep.mubr.bf16.mxu0 0
        %1223 = vmatmul.mubr.bf16.gmra.mxu0 %v1185
        %v1224 = vpop.f32.mrf.mxu0
        %v1225 = vadd.f32 0.0, %v1224
        %v1226 = vpop.f32.mrf.mxu0
        %v1227 = vpop.f32.mrf.mxu0
        %v1228 = vpop.f32.mrf.mxu0
        %1229 = vdwg.mxu0
        %1231 = vrot.lane.b32.xlu0 %v622, 64
        %v1232 = vpop.permute.xlu0 %1231
        %v1234 = vsel %vm827, %v1081, 0
        %v1237 = vsel %vm1088, %v1232, 0
        %1239 = vmatprep.subr.bf16.mxu0 0
        %1240 = vmatpush1.bf16.msra.mxu0 0
        %1241 = vmatprep.subr.bf16.mxu0 0
        %1242 = vmatpush1.bf16.msra.mxu0 0
        %1243 = vmatprep.subr.bf16.mxu0 0
        %1244 = vmatpush1.bf16.msra.mxu0 0
        %1245 = vmatprep.subr.bf16.mxu0 0
        %1246 = vmatpush1.bf16.msra.mxu0 0
        %1247 = vmatprep.subr.bf16.mxu0 0
        %1248 = vmatpush1.bf16.msra.mxu0 0
        %1249 = vmatprep.subr.bf16.mxu0 0
        %1250 = vmatpush1.bf16.msra.mxu0 0
        %1251 = vmatprep.subr.bf16.mxu0 0
        %1252 = vmatpush1.bf16.msra.mxu0 0
        %1253 = vmatprep.subr.bf16.mxu0 0
        %1254 = vmatpush1.bf16.msra.mxu0 %v1237
        %1255 = vmatprep.subr.bf16.mxu0 0
        %1256 = vmatpush2.bf16.msra.mxu0 0
        %1257 = vmatprep.subr.bf16.mxu0 0
        %1258 = vmatpush2.bf16.msra.mxu0 0
        %1259 = vmatprep.subr.bf16.mxu0 0
        %1260 = vmatpush2.bf16.msra.mxu0 0
        %1261 = vmatprep.subr.bf16.mxu0 0
        %1262 = vmatpush2.bf16.msra.mxu0 0
        %1263 = vmatprep.subr.bf16.mxu0 0
        %1264 = vmatpush2.bf16.msra.mxu0 0
        %1265 = vmatprep.subr.bf16.mxu0 0
        %1266 = vmatpush2.bf16.msra.mxu0 0
        %1267 = vmatprep.subr.bf16.mxu0 0
        %1268 = vmatpush2.bf16.msra.mxu0 0
        %1269 = vmatprep.subr.bf16.mxu0 0
        %1270 = vmatpush2.bf16.msra.mxu0 0
        %1271 = vmatprep.mubr.bf16.mxu0 0
        %1272 = vmatmul.mubr.bf16.gmra.mxu0 %v1234
        %v1273 = vpop.f32.mrf.mxu0
        %v1274 = vadd.f32 0.0, %v1273
        %v1275 = vpop.f32.mrf.mxu0
        %v1276 = vpop.f32.mrf.mxu0
        %v1277 = vpop.f32.mrf.mxu0
        %1278 = vdwg.mxu0
        %1279 = vst.msk [vmem:[#allocation2] sm:$0xff] %vm827, %v1127
        %1281 = vrot.lane.b32.xlu0 %v1176, 8
        %v1282 = vpop.permute.xlu0 %1281
        %vm1284 = vcmask 130112
        %1285 = vst.msk [vmem:[#allocation2] sm:$0xff] %vm1284, %v1282
        %1287 = vrot.lane.b32.xlu0 %v1225, 16
        %v1288 = vpop.permute.xlu0 %1287
        %vm1290 = vcmask 195712
        %1291 = vst.msk [vmem:[#allocation2] sm:$0xff] %vm1290, %v1288
        %1293 = vrot.lane.b32.xlu0 %v1274, 24
        %v1294 = vpop.permute.xlu0 %1293
        %vm1296 = vcmask 261312
        %1297 = vst.msk [vmem:[#allocation2] sm:$0xff] %vm1296, %v1294
        %v1298 = vld [vmem:[#allocation2] sm:$0xff]
        %v1299 = vpack.c.bf16 %v1298, %v1298
        %v1300 = vld [vmem:[%s5] sm:$0xf]
        %v1301 = vld [vmem:[%s5 + $0x4] sm:$0xf]
        %v1302 = vld [vmem:[%s5 + $0x8] sm:$0xf]
        %v1303 = vld [vmem:[%s5 + $0xc] sm:$0xf]
        %v1308 = vunpack.c.l.b16 %v1300
        %v1309 = vunpack.c.l.b16 %v1301
        %v1310 = vunpack.c.l.b16 %v1302
        %v1311 = vunpack.c.l.b16 %v1303
        %v1312 = vpack.c.b16 %v1309, %v1308
        %v1313 = vpack.c.b16 %v1311, %v1310
        %v1317 = vsel %vm520, %v1299, 0
        %1319 = vmatprep.subr.bf16.mxu0 0
        %1320 = vmatpush1.bf16.msra.mxu0 0
        %1321 = vmatprep.subr.bf16.mxu0 0
        %1322 = vmatpush1.bf16.msra.mxu0 0
        %1323 = vmatprep.subr.bf16.mxu0 0
        %1324 = vmatpush1.bf16.msra.mxu0 0
        %1325 = vmatprep.subr.bf16.mxu0 0
        %1326 = vmatpush1.bf16.msra.mxu0 0
        %1327 = vmatprep.subr.bf16.mxu0 0
        %1328 = vmatpush1.bf16.msra.mxu0 0
        %1329 = vmatprep.subr.bf16.mxu0 0
        %1330 = vmatpush1.bf16.msra.mxu0 0
        %1331 = vmatprep.subr.bf16.mxu0 0
        %1332 = vmatpush1.bf16.msra.mxu0 %v1313
        %1333 = vmatprep.subr.bf16.mxu0 0
        %1334 = vmatpush1.bf16.msra.mxu0 %v1312
        %1335 = vmatprep.subr.bf16.mxu0 0
        %1336 = vmatpush2.bf16.msra.mxu0 0
        %1337 = vmatprep.subr.bf16.mxu0 0
        %1338 = vmatpush2.bf16.msra.mxu0 0
        %1339 = vmatprep.subr.bf16.mxu0 0
        %1340 = vmatpush2.bf16.msra.mxu0 0
        %1341 = vmatprep.subr.bf16.mxu0 0
        %1342 = vmatpush2.bf16.msra.mxu0 0
        %1343 = vmatprep.subr.bf16.mxu0 0
        %1344 = vmatpush2.bf16.msra.mxu0 0
        %1345 = vmatprep.subr.bf16.mxu0 0
        %1346 = vmatpush2.bf16.msra.mxu0 0
        %1347 = vmatprep.subr.bf16.mxu0 0
        %1348 = vmatpush2.bf16.msra.mxu0 0
        %1349 = vmatprep.subr.bf16.mxu0 0
        %1350 = vmatpush2.bf16.msra.mxu0 0
        %1351 = vmatprep.mubr.bf16.mxu0 0
        %1352 = vmatmul.mubr.bf16.gmra.mxu0 %v1317
        %v1353 = vpop.f32.mrf.mxu0
        %v1354 = vadd.f32 0.0, %v1353
        %v1355 = vpop.f32.mrf.mxu0
        %v1356 = vpop.f32.mrf.mxu0
        %v1357 = vpop.f32.mrf.mxu0
        %1358 = vdwg.mxu0
        %v1359 = vadd.f32 %v517, %v1354
        %v1360 = vld [vmem:[%s12] sm:$0x1]
        %v1361 = vld [vmem:[%s13] sm:$0x1]
        %v1362 = vsel %vm520, %v1359, 0.0
        %1363 = vadd.xlane.f32.xlu0 %v1362
        %v1364 = vpop.xlane.xlu0 %1363
        %v1365 = vmul.f32 %v1364, %v524
        %v1366 = vsub.f32 %v1359, %v1365
        %v1367 = vmul.f32 %v1366, %v1366
        %v1368 = vsel %vm520, %v1367, 0.0
        %1369 = vadd.xlane.f32.xlu0 %v1368
        %v1370 = vpop.xlane.xlu0 %1369
        %v1371 = vmul.f32 %v1370, %v524
        %v1372 = vadd.f32 %v1371, 1e-05
        %v1373 = vrsqrt.pop %v1372
        %v1374 = vmul.f32 %v1366, %v1373
        %v1376 = vlaneseq
        %v1377 = vshrl.u32 %v1376, 7
        %v1378 = vsub.s32 0, %v1377
        %v1379 = vrot.slane %v1360, %v1378
        %v1381 = vmul.f32 %v1374, %v1379
        %v1383 = vlaneseq
        %v1384 = vshrl.u32 %v1383, 7
        %v1385 = vsub.s32 0, %v1384
        %v1386 = vrot.slane %v1361, %v1385
        %v1388 = vadd.f32 %v1381, %v1386
        %v1389 = vpack.c.bf16 %v1388, %v1388
        %v1390 = vld [vmem:[#allocation9] sm:$0xf]
        %v1391 = vld [vmem:[#allocation9 + $0x4] sm:$0xf]
        %v1392 = vld [vmem:[#allocation9 + $0x8] sm:$0xf]
        %v1393 = vld [vmem:[#allocation9 + $0xc] sm:$0xf]
        %v1394 = vld [vmem:[%s7] sm:$0x1]
        %v1396 = vlaneseq
        %v1397 = vshrl.u32 %v1396, 7
        %v1398 = vsub.s32 0, %v1397
        %v1399 = vrot.slane %v1394, %v1398
        %v1405 = vunpack.c.l.b16 %v1390
        %v1406 = vunpack.c.l.b16 %v1391
        %v1407 = vunpack.c.l.b16 %v1392
        %v1408 = vunpack.c.l.b16 %v1393
        %v1409 = vpack.c.b16 %v1406, %v1405
        %v1410 = vpack.c.b16 %v1408, %v1407
        %v1414 = vsel %vm520, %v1389, 0
        %1416 = vmatprep.subr.bf16.mxu0 0
        %1417 = vmatpush1.bf16.msra.mxu0 0
        %1418 = vmatprep.subr.bf16.mxu0 0
        %1419 = vmatpush1.bf16.msra.mxu0 0
        %1420 = vmatprep.subr.bf16.mxu0 0
        %1421 = vmatpush1.bf16.msra.mxu0 0
        %1422 = vmatprep.subr.bf16.mxu0 0
        %1423 = vmatpush1.bf16.msra.mxu0 0
        %1424 = vmatprep.subr.bf16.mxu0 0
        %1425 = vmatpush1.bf16.msra.mxu0 0
        %1426 = vmatprep.subr.bf16.mxu0 0
        %1427 = vmatpush1.bf16.msra.mxu0 0
        %1428 = vmatprep.subr.bf16.mxu0 0
        %1429 = vmatpush1.bf16.msra.mxu0 %v1410
        %1430 = vmatprep.subr.bf16.mxu0 0
        %1431 = vmatpush1.bf16.msra.mxu0 %v1409
        %1432 = vmatprep.subr.bf16.mxu0 0
        %1433 = vmatpush2.bf16.msra.mxu0 0
        %1434 = vmatprep.subr.bf16.mxu0 0
        %1435 = vmatpush2.bf16.msra.mxu0 0
        %1436 = vmatprep.subr.bf16.mxu0 0
        %1437 = vmatpush2.bf16.msra.mxu0 0
        %1438 = vmatprep.subr.bf16.mxu0 0
        %1439 = vmatpush2.bf16.msra.mxu0 0
        %1440 = vmatprep.subr.bf16.mxu0 0
        %1441 = vmatpush2.bf16.msra.mxu0 0
        %1442 = vmatprep.subr.bf16.mxu0 0
        %1443 = vmatpush2.bf16.msra.mxu0 0
        %1444 = vmatprep.subr.bf16.mxu0 0
        %1445 = vmatpush2.bf16.msra.mxu0 0
        %1446 = vmatprep.subr.bf16.mxu0 0
        %1447 = vmatpush2.bf16.msra.mxu0 0
        %1448 = vmatprep.mubr.bf16.mxu0 0
        %1449 = vmatmul.mubr.bf16.gmra.mxu0 %v1414
        %v1450 = vpop.f32.mrf.mxu0
        %v1451 = vadd.f32 %v1399, %v1450
        %v1452 = vpop.f32.mrf.mxu0
        %v1453 = vpop.f32.mrf.mxu0
        %v1454 = vpop.f32.mrf.mxu0
        %1455 = vdwg.mxu0
        %v1456 = vxor.u32 %v1451, 2147483648
        %v1457 = vmul.f32 %v1456, 1.442695
        %v1458 = vpow.pop %v1457
        %v1459 = vadd.f32 %v1458, 1.0
        %v1460 = vrcp.pop %v1459
        %v1461 = vmul.f32 1.0, %v1460
        %v1462 = vmul.f32 %v1451, %v1461
        %v1463 = vpack.c.bf16 %v1462, %v1462
        %v1464 = vld [vmem:[%s8] sm:$0xf]
        %v1465 = vld [vmem:[%s8 + $0x4] sm:$0xf]
        %v1466 = vld [vmem:[%s8 + $0x8] sm:$0xf]
        %v1467 = vld [vmem:[%s8 + $0xc] sm:$0xf]
        %v1468 = vld [vmem:[%s8 + $0x10] sm:$0xf]
        %v1469 = vld [vmem:[%s8 + $0x14] sm:$0xf]
        %v1470 = vld [vmem:[%s8 + $0x18] sm:$0xf]
        %v1471 = vld [vmem:[%s8 + $0x1c] sm:$0xf]
        %v1472 = vld [vmem:[%s9] sm:$0x1]
        %v1474 = vlaneseq
        %v1475 = vshrl.u32 %v1474, 7
        %v1476 = vsub.s32 0, %v1475
        %v1477 = vrot.slane %v1472, %v1476
        %v1487 = vunpack.c.l.b16 %v1464
        %v1488 = vunpack.c.l.b16 %v1465
        %v1489 = vunpack.c.l.b16 %v1466
        %v1490 = vunpack.c.l.b16 %v1467
        %v1491 = vunpack.c.l.b16 %v1468
        %v1492 = vunpack.c.l.b16 %v1469
        %v1493 = vunpack.c.l.b16 %v1470
        %v1494 = vunpack.c.l.b16 %v1471
        %v1495 = vpack.c.b16 %v1488, %v1487
        %v1496 = vpack.c.b16 %v1490, %v1489
        %v1497 = vpack.c.b16 %v1492, %v1491
        %v1498 = vpack.c.b16 %v1494, %v1493
        %vm1503 = vcmask 523264
        %v1505 = vsel %vm1503, %v1463, 0
        %1507 = vmatprep.subr.bf16.mxu0 0
        %1508 = vmatpush1.bf16.msra.mxu0 0
        %1509 = vmatprep.subr.bf16.mxu0 0
        %1510 = vmatpush1.bf16.msra.mxu0 0
        %1511 = vmatprep.subr.bf16.mxu0 0
        %1512 = vmatpush1.bf16.msra.mxu0 0
        %1513 = vmatprep.subr.bf16.mxu0 0
        %1514 = vmatpush1.bf16.msra.mxu0 0
        %1515 = vmatprep.subr.bf16.mxu0 0
        %1516 = vmatpush1.bf16.msra.mxu0 %v1498
        %1517 = vmatprep.subr.bf16.mxu0 0
        %1518 = vmatpush1.bf16.msra.mxu0 %v1497
        %1519 = vmatprep.subr.bf16.mxu0 0
        %1520 = vmatpush1.bf16.msra.mxu0 %v1496
        %1521 = vmatprep.subr.bf16.mxu0 0
        %1522 = vmatpush1.bf16.msra.mxu0 %v1495
        %1523 = vmatprep.subr.bf16.mxu0 0
        %1524 = vmatpush2.bf16.msra.mxu0 0
        %1525 = vmatprep.subr.bf16.mxu0 0
        %1526 = vmatpush2.bf16.msra.mxu0 0
        %1527 = vmatprep.subr.bf16.mxu0 0
        %1528 = vmatpush2.bf16.msra.mxu0 0
        %1529 = vmatprep.subr.bf16.mxu0 0
        %1530 = vmatpush2.bf16.msra.mxu0 0
        %1531 = vmatprep.subr.bf16.mxu0 0
        %1532 = vmatpush2.bf16.msra.mxu0 0
        %1533 = vmatprep.subr.bf16.mxu0 0
        %1534 = vmatpush2.bf16.msra.mxu0 0
        %1535 = vmatprep.subr.bf16.mxu0 0
        %1536 = vmatpush2.bf16.msra.mxu0 0
        %1537 = vmatprep.subr.bf16.mxu0 0
        %1538 = vmatpush2.bf16.msra.mxu0 0
        %1539 = vmatprep.mubr.bf16.mxu0 0
        %1540 = vmatmul.mubr.bf16.gmra.mxu0 %v1505
        %v1541 = vpop.f32.mrf.mxu0
        %v1542 = vadd.f32 %v1477, %v1541
        %v1543 = vpop.f32.mrf.mxu0
        %v1544 = vpop.f32.mrf.mxu0
        %v1545 = vpop.f32.mrf.mxu0
        %1546 = vdwg.mxu0
        %v1547 = vadd.f32 %v1359, %v1542
        %1548 = vst.msk [vmem:[%s511] sm:$0xff] %vm520, %v1547
        %s1549 = sand.u32 %s338, 1
        %s1550 = scalar_lea.sflag [#allocation5], %s1549
        %s1551 = sand.u32 %s338, 1
        %s1552 = smul.addr %s1551, 8
        %s1553 = scalar_lea.vmem [#allocation11], %s1552
        // Predicated region
        $region93: #{tpu_custom_call.1} parent=75 // pred_check
          %p1554 = pneg %p348
        $region94: #{tpu_custom_call.1} parent=75 // pred_check_branch
          %1556 = sbr.rel (%p1554) target = $region96
        $region95: #{tpu_custom_call.1} parent=75 // pred_region
          %s1558 = ssub.s32 128, 128
          %1559 = vsyncadd %s1550, %s1558
          %s1560 = smul.addr %s31, 128
          %s1561 = scalar_lea.hbm %s14, %s1560
          %s1563 = sshll.u32 %s1553, 4
          %s1564 = int_to_ptr.vmem [resolvable:$true] %s1563
          %1566 = dma.vmem_to_hbm [thread:$0]  %s1564, 128, %s1561, %s1550
        $region96: #{tpu_custom_call.1} parent=75 // pred_fallthru
          _
      $region76: #{tpu_custom_call.1} parent=5 // pred_fallthru
        _
      %p1567 = scmp.le.s32.totalorder 2, %s26
      // Predicated region
      $region97: #{tpu_custom_call.1} parent=5 // pred_check
        %p1568 = pneg %p1567
      $region98: #{tpu_custom_call.1} parent=5 // pred_check_branch
        %1570 = sbr.rel (%p1568) target = $region100
      $region99: #{tpu_custom_call.1} parent=5 // pred_region
        %s1571 = ssub.s32 %s26, 2
        // Predicated region
        $region101: #{tpu_custom_call.1} parent=99 // pred_check
          %p1572 = pneg %p354
        $region102: #{tpu_custom_call.1} parent=99 // pred_check_branch
          %1574 = sbr.rel (%p1572) target = $region104
        $region103: #{tpu_custom_call.1} parent=99 // pred_region
          %s1575 = sand.u32 %s339, 1
          %s1576 = scalar_lea.sflag [#allocation5], %s1575
          %s1577 = sand.u32 %s339, 1
          %s1578 = smul.addr %s1577, 8
          %s1579 = scalar_lea.vmem [#allocation11], %s1578
          %1580 = dma.done %s1576, 128
        $region104: #{tpu_custom_call.1} parent=99 // pred_fallthru
          _
      $region100: #{tpu_custom_call.1} parent=5 // pred_fallthru
        _
    $region6: #{tpu_custom_call.1} parent=1 // loop_footer
      %s30 = sadd.s32 1, %s26
    $region7: #{tpu_custom_call.1} parent=1 // loop_footer_branch
      %25 = sbr.rel target = $region3
    $region8: #{tpu_custom_call.1} parent=1 // loop_exit
      _
    %1581 = vsyncpa [#allocation4], 1
    %s1582 = scalar_lea.sflag [#allocation4], 1
    %1583 = vsyncpa %s1582, 1
    %1584 = vsyncpa [#allocation7], 1
    %1585 = vsyncpa [#allocation10], 1
    %1586 = vsyncpa [#allocation5], 1
    %s1587 = scalar_lea.sflag [#allocation5], 1
    %1588 = vsyncpa %s1587, 1

// kernel: tpu_custom_call.1
$region0: #{tpu_custom_call.1}
  #allocation0 [shape = 'u32[]', space=smem, size = 0x4, offset = 0x4, fixed_abs, tag = 'smem constant byte address 0x4 - core index']
  #allocation1 [shape = 'u32[144,128]{1,0:T(1,128)}', space=vmem, size = 0x12000, scoped, tag = 'internal scratch']
  #allocation2 [shape = 'f32[8,32]{1,0:T(8,128)}', space=vmem, size = 0x1000, scoped, tag = 'scratch operand']
  %s0 = inlined_call_operand.vmem [shape: f32[2,8,32], index: 0, kind: input, shape index: {}]
  %s1 = inlined_call_operand.hbm [shape: f32[8,8], index: 1, kind: input, shape index: {}]
  %s2 = inlined_call_operand.hbm [shape: f32[8,8], index: 2, kind: input, shape index: {}]
  %s3 = inlined_call_operand.hbm [shape: f32[8,8], index: 3, kind: input, shape index: {}]
  %s4 = inlined_call_operand.vmem [shape: bf16[32,96], index: 4, kind: input, shape index: {}]
  %s5 = inlined_call_operand.vmem [shape: bf16[32,32], index: 5, kind: input, shape index: {}]
  %s6 = inlined_call_operand.hbm [shape: bf16[32,64], index: 6, kind: input, shape index: {}]
  %s7 = inlined_call_operand.vmem [shape: f32[1,64], index: 7, kind: input, shape index: {}]
  %s8 = inlined_call_operand.vmem [shape: bf16[64,32], index: 8, kind: input, shape index: {}]
  %s9 = inlined_call_operand.vmem [shape: f32[1,32], index: 9, kind: input, shape index: {}]
  %s10 = inlined_call_operand.vmem [shape: f32[1,32], index: 10, kind: input, shape index: {}]
  %s11 = inlined_call_operand.vmem [shape: f32[1,32], index: 11, kind: input, shape index: {}]
  %s12 = inlined_call_operand.vmem [shape: f32[1,32], index: 12, kind: input, shape index: {}]
  %s13 = inlined_call_operand.vmem [shape: f32[1,32], index: 13, kind: input, shape index: {}]
  %s14 = inlined_call_operand.hbm [shape: f32[2,8,32], index: 14, kind: output, shape index: {}]
  %s15 = sld [smem:[#allocation0]]
  $region105: #{tpu_custom_call.1} parent=0
    _
  %s17 = ssub.s32 1, %s15
  %s18 = scalar_select 0, %s17, %s15
  $region1: #{tpu_custom_call.1} parent=0
    #allocation3 [shape = 'u8[4096]{0}', space=vmem, size = 0x1000, scoped, tag = 'input window, operand 1, single buffered']
    #allocation4 [shape = 's32[2]{0}', space=sflag, size = 0x8, scoped, tag = 'scoped memory for tpu_custom_call.1']
    #allocation5 [shape = 's32[2]{0}', space=sflag, size = 0x8, scoped, tag = 'scoped memory for tpu_custom_call.1']
    #allocation6 [shape = 'u8[4096]{0}', space=vmem, size = 0x1000, scoped, tag = 'input window, operand 2, single buffered']
    #allocation7 [shape = 's32[1]{0}', space=sflag, size = 0x4, scoped, tag = 'scoped memory for tpu_custom_call.1']
    #allocation8 [shape = 'u8[4096]{0}', space=vmem, size = 0x1000, scoped, tag = 'input window, operand 3, single buffered']
    #allocation9 [shape = 'u8[8192]{0}', space=vmem, size = 0x2000, scoped, tag = 'input window, operand 6, single buffered']
    #allocation10 [shape = 's32[1]{0}', space=sflag, size = 0x4, scoped, tag = 'scoped memory for tpu_custom_call.1']
    #allocation11 [shape = 'u8[8192]{0}', space=vmem, size = 0x2000, scoped, tag = 'output window, operand 0']
    %19 = vsyncpa [#allocation4], 0
    %20 = vsyncpa [#allocation7], 0
    %21 = vsyncpa [#allocation10], 0
    %22 = vsyncpa [#allocation5], 0
    %s23 = scalar_lea.sflag [#allocation5], 1
    %24 = vsyncpa %s23, 0
    loop: start=0, step=1, limit=4
    $region2: #{tpu_custom_call.1} parent=1 // loop_pre_header
      _
    $region3: #{tpu_custom_call.1} parent=1 // loop_header
      %s26 = sphi 0, %s30
      %p27 = scmp.ge.s32.totalorder %s26, 4
      %s36 = sphi 0, %s38
      %s39 = sphi 0, %s36
      %s40 = sphi 0, %s39
      %s56 = sphi 0, %s40
      %s60 = sphi 0, %s60
      %s62 = sphi 0, %s60
      %s63 = sphi 0, %s62
      %s77 = sphi 0, %s63
      %s81 = sphi 0, %s81
      %s83 = sphi 0, %s81
      %s84 = sphi 0, %s83
      %s98 = sphi 0, %s84
      %s102 = sphi 0, %s102
      %s104 = sphi 0, %s102
      %s105 = sphi 0, %s104
      %s119 = sphi 0, %s105
      %s123 = sphi 0, %s123
      %s125 = sphi 0, %s123
      %s126 = sphi 0, %s125
      %s140 = sphi 0, %s126
      %s144 = sphi 0, %s144
      %s146 = sphi 0, %s144
      %s147 = sphi 0, %s146
      %s161 = sphi 0, %s147
      %s165 = sphi 0, %s165
      %s167 = sphi 0, %s165
      %s168 = sphi 0, %s167
      %s182 = sphi 0, %s168
      %s186 = sphi 0, %s186
      %s188 = sphi 0, %s186
      %s189 = sphi 0, %s188
      %s203 = sphi 0, %s189
      %s207 = sphi 0, %s207
      %s209 = sphi 0, %s207
      %s210 = sphi 0, %s209
      %s224 = sphi 0, %s210
      %s228 = sphi 0, %s228
      %s230 = sphi 0, %s228
      %s231 = sphi 0, %s230
      %s245 = sphi 0, %s231
      %s249 = sphi 0, %s249
      %s251 = sphi 0, %s249
      %s252 = sphi 0, %s251
      %s266 = sphi 0, %s252
      %s270 = sphi 0, %s270
      %s272 = sphi 0, %s270
      %s273 = sphi 0, %s272
      %s287 = sphi 0, %s273
      %s291 = sphi 0, %s291
      %s293 = sphi 0, %s291
      %s294 = sphi 0, %s293
      %s308 = sphi 0, %s294
      %s312 = sphi 0, %s312
      %s314 = sphi 0, %s312
      %s315 = sphi 0, %s314
      %s329 = sphi 0, %s315
      %s335 = sphi 0, %s337
      %s338 = sphi 0, %s335
      %s339 = sphi 0, %s338
      %s355 = sphi 0, %s339
    $region4: #{tpu_custom_call.1} parent=1 // loop_header_branch
      %29 = sbr.rel (%p27) target = $region8
    $region5: #{tpu_custom_call.1} parent=1 // loop_body
      %s31 = ssub.s32 %s26, 1
      %s32 = ssub.s32 %s26, 2
      %s33 = sadd.s32 %s26, 1
      %s34 = ssub.s32 %s26, %s33
      %p35 = scmp.eq.s32.totalorder %s34, 0
      %s37 = sadd.s32 %s36, 1
      %s38 = scalar_select %p35, %s36, %s37
      %p41 = pneg %p35
      %p42 = scmp.eq.s32.totalorder %s26, 1
      %p43 = por %p41, %p42
      %p44 = scmp.ne.s32.totalorder %s36, %s39
      %p45 = scmp.eq.s32.totalorder %s26, 0
      %p46 = por %p44, %p45
      %p47 = scmp.ne.s32.totalorder %s36, %s39
      %p48 = scmp.eq.s32.totalorder %s31, 1
      %p49 = por %p47, %p48
      %p50 = scmp.ne.s32.totalorder %s39, %s40
      %p51 = scmp.eq.s32.totalorder %s31, 0
      %p52 = por %p50, %p51
      %p53 = scmp.ne.s32.totalorder %s39, %s40
      %p54 = scmp.eq.s32.totalorder %s32, 1
      %p55 = por %p53, %p54
      %p57 = scmp.ne.s32.totalorder %s40, %s56
      %p58 = scmp.eq.s32.totalorder %s32, 0
      %p59 = por %p57, %p58
      %s61 = sadd.s32 %s60, 1
      %p64 = scmp.eq.s32.totalorder %s26, 1
      %p65 = scmp.ne.s32.totalorder %s60, %s62
      %p66 = scmp.eq.s32.totalorder %s26, 0
      %p67 = por %p65, %p66
      %p68 = scmp.ne.s32.totalorder %s60, %s62
      %p69 = scmp.eq.s32.totalorder %s31, 1
      %p70 = por %p68, %p69
      %p71 = scmp.ne.s32.totalorder %s62, %s63
      %p72 = scmp.eq.s32.totalorder %s31, 0
      %p73 = por %p71, %p72
      %p74 = scmp.ne.s32.totalorder %s62, %s63
      %p75 = scmp.eq.s32.totalorder %s32, 1
      %p76 = por %p74, %p75
      %p78 = scmp.ne.s32.totalorder %s63, %s77
      %p79 = scmp.eq.s32.totalorder %s32, 0
      %p80 = por %p78, %p79
      %s82 = sadd.s32 %s81, 1
      %p85 = scmp.eq.s32.totalorder %s26, 1
      %p86 = scmp.ne.s32.totalorder %s81, %s83
      %p87 = scmp.eq.s32.totalorder %s26, 0
      %p88 = por %p86, %p87
      %p89 = scmp.ne.s32.totalorder %s81, %s83
      %p90 = scmp.eq.s32.totalorder %s31, 1
      %p91 = por %p89, %p90
      %p92 = scmp.ne.s32.totalorder %s83, %s84
      %p93 = scmp.eq.s32.totalorder %s31, 0
      %p94 = por %p92, %p93
      %p95 = scmp.ne.s32.totalorder %s83, %s84
      %p96 = scmp.eq.s32.totalorder %s32, 1
      %p97 = por %p95, %p96
      %p99 = scmp.ne.s32.totalorder %s84, %s98
      %p100 = scmp.eq.s32.totalorder %s32, 0
      %p101 = por %p99, %p100
      %s103 = sadd.s32 %s102, 1
      %p106 = scmp.eq.s32.totalorder %s26, 1
      %p107 = scmp.ne.s32.totalorder %s102, %s104
      %p108 = scmp.eq.s32.totalorder %s26, 0
      %p109 = por %p107, %p108
      %p110 = scmp.ne.s32.totalorder %s102, %s104
      %p111 = scmp.eq.s32.totalorder %s31, 1
      %p112 = por %p110, %p111
      %p113 = scmp.ne.s32.totalorder %s104, %s105
      %p114 = scmp.eq.s32.totalorder %s31, 0
      %p115 = por %p113, %p114
      %p116 = scmp.ne.s32.totalorder %s104, %s105
      %p117 = scmp.eq.s32.totalorder %s32, 1
      %p118 = por %p116, %p117
      %p120 = scmp.ne.s32.totalorder %s105, %s119
      %p121 = scmp.eq.s32.totalorder %s32, 0
      %p122 = por %p120, %p121
      %s124 = sadd.s32 %s123, 1
      %p127 = scmp.eq.s32.totalorder %s26, 1
      %p128 = scmp.ne.s32.totalorder %s123, %s125
      %p129 = scmp.eq.s32.totalorder %s26, 0
      %p130 = por %p128, %p129
      %p131 = scmp.ne.s32.totalorder %s123, %s125
      %p132 = scmp.eq.s32.totalorder %s31, 1
      %p133 = por %p131, %p132
      %p134 = scmp.ne.s32.totalorder %s125, %s126
      %p135 = scmp.eq.s32.totalorder %s31, 0
      %p136 = por %p134, %p135
      %p137 = scmp.ne.s32.totalorder %s125, %s126
      %p138 = scmp.eq.s32.totalorder %s32, 1
      %p139 = por %p137, %p138
      %p141 = scmp.ne.s32.totalorder %s126, %s140
      %p142 = scmp.eq.s32.totalorder %s32, 0
      %p143 = por %p141, %p142
      %s145 = sadd.s32 %s144, 1
      %p148 = scmp.eq.s32.totalorder %s26, 1
      %p149 = scmp.ne.s32.totalorder %s144, %s146
      %p150 = scmp.eq.s32.totalorder %s26, 0
      %p151 = por %p149, %p150
      %p152 = scmp.ne.s32.totalorder %s144, %s146
      %p153 = scmp.eq.s32.totalorder %s31, 1
      %p154 = por %p152, %p153
      %p155 = scmp.ne.s32.totalorder %s146, %s147
      %p156 = scmp.eq.s32.totalorder %s31, 0
      %p157 = por %p155, %p156
      %p158 = scmp.ne.s32.totalorder %s146, %s147
      %p159 = scmp.eq.s32.totalorder %s32, 1
      %p160 = por %p158, %p159
      %p162 = scmp.ne.s32.totalorder %s147, %s161
      %p163 = scmp.eq.s32.totalorder %s32, 0
      %p164 = por %p162, %p163
      %s166 = sadd.s32 %s165, 1
      %p169 = scmp.eq.s32.totalorder %s26, 1
      %p170 = scmp.ne.s32.totalorder %s165, %s167
      %p171 = scmp.eq.s32.totalorder %s26, 0
      %p172 = por %p170, %p171
      %p173 = scmp.ne.s32.totalorder %s165, %s167
      %p174 = scmp.eq.s32.totalorder %s31, 1
      %p175 = por %p173, %p174
      %p176 = scmp.ne.s32.totalorder %s167, %s168
      %p177 = scmp.eq.s32.totalorder %s31, 0
      %p178 = por %p176, %p177
      %p179 = scmp.ne.s32.totalorder %s167, %s168
      %p180 = scmp.eq.s32.totalorder %s32, 1
      %p181 = por %p179, %p180
      %p183 = scmp.ne.s32.totalorder %s168, %s182
      %p184 = scmp.eq.s32.totalorder %s32, 0
      %p185 = por %p183, %p184
      %s187 = sadd.s32 %s186, 1
      %p190 = scmp.eq.s32.totalorder %s26, 1
      %p191 = scmp.ne.s32.totalorder %s186, %s188
      %p192 = scmp.eq.s32.totalorder %s26, 0
      %p193 = por %p191, %p192
      %p194 = scmp.ne.s32.totalorder %s186, %s188
      %p195 = scmp.eq.s32.totalorder %s31, 1
      %p196 = por %p194, %p195
      %p197 = scmp.ne.s32.totalorder %s188, %s189
      %p198 = scmp.eq.s32.totalorder %s31, 0
      %p199 = por %p197, %p198
      %p200 = scmp.ne.s32.totalorder %s188, %s189
      %p201 = scmp.eq.s32.totalorder %s32, 1
      %p202 = por %p200, %p201
      %p204 = scmp.ne.s32.totalorder %s189, %s203
      %p205 = scmp.eq.s32.totalorder %s32, 0
      %p206 = por %p204, %p205
      %s208 = sadd.s32 %s207, 1
      %p211 = scmp.eq.s32.totalorder %s26, 1
      %p212 = scmp.ne.s32.totalorder %s207, %s209
      %p213 = scmp.eq.s32.totalorder %s26, 0
      %p214 = por %p212, %p213
      %p215 = scmp.ne.s32.totalorder %s207, %s209
      %p216 = scmp.eq.s32.totalorder %s31, 1
      %p217 = por %p215, %p216
      %p218 = scmp.ne.s32.totalorder %s209, %s210
      %p219 = scmp.eq.s32.totalorder %s31, 0
      %p220 = por %p218, %p219
      %p221 = scmp.ne.s32.totalorder %s209, %s210
      %p222 = scmp.eq.s32.totalorder %s32, 1
      %p223 = por %p221, %p222
      %p225 = scmp.ne.s32.totalorder %s210, %s224
      %p226 = scmp.eq.s32.totalorder %s32, 0
      %p227 = por %p225, %p226
      %s229 = sadd.s32 %s228, 1
      %p232 = scmp.eq.s32.totalorder %s26, 1
      %p233 = scmp.ne.s32.totalorder %s228, %s230
      %p234 = scmp.eq.s32.totalorder %s26, 0
      %p235 = por %p233, %p234
      %p236 = scmp.ne.s32.totalorder %s228, %s230
      %p237 = scmp.eq.s32.totalorder %s31, 1
      %p238 = por %p236, %p237
      %p239 = scmp.ne.s32.totalorder %s230, %s231
      %p240 = scmp.eq.s32.totalorder %s31, 0
      %p241 = por %p239, %p240
      %p242 = scmp.ne.s32.totalorder %s230, %s231
      %p243 = scmp.eq.s32.totalorder %s32, 1
      %p244 = por %p242, %p243
      %p246 = scmp.ne.s32.totalorder %s231, %s245
      %p247 = scmp.eq.s32.totalorder %s32, 0
      %p248 = por %p246, %p247
      %s250 = sadd.s32 %s249, 1
      %p253 = scmp.eq.s32.totalorder %s26, 1
      %p254 = scmp.ne.s32.totalorder %s249, %s251
      %p255 = scmp.eq.s32.totalorder %s26, 0
      %p256 = por %p254, %p255
      %p257 = scmp.ne.s32.totalorder %s249, %s251
      %p258 = scmp.eq.s32.totalorder %s31, 1
      %p259 = por %p257, %p258
      %p260 = scmp.ne.s32.totalorder %s251, %s252
      %p261 = scmp.eq.s32.totalorder %s31, 0
      %p262 = por %p260, %p261
      %p263 = scmp.ne.s32.totalorder %s251, %s252
      %p264 = scmp.eq.s32.totalorder %s32, 1
      %p265 = por %p263, %p264
      %p267 = scmp.ne.s32.totalorder %s252, %s266
      %p268 = scmp.eq.s32.totalorder %s32, 0
      %p269 = por %p267, %p268
      %s271 = sadd.s32 %s270, 1
      %p274 = scmp.eq.s32.totalorder %s26, 1
      %p275 = scmp.ne.s32.totalorder %s270, %s272
      %p276 = scmp.eq.s32.totalorder %s26, 0
      %p277 = por %p275, %p276
      %p278 = scmp.ne.s32.totalorder %s270, %s272
      %p279 = scmp.eq.s32.totalorder %s31, 1
      %p280 = por %p278, %p279
      %p281 = scmp.ne.s32.totalorder %s272, %s273
      %p282 = scmp.eq.s32.totalorder %s31, 0
      %p283 = por %p281, %p282
      %p284 = scmp.ne.s32.totalorder %s272, %s273
      %p285 = scmp.eq.s32.totalorder %s32, 1
      %p286 = por %p284, %p285
      %p288 = scmp.ne.s32.totalorder %s273, %s287
      %p289 = scmp.eq.s32.totalorder %s32, 0
      %p290 = por %p288, %p289
      %s292 = sadd.s32 %s291, 1
      %p295 = scmp.eq.s32.totalorder %s26, 1
      %p296 = scmp.ne.s32.totalorder %s291, %s293
      %p297 = scmp.eq.s32.totalorder %s26, 0
      %p298 = por %p296, %p297
      %p299 = scmp.ne.s32.totalorder %s291, %s293
      %p300 = scmp.eq.s32.totalorder %s31, 1
      %p301 = por %p299, %p300
      %p302 = scmp.ne.s32.totalorder %s293, %s294
      %p303 = scmp.eq.s32.totalorder %s31, 0
      %p304 = por %p302, %p303
      %p305 = scmp.ne.s32.totalorder %s293, %s294
      %p306 = scmp.eq.s32.totalorder %s32, 1
      %p307 = por %p305, %p306
      %p309 = scmp.ne.s32.totalorder %s294, %s308
      %p310 = scmp.eq.s32.totalorder %s32, 0
      %p311 = por %p309, %p310
      %s313 = sadd.s32 %s312, 1
      %p316 = scmp.eq.s32.totalorder %s26, 1
      %p317 = scmp.ne.s32.totalorder %s312, %s314
      %p318 = scmp.eq.s32.totalorder %s26, 0
      %p319 = por %p317, %p318
      %p320 = scmp.ne.s32.totalorder %s312, %s314
      %p321 = scmp.eq.s32.totalorder %s31, 1
      %p322 = por %p320, %p321
      %p323 = scmp.ne.s32.totalorder %s314, %s315
      %p324 = scmp.eq.s32.totalorder %s31, 0
      %p325 = por %p323, %p324
      %p326 = scmp.ne.s32.totalorder %s314, %s315
      %p327 = scmp.eq.s32.totalorder %s32, 1
      %p328 = por %p326, %p327
      %p330 = scmp.ne.s32.totalorder %s315, %s329
      %p331 = scmp.eq.s32.totalorder %s32, 0
      %p332 = por %p330, %p331
      %s333 = ssub.s32 %s26, %s33
      %p334 = scmp.eq.s32.totalorder %s333, 0
      %s336 = sadd.s32 %s335, 1
      %s337 = scalar_select %p334, %s335, %s336
      %p340 = pneg %p334
      %p341 = scmp.eq.s32.totalorder %s26, 1
      %p342 = por %p340, %p341
      %p343 = scmp.ne.s32.totalorder %s335, %s338
      %p344 = scmp.eq.s32.totalorder %s26, 0
      %p345 = por %p343, %p344
      %p346 = scmp.ne.s32.totalorder %s335, %s338
      %p347 = scmp.eq.s32.totalorder %s31, 1
      %p348 = por %p346, %p347
      %p349 = scmp.ne.s32.totalorder %s338, %s339
      %p350 = scmp.eq.s32.totalorder %s31, 0
      %p351 = por %p349, %p350
      %p352 = scmp.ne.s32.totalorder %s338, %s339
      %p353 = scmp.eq.s32.totalorder %s32, 1
      %p354 = por %p352, %p353
      %p356 = scmp.ne.s32.totalorder %s339, %s355
      %p357 = scmp.eq.s32.totalorder %s32, 0
      %p358 = por %p356, %p357
      %p359 = scmp.le.s32.totalorder 1, %s26
      %p360 = scmp.lt.s32.totalorder %s26, 3
      %p361 = pnand %p359, %p360
      %p362 = pneg %p361
      // Predicated region
      $region9: #{tpu_custom_call.1} parent=5 // pred_check
        _
      $region10: #{tpu_custom_call.1} parent=5 // pred_check_branch
        %364 = sbr.rel (%p361) target = $region12
      $region11: #{tpu_custom_call.1} parent=5 // pred_region
        %s365 = ssub.s32 %s26, 1
        // Predicated region
        $region13: #{tpu_custom_call.1} parent=11 // pred_check
          %p366 = pneg %p73
        $region14: #{tpu_custom_call.1} parent=11 // pred_check_branch
          %368 = sbr.rel (%p366) target = $region16
        $region15: #{tpu_custom_call.1} parent=11 // pred_region
          %s370 = ssub.s32 128, 128
          %371 = vsyncadd [#allocation4], %s370
          %s373 = sshll.u32 [#allocation3], 4
          %s374 = int_to_ptr.vmem [resolvable:$true] %s373
          %376 = dma.hbm_to_vmem [thread:$0]  %s1, 128, %s374, [#allocation4]
        $region16: #{tpu_custom_call.1} parent=11 // pred_fallthru
          _
        // Predicated region
        $region17: #{tpu_custom_call.1} parent=11 // pred_check
          %p377 = pneg %p94
        $region18: #{tpu_custom_call.1} parent=11 // pred_check_branch
          %379 = sbr.rel (%p377) target = $region20
        $region19: #{tpu_custom_call.1} parent=11 // pred_region
          %s381 = ssub.s32 128, 128
          %382 = vsyncadd [#allocation7], %s381
          %s384 = sshll.u32 [#allocation6], 4
          %s385 = int_to_ptr.vmem [resolvable:$true] %s384
          %387 = dma.hbm_to_vmem [thread:$0]  %s2, 128, %s385, [#allocation7]
        $region20: #{tpu_custom_call.1} parent=11 // pred_fallthru
          _
        // Predicated region
        $region21: #{tpu_custom_call.1} parent=11 // pred_check
          %p388 = pneg %p115
        $region22: #{tpu_custom_call.1} parent=11 // pred_check_branch
          %390 = sbr.rel (%p388) target = $region24
        $region23: #{tpu_custom_call.1} parent=11 // pred_region
          %s392 = ssub.s32 128, 128
          %393 = vsyncadd [#allocation7], %s392
          %s395 = sshll.u32 [#allocation8], 4
          %s396 = int_to_ptr.vmem [resolvable:$true] %s395
          %398 = dma.hbm_to_vmem [thread:$0]  %s3, 128, %s396, [#allocation7]
        $region24: #{tpu_custom_call.1} parent=11 // pred_fallthru
          _
        // Predicated region
        $region25: #{tpu_custom_call.1} parent=11 // pred_check
          %p399 = pneg %p136
        $region26: #{tpu_custom_call.1} parent=11 // pred_check_branch
          %401 = sbr.rel (%p399) target = $region28
        $region27: #{tpu_custom_call.1} parent=11 // pred_region
          _
        $region28: #{tpu_custom_call.1} parent=11 // pred_fallthru
          _
        // Predicated region
        $region29: #{tpu_custom_call.1} parent=11 // pred_check
          %p402 = pneg %p157
        $region30: #{tpu_custom_call.1} parent=11 // pred_check_branch
          %404 = sbr.rel (%p402) target = $region32
        $region31: #{tpu_custom_call.1} parent=11 // pred_region
          _
        $region32: #{tpu_custom_call.1} parent=11 // pred_fallthru
          _
        // Predicated region
        $region33: #{tpu_custom_call.1} parent=11 // pred_check
          %p405 = pneg %p178
        $region34: #{tpu_custom_call.1} parent=11 // pred_check_branch
          %407 = sbr.rel (%p405) target = $region36
        $region35: #{tpu_custom_call.1} parent=11 // pred_region
          %s409 = ssub.s32 256, 256
          %410 = vsyncadd [#allocation10], %s409
          %s411 = sshll.u32 [#allocation9], 4
          %s412 = int_to_ptr.vmem [resolvable:$true] %s411
          %417 = dma.hbm_to_vmem [thread:$0]  %s6, 256, %s412, [#allocation10], 64, 64, 4
        $region36: #{tpu_custom_call.1} parent=11 // pred_fallthru
          _
        // Predicated region
        $region37: #{tpu_custom_call.1} parent=11 // pred_check
          %p418 = pneg %p199
        $region38: #{tpu_custom_call.1} parent=11 // pred_check_branch
          %420 = sbr.rel (%p418) target = $region40
        $region39: #{tpu_custom_call.1} parent=11 // pred_region
          _
        $region40: #{tpu_custom_call.1} parent=11 // pred_fallthru
          _
        // Predicated region
        $region41: #{tpu_custom_call.1} parent=11 // pred_check
          %p421 = pneg %p220
        $region42: #{tpu_custom_call.1} parent=11 // pred_check_branch
          %423 = sbr.rel (%p421) target = $region44
        $region43: #{tpu_custom_call.1} parent=11 // pred_region
          _
        $region44: #{tpu_custom_call.1} parent=11 // pred_fallthru
          _
        // Predicated region
        $region45: #{tpu_custom_call.1} parent=11 // pred_check
          %p424 = pneg %p241
        $region46: #{tpu_custom_call.1} parent=11 // pred_check_branch
          %426 = sbr.rel (%p424) target = $region48
        $region47: #{tpu_custom_call.1} parent=11 // pred_region
          _
        $region48: #{tpu_custom_call.1} parent=11 // pred_fallthru
          _
        // Predicated region
        $region49: #{tpu_custom_call.1} parent=11 // pred_check
          %p427 = pneg %p262
        $region50: #{tpu_custom_call.1} parent=11 // pred_check_branch
          %429 = sbr.rel (%p427) target = $region52
        $region51: #{tpu_custom_call.1} parent=11 // pred_region
          _
        $region52: #{tpu_custom_call.1} parent=11 // pred_fallthru
          _
        // Predicated region
        $region53: #{tpu_custom_call.1} parent=11 // pred_check
          %p430 = pneg %p283
        $region54: #{tpu_custom_call.1} parent=11 // pred_check_branch
          %432 = sbr.rel (%p430) target = $region56
        $region55: #{tpu_custom_call.1} parent=11 // pred_region
          _
        $region56: #{tpu_custom_call.1} parent=11 // pred_fallthru
          _
        // Predicated region
        $region57: #{tpu_custom_call.1} parent=11 // pred_check
          %p433 = pneg %p304
        $region58: #{tpu_custom_call.1} parent=11 // pred_check_branch
          %435 = sbr.rel (%p433) target = $region60
        $region59: #{tpu_custom_call.1} parent=11 // pred_region
          _
        $region60: #{tpu_custom_call.1} parent=11 // pred_fallthru
          _
        // Predicated region
        $region61: #{tpu_custom_call.1} parent=11 // pred_check
          %p436 = pneg %p325
        $region62: #{tpu_custom_call.1} parent=11 // pred_check_branch
          %438 = sbr.rel (%p436) target = $region64
        $region63: #{tpu_custom_call.1} parent=11 // pred_region
          _
        $region64: #{tpu_custom_call.1} parent=11 // pred_fallthru
          _
      $region12: #{tpu_custom_call.1} parent=5 // pred_fallthru
        _
      %p439 = scmp.lt.s32.totalorder %s26, 2
      // Predicated region
      $region65: #{tpu_custom_call.1} parent=5 // pred_check
        %p440 = pneg %p439
      $region66: #{tpu_custom_call.1} parent=5 // pred_check_branch
        %442 = sbr.rel (%p440) target = $region68
      $region67: #{tpu_custom_call.1} parent=5 // pred_region
        // Predicated region
        $region69: #{tpu_custom_call.1} parent=67 // pred_check
          %p443 = pneg %p46
        $region70: #{tpu_custom_call.1} parent=67 // pred_check_branch
          %445 = sbr.rel (%p443) target = $region72
        $region71: #{tpu_custom_call.1} parent=67 // pred_region
          %p446 = scmp.lt.s32.totalorder %s26, 1
          %s447 = scalar_select %p446, %s26, 1
          %s448 = smul.addr %s447, 8
          %s449 = scalar_lea.vmem %s0, %s448
        $region72: #{tpu_custom_call.1} parent=67 // pred_fallthru
          _
      $region68: #{tpu_custom_call.1} parent=5 // pred_fallthru
        _
      %p450 = scmp.le.s32.totalorder 1, %s26
      %p451 = scmp.lt.s32.totalorder %s26, 3
      %p452 = pnand %p450, %p451
      %p453 = pneg %p452
      // Predicated region
      $region73: #{tpu_custom_call.1} parent=5 // pred_check
        _
      $region74: #{tpu_custom_call.1} parent=5 // pred_check_branch
        %455 = sbr.rel (%p452) target = $region76
      $region75: #{tpu_custom_call.1} parent=5 // pred_region
        %s456 = ssub.s32 %s26, 1
        // Predicated region
        $region77: #{tpu_custom_call.1} parent=75 // pred_check
          %p457 = pneg %p73
        $region78: #{tpu_custom_call.1} parent=75 // pred_check_branch
          %459 = sbr.rel (%p457) target = $region80
        $region79: #{tpu_custom_call.1} parent=75 // pred_region
          %460 = dma.done [#allocation4], 128
        $region80: #{tpu_custom_call.1} parent=75 // pred_fallthru
          _
        // Predicated region
        $region81: #{tpu_custom_call.1} parent=75 // pred_check
          %p461 = pneg %p94
        $region82: #{tpu_custom_call.1} parent=75 // pred_check_branch
          %463 = sbr.rel (%p461) target = $region84
        $region83: #{tpu_custom_call.1} parent=75 // pred_region
          %464 = dma.done [#allocation7], 128
        $region84: #{tpu_custom_call.1} parent=75 // pred_fallthru
          _
        // Predicated region
        $region85: #{tpu_custom_call.1} parent=75 // pred_check
          %p465 = pneg %p115
        $region86: #{tpu_custom_call.1} parent=75 // pred_check_branch
          %467 = sbr.rel (%p465) target = $region88
        $region87: #{tpu_custom_call.1} parent=75 // pred_region
          %468 = dma.done [#allocation7], 128
        $region88: #{tpu_custom_call.1} parent=75 // pred_fallthru
          _
        // Predicated region
        $region89: #{tpu_custom_call.1} parent=75 // pred_check
          %p469 = pneg %p178
        $region90: #{tpu_custom_call.1} parent=75 // pred_check_branch
          %471 = sbr.rel (%p469) target = $region92
        $region91: #{tpu_custom_call.1} parent=75 // pred_region
          %472 = dma.done [#allocation10], 256
        $region92: #{tpu_custom_call.1} parent=75 // pred_fallthru
          _
        %p473 = scmp.lt.s32.totalorder %s31, 1
        %s474 = scalar_select %p473, %s31, 1
        %s475 = smul.addr %s474, 8
        %s476 = scalar_lea.vmem %s0, %s475
        %p477 = pneg %p52
        %p478 = pneg %p49
        %p479 = pneg %p73
        %p480 = pneg %p70
        %p481 = pneg %p94
        %p482 = pneg %p91
        %p483 = pneg %p115
        %p484 = pneg %p112
        %p485 = pneg %p136
        %p486 = pneg %p133
        %p487 = pneg %p157
        %p488 = pneg %p154
        %p489 = pneg %p178
        %p490 = pneg %p175
        %p491 = pneg %p199
        %p492 = pneg %p196
        %p493 = pneg %p220
        %p494 = pneg %p217
        %p495 = pneg %p241
        %p496 = pneg %p238
        %p497 = pneg %p262
        %p498 = pneg %p259
        %p499 = pneg %p283
        %p500 = pneg %p280
        %p501 = pneg %p304
        %p502 = pneg %p301
        %p503 = pneg %p325
        %p504 = pneg %p322
        %p505 = pneg %p351
        %p506 = pneg %p348
        %s507 = sand.u32 %s338, 1
        %s508 = scalar_lea.sflag [#allocation5], %s507
        %s509 = sand.u32 %s338, 1
        %s510 = smul.addr %s509, 8
        %s511 = scalar_lea.vmem [#allocation11], %s510
        %p512 = scmp.lt.s32.totalorder %s31, 1
        %s513 = scalar_select %p512, %s31, 1
        %s514 = smul.addr %s513, 8
        %s515 = scalar_lea.vmem %s0, %s514
        %v517 = vld [vmem:[%s515] sm:$0xff]
        %v518 = vld [vmem:[%s10] sm:$0x1]
        %v519 = vld [vmem:[%s11] sm:$0x1]
        %vm520 = vcmask 261120
        %v521 = vsel %vm520, %v517, 0.0
        %522 = vadd.xlane.f32.xlu0 %v521
        %v523 = vpop.xlane.xlu0 %522
        %v524 = vrcp.pop 32.0
        %v525 = vmul.f32 %v523, %v524
        %v526 = vsub.f32 %v517, %v525
        %v527 = vmul.f32 %v526, %v526
        %v528 = vsel %vm520, %v527, 0.0
        %529 = vadd.xlane.f32.xlu0 %v528
        %v530 = vpop.xlane.xlu0 %529
        %v531 = vmul.f32 %v530, %v524
        %v532 = vadd.f32 %v531, 1e-05
        %v533 = vrsqrt.pop %v532
        %v534 = vmul.f32 %v526, %v533
        %v536 = vlaneseq
        %v537 = vshrl.u32 %v536, 7
        %v538 = vsub.s32 0, %v537
        %v539 = vrot.slane %v518, %v538
        %v541 = vmul.f32 %v534, %v539
        %v543 = vlaneseq
        %v544 = vshrl.u32 %v543, 7
        %v545 = vsub.s32 0, %v544
        %v546 = vrot.slane %v519, %v545
        %v548 = vadd.f32 %v541, %v546
        %v549 = vpack.c.bf16 %v548, %v548
        %v550 = vld [vmem:[%s4] sm:$0xf]
        %v551 = vld [vmem:[%s4 + $0x4] sm:$0xf]
        %v552 = vld [vmem:[%s4 + $0x8] sm:$0xf]
        %v553 = vld [vmem:[%s4 + $0xc] sm:$0xf]
        %v558 = vunpack.c.l.b16 %v550
        %v559 = vunpack.c.l.b16 %v551
        %v560 = vunpack.c.l.b16 %v552
        %v561 = vunpack.c.l.b16 %v553
        %v562 = vpack.c.b16 %v559, %v558
        %v563 = vpack.c.b16 %v561, %v560
        %v567 = vsel %vm520, %v549, 0
        %569 = vmatprep.subr.bf16.mxu0 0
        %570 = vmatpush1.bf16.msra.mxu0 0
        %571 = vmatprep.subr.bf16.mxu0 0
        %572 = vmatpush1.bf16.msra.mxu0 0
        %573 = vmatprep.subr.bf16.mxu0 0
        %574 = vmatpush1.bf16.msra.mxu0 0
        %575 = vmatprep.subr.bf16.mxu0 0
        %576 = vmatpush1.bf16.msra.mxu0 0
        %577 = vmatprep.subr.bf16.mxu0 0
        %578 = vmatpush1.bf16.msra.mxu0 0
        %579 = vmatprep.subr.bf16.mxu0 0
        %580 = vmatpush1.bf16.msra.mxu0 0
        %581 = vmatprep.subr.bf16.mxu0 0
        %582 = vmatpush1.bf16.msra.mxu0 %v563
        %583 = vmatprep.subr.bf16.mxu0 0
        %584 = vmatpush1.bf16.msra.mxu0 %v562
        %585 = vmatprep.subr.bf16.mxu0 0
        %586 = vmatpush2.bf16.msra.mxu0 0
        %587 = vmatprep.subr.bf16.mxu0 0
        %588 = vmatpush2.bf16.msra.mxu0 0
        %589 = vmatprep.subr.bf16.mxu0 0
        %590 = vmatpush2.bf16.msra.mxu0 0
        %591 = vmatprep.subr.bf16.mxu0 0
        %592 = vmatpush2.bf16.msra.mxu0 0
        %593 = vmatprep.subr.bf16.mxu0 0
        %594 = vmatpush2.bf16.msra.mxu0 0
        %595 = vmatprep.subr.bf16.mxu0 0
        %596 = vmatpush2.bf16.msra.mxu0 0
        %597 = vmatprep.subr.bf16.mxu0 0
        %598 = vmatpush2.bf16.msra.mxu0 0
        %599 = vmatprep.subr.bf16.mxu0 0
        %600 = vmatpush2.bf16.msra.mxu0 0
        %601 = vmatprep.mubr.bf16.mxu0 0
        %602 = vmatmul.mubr.bf16.gmra.mxu0 %v567
        %v603 = vpop.f32.mrf.mxu0
        %v604 = vadd.f32 0.0, %v603
        %v605 = vpop.f32.mrf.mxu0
        %v606 = vpop.f32.mrf.mxu0
        %v607 = vpop.f32.mrf.mxu0
        %608 = vdwg.mxu0
        %610 = vrot.lane.b32.xlu0 %v604, 120
        %v611 = vpop.permute.xlu0 %610
        %613 = vrot.lane.b32.xlu0 %v604, 112
        %v614 = vpop.permute.xlu0 %613
        %616 = vrot.lane.b32.xlu0 %v604, 104
        %v617 = vpop.permute.xlu0 %616
        %v619 = vpack.c.bf16 %v604, %v604
        %v620 = vpack.c.bf16 %v611, %v611
        %v621 = vpack.c.bf16 %v614, %v614
        %v622 = vpack.c.bf16 %v617, %v617
        %v623 = vld [vmem:[#allocation3] sm:$0xff]
        %v624 = vld [vmem:[#allocation6] sm:$0xff]
        %v625 = vld [vmem:[#allocation8] sm:$0xff]
        %626 = vrot.lane.b32.xlu0 %v604, 127
        %v627 = vpop.permute.xlu0 %626
        %628 = vrot.lane.b32.xlu0 %v611, 127
        %v629 = vpop.permute.xlu0 %628
        %630 = vrot.lane.b32.xlu0 %v614, 127
        %v631 = vpop.permute.xlu0 %630
        %632 = vrot.lane.b32.xlu0 %v617, 127
        %v633 = vpop.permute.xlu0 %632
        %638 = vrot.lane.b32.xlu0 %v604, 7
        %v639 = vpop.permute.xlu0 %638
        %640 = vrot.lane.b32.xlu0 %v611, 7
        %v641 = vpop.permute.xlu0 %640
        %642 = vrot.lane.b32.xlu0 %v614, 7
        %v643 = vpop.permute.xlu0 %642
        %644 = vrot.lane.b32.xlu0 %v617, 7
        %v645 = vpop.permute.xlu0 %644
        %vm650 = vcmask 56320
        %v651 = vsel %vm650, %v627, %v639
        %v652 = vsel %vm650, %v629, %v641
        %v653 = vsel %vm650, %v631, %v643
        %v654 = vsel %vm650, %v633, %v645
        %655 = vrot.lane.b32.xlu0 %v604, 121
        %v656 = vpop.permute.xlu0 %655
        %657 = vrot.lane.b32.xlu0 %v611, 121
        %v658 = vpop.permute.xlu0 %657
        %659 = vrot.lane.b32.xlu0 %v614, 121
        %v660 = vpop.permute.xlu0 %659
        %661 = vrot.lane.b32.xlu0 %v617, 121
        %v662 = vpop.permute.xlu0 %661
        %667 = vrot.lane.b32.xlu0 %v604, 1
        %v668 = vpop.permute.xlu0 %667
        %669 = vrot.lane.b32.xlu0 %v611, 1
        %v670 = vpop.permute.xlu0 %669
        %671 = vrot.lane.b32.xlu0 %v614, 1
        %v672 = vpop.permute.xlu0 %671
        %673 = vrot.lane.b32.xlu0 %v617, 1
        %v674 = vpop.permute.xlu0 %673
        %vm679 = vcmask 7168
        %v680 = vsel %vm679, %v656, %v668
        %v681 = vsel %vm679, %v658, %v670
        %v682 = vsel %vm679, %v660, %v672
        %v683 = vsel %vm679, %v662, %v674
        %v684 = vmul.f32 %v604, %v623
        %v685 = vmul.f32 %v611, %v623
        %v686 = vmul.f32 %v614, %v623
        %v687 = vmul.f32 %v617, %v623
        %v688 = vmul.f32 %v651, %v624
        %v689 = vmul.f32 %v652, %v624
        %v690 = vmul.f32 %v653, %v624
        %v691 = vmul.f32 %v654, %v624
        %v692 = vadd.f32 %v684, %v688
        %v693 = vadd.f32 %v685, %v689
        %v694 = vadd.f32 %v686, %v690
        %v695 = vadd.f32 %v687, %v691
        %v696 = vmul.f32 %v680, %v625
        %v697 = vmul.f32 %v681, %v625
        %v698 = vmul.f32 %v682, %v625
        %v699 = vmul.f32 %v683, %v625
        %v700 = vadd.f32 %v692, %v696
        %v701 = vadd.f32 %v693, %v697
        %v702 = vadd.f32 %v694, %v698
        %v703 = vadd.f32 %v695, %v699
        %v704 = vpack.c.bf16 %v700, %v700
        %v705 = vpack.c.bf16 %v701, %v701
        %v706 = vpack.c.bf16 %v702, %v702
        %v707 = vpack.c.bf16 %v703, %v703
        %708 = vrot.lane.b32.xlu0 %v604, 95
        %v709 = vpop.permute.xlu0 %708
        %710 = vrot.lane.b32.xlu0 %v611, 95
        %v711 = vpop.permute.xlu0 %710
        %712 = vrot.lane.b32.xlu0 %v614, 95
        %v713 = vpop.permute.xlu0 %712
        %714 = vrot.lane.b32.xlu0 %v617, 95
        %v715 = vpop.permute.xlu0 %714
        %720 = vrot.lane.b32.xlu0 %v604, 103
        %v721 = vpop.permute.xlu0 %720
        %722 = vrot.lane.b32.xlu0 %v611, 103
        %v723 = vpop.permute.xlu0 %722
        %724 = vrot.lane.b32.xlu0 %v614, 103
        %v725 = vpop.permute.xlu0 %724
        %726 = vrot.lane.b32.xlu0 %v617, 103
        %v727 = vpop.permute.xlu0 %726
        %v732 = vsel %vm650, %v709, %v721
        %v733 = vsel %vm650, %v711, %v723
        %v734 = vsel %vm650, %v713, %v725
        %v735 = vsel %vm650, %v715, %v727
        %736 = vrot.lane.b32.xlu0 %v604, 89
        %v737 = vpop.permute.xlu0 %736
        %738 = vrot.lane.b32.xlu0 %v611, 89
        %v739 = vpop.permute.xlu0 %738
        %740 = vrot.lane.b32.xlu0 %v614, 89
        %v741 = vpop.permute.xlu0 %740
        %742 = vrot.lane.b32.xlu0 %v617, 89
        %v743 = vpop.permute.xlu0 %742
        %748 = vrot.lane.b32.xlu0 %v604, 97
        %v749 = vpop.permute.xlu0 %748
        %750 = vrot.lane.b32.xlu0 %v611, 97
        %v751 = vpop.permute.xlu0 %750
        %752 = vrot.lane.b32.xlu0 %v614, 97
        %v753 = vpop.permute.xlu0 %752
        %754 = vrot.lane.b32.xlu0 %v617, 97
        %v755 = vpop.permute.xlu0 %754
        %v760 = vsel %vm679, %v737, %v749
        %v761 = vsel %vm679, %v739, %v751
        %v762 = vsel %vm679, %v741, %v753
        %v763 = vsel %vm679, %v743, %v755
        %765 = vrot.lane.b32.xlu0 %v623, 32
        %v766 = vpop.permute.xlu0 %765
        %v768 = vmul.f32 %v604, %v766
        %v769 = vmul.f32 %v611, %v766
        %v770 = vmul.f32 %v614, %v766
        %v771 = vmul.f32 %v617, %v766
        %v772 = vmul.f32 %v732, %v624
        %v773 = vmul.f32 %v733, %v624
        %v774 = vmul.f32 %v734, %v624
        %v775 = vmul.f32 %v735, %v624
        %780 = vrot.lane.b32.xlu0 %v772, 32
        %v781 = vpop.permute.xlu0 %780
        %782 = vrot.lane.b32.xlu0 %v773, 32
        %v783 = vpop.permute.xlu0 %782
        %784 = vrot.lane.b32.xlu0 %v774, 32
        %v785 = vpop.permute.xlu0 %784
        %786 = vrot.lane.b32.xlu0 %v775, 32
        %v787 = vpop.permute.xlu0 %786
        %v792 = vadd.f32 %v768, %v781
        %v793 = vadd.f32 %v769, %v783
        %v794 = vadd.f32 %v770, %v785
        %v795 = vadd.f32 %v771, %v787
        %v796 = vmul.f32 %v760, %v625
        %v797 = vmul.f32 %v761, %v625
        %v798 = vmul.f32 %v762, %v625
        %v799 = vmul.f32 %v763, %v625
        %804 = vrot.lane.b32.xlu0 %v796, 32
        %v805 = vpop.permute.xlu0 %804
        %806 = vrot.lane.b32.xlu0 %v797, 32
        %v807 = vpop.permute.xlu0 %806
        %808 = vrot.lane.b32.xlu0 %v798, 32
        %v809 = vpop.permute.xlu0 %808
        %810 = vrot.lane.b32.xlu0 %v799, 32
        %v811 = vpop.permute.xlu0 %810
        %v816 = vadd.f32 %v792, %v805
        %v817 = vadd.f32 %v793, %v807
        %v818 = vadd.f32 %v794, %v809
        %v819 = vadd.f32 %v795, %v811
        %v820 = vpack.c.bf16 %v816, %v816
        %v821 = vpack.c.bf16 %v817, %v817
        %v822 = vpack.c.bf16 %v818, %v818
        %v823 = vpack.c.bf16 %v819, %v819
        %825 = vrot.lane.b32.xlu0 %v820, 96
        %v826 = vpop.permute.xlu0 %825
        %vm827 = vcmask 64512
        %v829 = vsel %vm827, %v704, 0
        %v832 = vsel %vm827, %v826, 0
        %834 = vmatprep.subr.bf16.mxu0 0
        %835 = vmatpush1.bf16.xpose.msra.mxu0 0
        %836 = vmatprep.subr.bf16.mxu0 0
        %837 = vmatpush1.bf16.xpose.msra.mxu0 0
        %838 = vmatprep.subr.bf16.mxu0 0
        %839 = vmatpush1.bf16.xpose.msra.mxu0 0
        %840 = vmatprep.subr.bf16.mxu0 0
        %841 = vmatpush1.bf16.xpose.msra.mxu0 0
        %842 = vmatprep.subr.bf16.mxu0 0
        %843 = vmatpush1.bf16.xpose.msra.mxu0 0
        %844 = vmatprep.subr.bf16.mxu0 0
        %845 = vmatpush1.bf16.xpose.msra.mxu0 0
        %846 = vmatprep.subr.bf16.mxu0 0
        %847 = vmatpush1.bf16.xpose.msra.mxu0 0
        %848 = vmatprep.subr.bf16.mxu0 0
        %849 = vmatpush1.bf16.xpose.msra.mxu0 %v832
        %850 = vmatprep.subr.bf16.mxu0 0
        %851 = vmatpush2.bf16.xpose.msra.mxu0 0
        %852 = vmatprep.subr.bf16.mxu0 0
        %853 = vmatpush2.bf16.xpose.msra.mxu0 0
        %854 = vmatprep.subr.bf16.mxu0 0
        %855 = vmatpush2.bf16.xpose.msra.mxu0 0
        %856 = vmatprep.subr.bf16.mxu0 0
        %857 = vmatpush2.bf16.xpose.msra.mxu0 0
        %858 = vmatprep.subr.bf16.mxu0 0
        %859 = vmatpush2.bf16.xpose.msra.mxu0 0
        %860 = vmatprep.subr.bf16.mxu0 0
        %861 = vmatpush2.bf16.xpose.msra.mxu0 0
        %862 = vmatprep.subr.bf16.mxu0 0
        %863 = vmatpush2.bf16.xpose.msra.mxu0 0
        %864 = vmatprep.subr.bf16.mxu0 0
        %865 = vmatpush2.bf16.xpose.msra.mxu0 0
        %866 = vmatprep.mubr.bf16.mxu0 0
        %867 = vmatmul.mubr.bf16.gmra.mxu0 %v829
        %v868 = vpop.f32.mrf.mxu0
        %v869 = vadd.f32 0.0, %v868
        %v870 = vpop.f32.mrf.mxu0
        %v871 = vpop.f32.mrf.mxu0
        %v872 = vpop.f32.mrf.mxu0
        %873 = vdwg.mxu0
        %875 = vrot.lane.b32.xlu0 %v821, 96
        %v876 = vpop.permute.xlu0 %875
        %v878 = vsel %vm827, %v705, 0
        %v881 = vsel %vm827, %v876, 0
        %883 = vmatprep.subr.bf16.mxu0 0
        %884 = vmatpush1.bf16.xpose.msra.mxu0 0
        %885 = vmatprep.subr.bf16.mxu0 0
        %886 = vmatpush1.bf16.xpose.msra.mxu0 0
        %887 = vmatprep.subr.bf16.mxu0 0
        %888 = vmatpush1.bf16.xpose.msra.mxu0 0
        %889 = vmatprep.subr.bf16.mxu0 0
        %890 = vmatpush1.bf16.xpose.msra.mxu0 0
        %891 = vmatprep.subr.bf16.mxu0 0
        %892 = vmatpush1.bf16.xpose.msra.mxu0 0
        %893 = vmatprep.subr.bf16.mxu0 0
        %894 = vmatpush1.bf16.xpose.msra.mxu0 0
        %895 = vmatprep.subr.bf16.mxu0 0
        %896 = vmatpush1.bf16.xpose.msra.mxu0 0
        %897 = vmatprep.subr.bf16.mxu0 0
        %898 = vmatpush1.bf16.xpose.msra.mxu0 %v881
        %899 = vmatprep.subr.bf16.mxu0 0
        %900 = vmatpush2.bf16.xpose.msra.mxu0 0
        %901 = vmatprep.subr.bf16.mxu0 0
        %902 = vmatpush2.bf16.xpose.msra.mxu0 0
        %903 = vmatprep.subr.bf16.mxu0 0
        %904 = vmatpush2.bf16.xpose.msra.mxu0 0
        %905 = vmatprep.subr.bf16.mxu0 0
        %906 = vmatpush2.bf16.xpose.msra.mxu0 0
        %907 = vmatprep.subr.bf16.mxu0 0
        %908 = vmatpush2.bf16.xpose.msra.mxu0 0
        %909 = vmatprep.subr.bf16.mxu0 0
        %910 = vmatpush2.bf16.xpose.msra.mxu0 0
        %911 = vmatprep.subr.bf16.mxu0 0
        %912 = vmatpush2.bf16.xpose.msra.mxu0 0
        %913 = vmatprep.subr.bf16.mxu0 0
        %914 = vmatpush2.bf16.xpose.msra.mxu0 0
        %915 = vmatprep.mubr.bf16.mxu0 0
        %916 = vmatmul.mubr.bf16.gmra.mxu0 %v878
        %v917 = vpop.f32.mrf.mxu0
        %v918 = vadd.f32 0.0, %v917
        %v919 = vpop.f32.mrf.mxu0
        %v920 = vpop.f32.mrf.mxu0
        %v921 = vpop.f32.mrf.mxu0
        %922 = vdwg.mxu0
        %924 = vrot.lane.b32.xlu0 %v822, 96
        %v925 = vpop.permute.xlu0 %924
        %v927 = vsel %vm827, %v706, 0
        %v930 = vsel %vm827, %v925, 0
        %932 = vmatprep.subr.bf16.mxu0 0
        %933 = vmatpush1.bf16.xpose.msra.mxu0 0
        %934 = vmatprep.subr.bf16.mxu0 0
        %935 = vmatpush1.bf16.xpose.msra.mxu0 0
        %936 = vmatprep.subr.bf16.mxu0 0
        %937 = vmatpush1.bf16.xpose.msra.mxu0 0
        %938 = vmatprep.subr.bf16.mxu0 0
        %939 = vmatpush1.bf16.xpose.msra.mxu0 0
        %940 = vmatprep.subr.bf16.mxu0 0
        %941 = vmatpush1.bf16.xpose.msra.mxu0 0
        %942 = vmatprep.subr.bf16.mxu0 0
        %943 = vmatpush1.bf16.xpose.msra.mxu0 0
        %944 = vmatprep.subr.bf16.mxu0 0
        %945 = vmatpush1.bf16.xpose.msra.mxu0 0
        %946 = vmatprep.subr.bf16.mxu0 0
        %947 = vmatpush1.bf16.xpose.msra.mxu0 %v930
        %948 = vmatprep.subr.bf16.mxu0 0
        %949 = vmatpush2.bf16.xpose.msra.mxu0 0
        %950 = vmatprep.subr.bf16.mxu0 0
        %951 = vmatpush2.bf16.xpose.msra.mxu0 0
        %952 = vmatprep.subr.bf16.mxu0 0
        %953 = vmatpush2.bf16.xpose.msra.mxu0 0
        %954 = vmatprep.subr.bf16.mxu0 0
        %955 = vmatpush2.bf16.xpose.msra.mxu0 0
        %956 = vmatprep.subr.bf16.mxu0 0
        %957 = vmatpush2.bf16.xpose.msra.mxu0 0
        %958 = vmatprep.subr.bf16.mxu0 0
        %959 = vmatpush2.bf16.xpose.msra.mxu0 0
        %960 = vmatprep.subr.bf16.mxu0 0
        %961 = vmatpush2.bf16.xpose.msra.mxu0 0
        %962 = vmatprep.subr.bf16.mxu0 0
        %963 = vmatpush2.bf16.xpose.msra.mxu0 0
        %964 = vmatprep.mubr.bf16.mxu0 0
        %965 = vmatmul.mubr.bf16.gmra.mxu0 %v927
        %v966 = vpop.f32.mrf.mxu0
        %v967 = vadd.f32 0.0, %v966
        %v968 = vpop.f32.mrf.mxu0
        %v969 = vpop.f32.mrf.mxu0
        %v970 = vpop.f32.mrf.mxu0
        %971 = vdwg.mxu0
        %973 = vrot.lane.b32.xlu0 %v823, 96
        %v974 = vpop.permute.xlu0 %973
        %v976 = vsel %vm827, %v707, 0
        %v979 = vsel %vm827, %v974, 0
        %981 = vmatprep.subr.bf16.mxu0 0
        %982 = vmatpush1.bf16.xpose.msra.mxu0 0
        %983 = vmatprep.subr.bf16.mxu0 0
        %984 = vmatpush1.bf16.xpose.msra.mxu0 0
        %985 = vmatprep.subr.bf16.mxu0 0
        %986 = vmatpush1.bf16.xpose.msra.mxu0 0
        %987 = vmatprep.subr.bf16.mxu0 0
        %988 = vmatpush1.bf16.xpose.msra.mxu0 0
        %989 = vmatprep.subr.bf16.mxu0 0
        %990 = vmatpush1.bf16.xpose.msra.mxu0 0
        %991 = vmatprep.subr.bf16.mxu0 0
        %992 = vmatpush1.bf16.xpose.msra.mxu0 0
        %993 = vmatprep.subr.bf16.mxu0 0
        %994 = vmatpush1.bf16.xpose.msra.mxu0 0
        %995 = vmatprep.subr.bf16.mxu0 0
        %996 = vmatpush1.bf16.xpose.msra.mxu0 %v979
        %997 = vmatprep.subr.bf16.mxu0 0
        %998 = vmatpush2.bf16.xpose.msra.mxu0 0
        %999 = vmatprep.subr.bf16.mxu0 0
        %1000 = vmatpush2.bf16.xpose.msra.mxu0 0
        %1001 = vmatprep.subr.bf16.mxu0 0
        %1002 = vmatpush2.bf16.xpose.msra.mxu0 0
        %1003 = vmatprep.subr.bf16.mxu0 0
        %1004 = vmatpush2.bf16.xpose.msra.mxu0 0
        %1005 = vmatprep.subr.bf16.mxu0 0
        %1006 = vmatpush2.bf16.xpose.msra.mxu0 0
        %1007 = vmatprep.subr.bf16.mxu0 0
        %1008 = vmatpush2.bf16.xpose.msra.mxu0 0
        %1009 = vmatprep.subr.bf16.mxu0 0
        %1010 = vmatpush2.bf16.xpose.msra.mxu0 0
        %1011 = vmatprep.subr.bf16.mxu0 0
        %1012 = vmatpush2.bf16.xpose.msra.mxu0 0
        %1013 = vmatprep.mubr.bf16.mxu0 0
        %1014 = vmatmul.mubr.bf16.gmra.mxu0 %v976
        %v1015 = vpop.f32.mrf.mxu0
        %v1016 = vadd.f32 0.0, %v1015
        %v1017 = vpop.f32.mrf.mxu0
        %v1018 = vpop.f32.mrf.mxu0
        %v1019 = vpop.f32.mrf.mxu0
        %1020 = vdwg.mxu0
        %v1021 = vmul.f32 %v869, 0.35355338
        %v1022 = vmul.f32 %v918, 0.35355338
        %v1023 = vmul.f32 %v967, 0.35355338
        %v1024 = vmul.f32 %v1016, 0.35355338
        %v1025 = vlaneseq
        %v1026 = vshrl.u32 %v1025, 7
        %v1027 = vlaneseq
        %v1028 = vand.u32 %v1027, 127
        %vm1029 = vcmp.ge.s32.totalorder %v1026, %v1028
        %v1030 = vsel %vm1029, %v1021, -1e+30
        %v1031 = vsel %vm1029, %v1022, -1e+30
        %v1032 = vsel %vm1029, %v1023, -1e+30
        %v1033 = vsel %vm1029, %v1024, -1e+30
        %v1034 = vsel %vm827, %v1030, -inf
        %1035 = vmax.xlane.f32.xlu0 %v1034
        %v1036 = vpop.xlane.xlu0 %1035
        %v1037 = vsel %vm827, %v1031, -inf
        %1038 = vmax.xlane.f32.xlu0 %v1037
        %v1039 = vpop.xlane.xlu0 %1038
        %v1040 = vsel %vm827, %v1032, -inf
        %1041 = vmax.xlane.f32.xlu0 %v1040
        %v1042 = vpop.xlane.xlu0 %1041
        %v1043 = vsel %vm827, %v1033, -inf
        %1044 = vmax.xlane.f32.xlu0 %v1043
        %v1045 = vpop.xlane.xlu0 %1044
        %v1046 = vsub.f32 %v1030, %v1036
        %v1047 = vsub.f32 %v1031, %v1039
        %v1048 = vsub.f32 %v1032, %v1042
        %v1049 = vsub.f32 %v1033, %v1045
        %v1050 = vmul.f32 %v1046, 1.442695
        %v1051 = vpow.pop %v1050
        %v1052 = vmul.f32 %v1047, 1.442695
        %v1053 = vpow.pop %v1052
        %v1054 = vmul.f32 %v1048, 1.442695
        %v1055 = vpow.pop %v1054
        %v1056 = vmul.f32 %v1049, 1.442695
        %v1057 = vpow.pop %v1056
        %v1058 = vsel %vm827, %v1051, 0.0
        %1059 = vadd.xlane.f32.xlu0 %v1058
        %v1060 = vpop.xlane.xlu0 %1059
        %v1061 = vsel %vm827, %v1053, 0.0
        %1062 = vadd.xlane.f32.xlu0 %v1061
        %v1063 = vpop.xlane.xlu0 %1062
        %v1064 = vsel %vm827, %v1055, 0.0
        %1065 = vadd.xlane.f32.xlu0 %v1064
        %v1066 = vpop.xlane.xlu0 %1065
        %v1067 = vsel %vm827, %v1057, 0.0
        %1068 = vadd.xlane.f32.xlu0 %v1067
        %v1069 = vpop.xlane.xlu0 %1068
        %v1070 = vrcp.pop %v1060
        %v1071 = vrcp.pop %v1063
        %v1072 = vrcp.pop %v1066
        %v1073 = vrcp.pop %v1069
        %v1074 = vmul.f32 %v1051, %v1070
        %v1075 = vmul.f32 %v1053, %v1071
        %v1076 = vmul.f32 %v1055, %v1072
        %v1077 = vmul.f32 %v1057, %v1073
        %v1078 = vpack.c.bf16 %v1074, %v1074
        %v1079 = vpack.c.bf16 %v1075, %v1075
        %v1080 = vpack.c.bf16 %v1076, %v1076
        %v1081 = vpack.c.bf16 %v1077, %v1077
        %1083 = vrot.lane.b32.xlu0 %v619, 64
        %v1084 = vpop.permute.xlu0 %1083
        %v1086 = vsel %vm827, %v1078, 0
        %vm1088 = vcmask 1043456
        %v1090 = vsel %vm1088, %v1084, 0
        %1092 = vmatprep.subr.bf16.mxu0 0
        %1093 = vmatpush1.bf16.msra.mxu0 0
        %1094 = vmatprep.subr.bf16.mxu0 0
        %1095 = vmatpush1.bf16.msra.mxu0 0
        %1096 = vmatprep.subr.bf16.mxu0 0
        %1097 = vmatpush1.bf16.msra.mxu0 0
        %1098 = vmatprep.subr.bf16.mxu0 0
        %1099 = vmatpush1.bf16.msra.mxu0 0
        %1100 = vmatprep.subr.bf16.mxu0 0
        %1101 = vmatpush1.bf16.msra.mxu0 0
        %1102 = vmatprep.subr.bf16.mxu0 0
        %1103 = vmatpush1.bf16.msra.mxu0 0
        %1104 = vmatprep.subr.bf16.mxu0 0
        %1105 = vmatpush1.bf16.msra.mxu0 0
        %1106 = vmatprep.subr.bf16.mxu0 0
        %1107 = vmatpush1.bf16.msra.mxu0 %v1090
        %1108 = vmatprep.subr.bf16.mxu0 0
        %1109 = vmatpush2.bf16.msra.mxu0 0
        %1110 = vmatprep.subr.bf16.mxu0 0
        %1111 = vmatpush2.bf16.msra.mxu0 0
        %1112 = vmatprep.subr.bf16.mxu0 0
        %1113 = vmatpush2.bf16.msra.mxu0 0
        %1114 = vmatprep.subr.bf16.mxu0 0
        %1115 = vmatpush2.bf16.msra.mxu0 0
        %1116 = vmatprep.subr.bf16.mxu0 0
        %1117 = vmatpush2.bf16.msra.mxu0 0
        %1118 = vmatprep.subr.bf16.mxu0 0
        %1119 = vmatpush2.bf16.msra.mxu0 0
        %1120 = vmatprep.subr.bf16.mxu0 0
        %1121 = vmatpush2.bf16.msra.mxu0 0
        %1122 = vmatprep.subr.bf16.mxu0 0
        %1123 = vmatpush2.bf16.msra.mxu0 0
        %1124 = vmatprep.mubr.bf16.mxu0 0
        %1125 = vmatmul.mubr.bf16.gmra.mxu0 %v1086
        %v1126 = vpop.f32.mrf.mxu0
        %v1127 = vadd.f32 0.0, %v1126
        %v1128 = vpop.f32.mrf.mxu0
        %v1129 = vpop.f32.mrf.mxu0
        %v1130 = vpop.f32.mrf.mxu0
        %1131 = vdwg.mxu0
        %1133 = vrot.lane.b32.xlu0 %v620, 64
        %v1134 = vpop.permute.xlu0 %1133
        %v1136 = vsel %vm827, %v1079, 0
        %v1139 = vsel %vm1088, %v1134, 0
        %1141 = vmatprep.subr.bf16.mxu0 0
        %1142 = vmatpush1.bf16.msra.mxu0 0
        %1143 = vmatprep.subr.bf16.mxu0 0
        %1144 = vmatpush1.bf16.msra.mxu0 0
        %1145 = vmatprep.subr.bf16.mxu0 0
        %1146 = vmatpush1.bf16.msra.mxu0 0
        %1147 = vmatprep.subr.bf16.mxu0 0
        %1148 = vmatpush1.bf16.msra.mxu0 0
        %1149 = vmatprep.subr.bf16.mxu0 0
        %1150 = vmatpush1.bf16.msra.mxu0 0
        %1151 = vmatprep.subr.bf16.mxu0 0
        %1152 = vmatpush1.bf16.msra.mxu0 0
        %1153 = vmatprep.subr.bf16.mxu0 0
        %1154 = vmatpush1.bf16.msra.mxu0 0
        %1155 = vmatprep.subr.bf16.mxu0 0
        %1156 = vmatpush1.bf16.msra.mxu0 %v1139
        %1157 = vmatprep.subr.bf16.mxu0 0
        %1158 = vmatpush2.bf16.msra.mxu0 0
        %1159 = vmatprep.subr.bf16.mxu0 0
        %1160 = vmatpush2.bf16.msra.mxu0 0
        %1161 = vmatprep.subr.bf16.mxu0 0
        %1162 = vmatpush2.bf16.msra.mxu0 0
        %1163 = vmatprep.subr.bf16.mxu0 0
        %1164 = vmatpush2.bf16.msra.mxu0 0
        %1165 = vmatprep.subr.bf16.mxu0 0
        %1166 = vmatpush2.bf16.msra.mxu0 0
        %1167 = vmatprep.subr.bf16.mxu0 0
        %1168 = vmatpush2.bf16.msra.mxu0 0
        %1169 = vmatprep.subr.bf16.mxu0 0
        %1170 = vmatpush2.bf16.msra.mxu0 0
        %1171 = vmatprep.subr.bf16.mxu0 0
        %1172 = vmatpush2.bf16.msra.mxu0 0
        %1173 = vmatprep.mubr.bf16.mxu0 0
        %1174 = vmatmul.mubr.bf16.gmra.mxu0 %v1136
        %v1175 = vpop.f32.mrf.mxu0
        %v1176 = vadd.f32 0.0, %v1175
        %v1177 = vpop.f32.mrf.mxu0
        %v1178 = vpop.f32.mrf.mxu0
        %v1179 = vpop.f32.mrf.mxu0
        %1180 = vdwg.mxu0
        %1182 = vrot.lane.b32.xlu0 %v621, 64
        %v1183 = vpop.permute.xlu0 %1182
        %v1185 = vsel %vm827, %v1080, 0
        %v1188 = vsel %vm1088, %v1183, 0
        %1190 = vmatprep.subr.bf16.mxu0 0
        %1191 = vmatpush1.bf16.msra.mxu0 0
        %1192 = vmatprep.subr.bf16.mxu0 0
        %1193 = vmatpush1.bf16.msra.mxu0 0
        %1194 = vmatprep.subr.bf16.mxu0 0
        %1195 = vmatpush1.bf16.msra.mxu0 0
        %1196 = vmatprep.subr.bf16.mxu0 0
        %1197 = vmatpush1.bf16.msra.mxu0 0
        %1198 = vmatprep.subr.bf16.mxu0 0
        %1199 = vmatpush1.bf16.msra.mxu0 0
        %1200 = vmatprep.subr.bf16.mxu0 0
        %1201 = vmatpush1.bf16.msra.mxu0 0
        %1202 = vmatprep.subr.bf16.mxu0 0
        %1203 = vmatpush1.bf16.msra.mxu0 0
        %1204 = vmatprep.subr.bf16.mxu0 0
        %1205 = vmatpush1.bf16.msra.mxu0 %v1188
        %1206 = vmatprep.subr.bf16.mxu0 0
        %1207 = vmatpush2.bf16.msra.mxu0 0
        %1208 = vmatprep.subr.bf16.mxu0 0
        %1209 = vmatpush2.bf16.msra.mxu0 0
        %1210 = vmatprep.subr.bf16.mxu0 0
        %1211 = vmatpush2.bf16.msra.mxu0 0
        %1212 = vmatprep.subr.bf16.mxu0 0
        %1213 = vmatpush2.bf16.msra.mxu0 0
        %1214 = vmatprep.subr.bf16.mxu0 0
        %1215 = vmatpush2.bf16.msra.mxu0 0
        %1216 = vmatprep.subr.bf16.mxu0 0
        %1217 = vmatpush2.bf16.msra.mxu0 0
        %1218 = vmatprep.subr.bf16.mxu0 0
        %1219 = vmatpush2.bf16.msra.mxu0 0
        %1220 = vmatprep.subr.bf16.mxu0 0
        %1221 = vmatpush2.bf16.msra.mxu0 0
        %1222 = vmatprep.mubr.bf16.mxu0 0
        %1223 = vmatmul.mubr.bf16.gmra.mxu0 %v1185
        %v1224 = vpop.f32.mrf.mxu0
        %v1225 = vadd.f32 0.0, %v1224
        %v1226 = vpop.f32.mrf.mxu0
        %v1227 = vpop.f32.mrf.mxu0
        %v1228 = vpop.f32.mrf.mxu0
        %1229 = vdwg.mxu0
        %1231 = vrot.lane.b32.xlu0 %v622, 64
        %v1232 = vpop.permute.xlu0 %1231
        %v1234 = vsel %vm827, %v1081, 0
        %v1237 = vsel %vm1088, %v1232, 0
        %1239 = vmatprep.subr.bf16.mxu0 0
        %1240 = vmatpush1.bf16.msra.mxu0 0
        %1241 = vmatprep.subr.bf16.mxu0 0
        %1242 = vmatpush1.bf16.msra.mxu0 0
        %1243 = vmatprep.subr.bf16.mxu0 0
        %1244 = vmatpush1.bf16.msra.mxu0 0
        %1245 = vmatprep.subr.bf16.mxu0 0
        %1246 = vmatpush1.bf16.msra.mxu0 0
        %1247 = vmatprep.subr.bf16.mxu0 0
        %1248 = vmatpush1.bf16.msra.mxu0 0
        %1249 = vmatprep.subr.bf16.mxu0 0
        %1250 = vmatpush1.bf16.msra.mxu0 0
        %1251 = vmatprep.subr.bf16.mxu0 0
        %1252 = vmatpush1.bf16.msra.mxu0 0
        %1253 = vmatprep.subr.bf16.mxu0 0
        %1254 = vmatpush1.bf16.msra.mxu0 %v1237
        %1255 = vmatprep.subr.bf16.mxu0 0
        %1256 = vmatpush2.bf16.msra.mxu0 0
        %1257 = vmatprep.subr.bf16.mxu0 0
        %1258 = vmatpush2.bf16.msra.mxu0 0
        %1259 = vmatprep.subr.bf16.mxu0 0
        %1260 = vmatpush2.bf16.msra.mxu0 0
        %1261 = vmatprep.subr.bf16.mxu0 0
        %1262 = vmatpush2.bf16.msra.mxu0 0
        %1263 = vmatprep.subr.bf16.mxu0 0
        %1264 = vmatpush2.bf16.msra.mxu0 0
        %1265 = vmatprep.subr.bf16.mxu0 0
        %1266 = vmatpush2.bf16.msra.mxu0 0
        %1267 = vmatprep.subr.bf16.mxu0 0
        %1268 = vmatpush2.bf16.msra.mxu0 0
        %1269 = vmatprep.subr.bf16.mxu0 0
        %1270 = vmatpush2.bf16.msra.mxu0 0
        %1271 = vmatprep.mubr.bf16.mxu0 0
        %1272 = vmatmul.mubr.bf16.gmra.mxu0 %v1234
        %v1273 = vpop.f32.mrf.mxu0
        %v1274 = vadd.f32 0.0, %v1273
        %v1275 = vpop.f32.mrf.mxu0
        %v1276 = vpop.f32.mrf.mxu0
        %v1277 = vpop.f32.mrf.mxu0
        %1278 = vdwg.mxu0
        %1279 = vst.msk [vmem:[#allocation2] sm:$0xff] %vm827, %v1127
        %1281 = vrot.lane.b32.xlu0 %v1176, 8
        %v1282 = vpop.permute.xlu0 %1281
        %vm1284 = vcmask 130112
        %1285 = vst.msk [vmem:[#allocation2] sm:$0xff] %vm1284, %v1282
        %1287 = vrot.lane.b32.xlu0 %v1225, 16
        %v1288 = vpop.permute.xlu0 %1287
        %vm1290 = vcmask 195712
        %1291 = vst.msk [vmem:[#allocation2] sm:$0xff] %vm1290, %v1288
        %1293 = vrot.lane.b32.xlu0 %v1274, 24
        %v1294 = vpop.permute.xlu0 %1293
        %vm1296 = vcmask 261312
        %1297 = vst.msk [vmem:[#allocation2] sm:$0xff] %vm1296, %v1294
        %v1298 = vld [vmem:[#allocation2] sm:$0xff]
        %v1299 = vpack.c.bf16 %v1298, %v1298
        %v1300 = vld [vmem:[%s5] sm:$0xf]
        %v1301 = vld [vmem:[%s5 + $0x4] sm:$0xf]
        %v1302 = vld [vmem:[%s5 + $0x8] sm:$0xf]
        %v1303 = vld [vmem:[%s5 + $0xc] sm:$0xf]
        %v1308 = vunpack.c.l.b16 %v1300
        %v1309 = vunpack.c.l.b16 %v1301
        %v1310 = vunpack.c.l.b16 %v1302
        %v1311 = vunpack.c.l.b16 %v1303
        %v1312 = vpack.c.b16 %v1309, %v1308
        %v1313 = vpack.c.b16 %v1311, %v1310
        %v1317 = vsel %vm520, %v1299, 0
        %1319 = vmatprep.subr.bf16.mxu0 0
        %1320 = vmatpush1.bf16.msra.mxu0 0
        %1321 = vmatprep.subr.bf16.mxu0 0
        %1322 = vmatpush1.bf16.msra.mxu0 0
        %1323 = vmatprep.subr.bf16.mxu0 0
        %1324 = vmatpush1.bf16.msra.mxu0 0
        %1325 = vmatprep.subr.bf16.mxu0 0
        %1326 = vmatpush1.bf16.msra.mxu0 0
        %1327 = vmatprep.subr.bf16.mxu0 0
        %1328 = vmatpush1.bf16.msra.mxu0 0
        %1329 = vmatprep.subr.bf16.mxu0 0
        %1330 = vmatpush1.bf16.msra.mxu0 0
        %1331 = vmatprep.subr.bf16.mxu0 0
        %1332 = vmatpush1.bf16.msra.mxu0 %v1313
        %1333 = vmatprep.subr.bf16.mxu0 0
        %1334 = vmatpush1.bf16.msra.mxu0 %v1312
        %1335 = vmatprep.subr.bf16.mxu0 0
        %1336 = vmatpush2.bf16.msra.mxu0 0
        %1337 = vmatprep.subr.bf16.mxu0 0
        %1338 = vmatpush2.bf16.msra.mxu0 0
        %1339 = vmatprep.subr.bf16.mxu0 0
        %1340 = vmatpush2.bf16.msra.mxu0 0
        %1341 = vmatprep.subr.bf16.mxu0 0
        %1342 = vmatpush2.bf16.msra.mxu0 0
        %1343 = vmatprep.subr.bf16.mxu0 0
        %1344 = vmatpush2.bf16.msra.mxu0 0
        %1345 = vmatprep.subr.bf16.mxu0 0
        %1346 = vmatpush2.bf16.msra.mxu0 0
        %1347 = vmatprep.subr.bf16.mxu0 0
        %1348 = vmatpush2.bf16.msra.mxu0 0
        %1349 = vmatprep.subr.bf16.mxu0 0
        %1350 = vmatpush2.bf16.msra.mxu0 0
        %1351 = vmatprep.mubr.bf16.mxu0 0
        %1352 = vmatmul.mubr.bf16.gmra.mxu0 %v1317
        %v1353 = vpop.f32.mrf.mxu0
        %v1354 = vadd.f32 0.0, %v1353
        %v1355 = vpop.f32.mrf.mxu0
        %v1356 = vpop.f32.mrf.mxu0
        %v1357 = vpop.f32.mrf.mxu0
        %1358 = vdwg.mxu0
        %v1359 = vadd.f32 %v517, %v1354
        %v1360 = vld [vmem:[%s12] sm:$0x1]
        %v1361 = vld [vmem:[%s13] sm:$0x1]
        %v1362 = vsel %vm520, %v1359, 0.0
        %1363 = vadd.xlane.f32.xlu0 %v1362
        %v1364 = vpop.xlane.xlu0 %1363
        %v1365 = vmul.f32 %v1364, %v524
        %v1366 = vsub.f32 %v1359, %v1365
        %v1367 = vmul.f32 %v1366, %v1366
        %v1368 = vsel %vm520, %v1367, 0.0
        %1369 = vadd.xlane.f32.xlu0 %v1368
        %v1370 = vpop.xlane.xlu0 %1369
        %v1371 = vmul.f32 %v1370, %v524
        %v1372 = vadd.f32 %v1371, 1e-05
        %v1373 = vrsqrt.pop %v1372
        %v1374 = vmul.f32 %v1366, %v1373
        %v1376 = vlaneseq
        %v1377 = vshrl.u32 %v1376, 7
        %v1378 = vsub.s32 0, %v1377
        %v1379 = vrot.slane %v1360, %v1378
        %v1381 = vmul.f32 %v1374, %v1379
        %v1383 = vlaneseq
        %v1384 = vshrl.u32 %v1383, 7
        %v1385 = vsub.s32 0, %v1384
        %v1386 = vrot.slane %v1361, %v1385
        %v1388 = vadd.f32 %v1381, %v1386
        %v1389 = vpack.c.bf16 %v1388, %v1388
        %v1390 = vld [vmem:[#allocation9] sm:$0xf]
        %v1391 = vld [vmem:[#allocation9 + $0x4] sm:$0xf]
        %v1392 = vld [vmem:[#allocation9 + $0x8] sm:$0xf]
        %v1393 = vld [vmem:[#allocation9 + $0xc] sm:$0xf]
        %v1394 = vld [vmem:[%s7] sm:$0x1]
        %v1396 = vlaneseq
        %v1397 = vshrl.u32 %v1396, 7
        %v1398 = vsub.s32 0, %v1397
        %v1399 = vrot.slane %v1394, %v1398
        %v1405 = vunpack.c.l.b16 %v1390
        %v1406 = vunpack.c.l.b16 %v1391
        %v1407 = vunpack.c.l.b16 %v1392
        %v1408 = vunpack.c.l.b16 %v1393
        %v1409 = vpack.c.b16 %v1406, %v1405
        %v1410 = vpack.c.b16 %v1408, %v1407
        %v1414 = vsel %vm520, %v1389, 0
        %1416 = vmatprep.subr.bf16.mxu0 0
        %1417 = vmatpush1.bf16.msra.mxu0 0
        %1418 = vmatprep.subr.bf16.mxu0 0
        %1419 = vmatpush1.bf16.msra.mxu0 0
        %1420 = vmatprep.subr.bf16.mxu0 0
        %1421 = vmatpush1.bf16.msra.mxu0 0
        %1422 = vmatprep.subr.bf16.mxu0 0
        %1423 = vmatpush1.bf16.msra.mxu0 0
        %1424 = vmatprep.subr.bf16.mxu0 0
        %1425 = vmatpush1.bf16.msra.mxu0 0
        %1426 = vmatprep.subr.bf16.mxu0 0
        %1427 = vmatpush1.bf16.msra.mxu0 0
        %1428 = vmatprep.subr.bf16.mxu0 0
        %1429 = vmatpush1.bf16.msra.mxu0 %v1410
        %1430 = vmatprep.subr.bf16.mxu0 0
        %1431 = vmatpush1.bf16.msra.mxu0 %v1409
        %1432 = vmatprep.subr.bf16.mxu0 0
        %1433 = vmatpush2.bf16.msra.mxu0 0
        %1434 = vmatprep.subr.bf16.mxu0 0
        %1435 = vmatpush2.bf16.msra.mxu0 0
        %1436 = vmatprep.subr.bf16.mxu0 0
        %1437 = vmatpush2.bf16.msra.mxu0 0
        %1438 = vmatprep.subr.bf16.mxu0 0
        %1439 = vmatpush2.bf16.msra.mxu0 0
        %1440 = vmatprep.subr.bf16.mxu0 0
        %1441 = vmatpush2.bf16.msra.mxu0 0
        %1442 = vmatprep.subr.bf16.mxu0 0
        %1443 = vmatpush2.bf16.msra.mxu0 0
        %1444 = vmatprep.subr.bf16.mxu0 0
        %1445 = vmatpush2.bf16.msra.mxu0 0
        %1446 = vmatprep.subr.bf16.mxu0 0
        %1447 = vmatpush2.bf16.msra.mxu0 0
        %1448 = vmatprep.mubr.bf16.mxu0 0
        %1449 = vmatmul.mubr.bf16.gmra.mxu0 %v1414
        %v1450 = vpop.f32.mrf.mxu0
        %v1451 = vadd.f32 %v1399, %v1450
        %v1452 = vpop.f32.mrf.mxu0
        %v1453 = vpop.f32.mrf.mxu0
        %v1454 = vpop.f32.mrf.mxu0
        %1455 = vdwg.mxu0
        %v1456 = vxor.u32 %v1451, 2147483648
        %v1457 = vmul.f32 %v1456, 1.442695
        %v1458 = vpow.pop %v1457
        %v1459 = vadd.f32 %v1458, 1.0
        %v1460 = vrcp.pop %v1459
        %v1461 = vmul.f32 1.0, %v1460
        %v1462 = vmul.f32 %v1451, %v1461
        %v1463 = vpack.c.bf16 %v1462, %v1462
        %v1464 = vld [vmem:[%s8] sm:$0xf]
        %v1465 = vld [vmem:[%s8 + $0x4] sm:$0xf]
        %v1466 = vld [vmem:[%s8 + $0x8] sm:$0xf]
        %v1467 = vld [vmem:[%s8 + $0xc] sm:$0xf]
        %v1468 = vld [vmem:[%s8 + $0x10] sm:$0xf]
        %v1469 = vld [vmem:[%s8 + $0x14] sm:$0xf]
        %v1470 = vld [vmem:[%s8 + $0x18] sm:$0xf]
        %v1471 = vld [vmem:[%s8 + $0x1c] sm:$0xf]
        %v1472 = vld [vmem:[%s9] sm:$0x1]
        %v1474 = vlaneseq
        %v1475 = vshrl.u32 %v1474, 7
        %v1476 = vsub.s32 0, %v1475
        %v1477 = vrot.slane %v1472, %v1476
        %v1487 = vunpack.c.l.b16 %v1464
        %v1488 = vunpack.c.l.b16 %v1465
        %v1489 = vunpack.c.l.b16 %v1466
        %v1490 = vunpack.c.l.b16 %v1467
        %v1491 = vunpack.c.l.b16 %v1468
        %v1492 = vunpack.c.l.b16 %v1469
        %v1493 = vunpack.c.l.b16 %v1470
        %v1494 = vunpack.c.l.b16 %v1471
        %v1495 = vpack.c.b16 %v1488, %v1487
        %v1496 = vpack.c.b16 %v1490, %v1489
        %v1497 = vpack.c.b16 %v1492, %v1491
        %v1498 = vpack.c.b16 %v1494, %v1493
        %vm1503 = vcmask 523264
        %v1505 = vsel %vm1503, %v1463, 0
        %1507 = vmatprep.subr.bf16.mxu0 0
        %1508 = vmatpush1.bf16.msra.mxu0 0
        %1509 = vmatprep.subr.bf16.mxu0 0
        %1510 = vmatpush1.bf16.msra.mxu0 0
        %1511 = vmatprep.subr.bf16.mxu0 0
        %1512 = vmatpush1.bf16.msra.mxu0 0
        %1513 = vmatprep.subr.bf16.mxu0 0
        %1514 = vmatpush1.bf16.msra.mxu0 0
        %1515 = vmatprep.subr.bf16.mxu0 0
        %1516 = vmatpush1.bf16.msra.mxu0 %v1498
        %1517 = vmatprep.subr.bf16.mxu0 0
        %1518 = vmatpush1.bf16.msra.mxu0 %v1497
        %1519 = vmatprep.subr.bf16.mxu0 0
        %1520 = vmatpush1.bf16.msra.mxu0 %v1496
        %1521 = vmatprep.subr.bf16.mxu0 0
        %1522 = vmatpush1.bf16.msra.mxu0 %v1495
        %1523 = vmatprep.subr.bf16.mxu0 0
        %1524 = vmatpush2.bf16.msra.mxu0 0
        %1525 = vmatprep.subr.bf16.mxu0 0
        %1526 = vmatpush2.bf16.msra.mxu0 0
        %1527 = vmatprep.subr.bf16.mxu0 0
        %1528 = vmatpush2.bf16.msra.mxu0 0
        %1529 = vmatprep.subr.bf16.mxu0 0
        %1530 = vmatpush2.bf16.msra.mxu0 0
        %1531 = vmatprep.subr.bf16.mxu0 0
        %1532 = vmatpush2.bf16.msra.mxu0 0
        %1533 = vmatprep.subr.bf16.mxu0 0
        %1534 = vmatpush2.bf16.msra.mxu0 0
        %1535 = vmatprep.subr.bf16.mxu0 0
        %1536 = vmatpush2.bf16.msra.mxu0 0
        %1537 = vmatprep.subr.bf16.mxu0 0
        %1538 = vmatpush2.bf16.msra.mxu0 0
        %1539 = vmatprep.mubr.bf16.mxu0 0
        %1540 = vmatmul.mubr.bf16.gmra.mxu0 %v1505
        %v1541 = vpop.f32.mrf.mxu0
        %v1542 = vadd.f32 %v1477, %v1541
        %v1543 = vpop.f32.mrf.mxu0
        %v1544 = vpop.f32.mrf.mxu0
        %v1545 = vpop.f32.mrf.mxu0
        %1546 = vdwg.mxu0
        %v1547 = vadd.f32 %v1359, %v1542
        %1548 = vst.msk [vmem:[%s511] sm:$0xff] %vm520, %v1547
        %s1549 = sand.u32 %s338, 1
        %s1550 = scalar_lea.sflag [#allocation5], %s1549
        %s1551 = sand.u32 %s338, 1
        %s1552 = smul.addr %s1551, 8
        %s1553 = scalar_lea.vmem [#allocation11], %s1552
        // Predicated region
        $region93: #{tpu_custom_call.1} parent=75 // pred_check
          %p1554 = pneg %p348
        $region94: #{tpu_custom_call.1} parent=75 // pred_check_branch
          %1556 = sbr.rel (%p1554) target = $region96
        $region95: #{tpu_custom_call.1} parent=75 // pred_region
          %s1558 = ssub.s32 128, 128
          %1559 = vsyncadd %s1550, %s1558
          %s1560 = smul.addr %s31, 128
          %s1561 = scalar_lea.hbm %s14, %s1560
          %s1563 = sshll.u32 %s1553, 4
          %s1564 = int_to_ptr.vmem [resolvable:$true] %s1563
          %1566 = dma.vmem_to_hbm [thread:$0]  %s1564, 128, %s1561, %s1550
        $region96: #{tpu_custom_call.1} parent=75 // pred_fallthru
          _
      $region76: #{tpu_custom_call.1} parent=5 // pred_fallthru
        _
      %p1567 = scmp.le.s32.totalorder 2, %s26
      // Predicated region
      $region97: #{tpu_custom_call.1} parent=5 // pred_check
        %p1568 = pneg %p1567
      $region98: #{tpu_custom_call.1} parent=5 // pred_check_branch
        %1570 = sbr.rel (%p1568) target = $region100
      $region99: #{tpu_custom_call.1} parent=5 // pred_region
        %s1571 = ssub.s32 %s26, 2
        // Predicated region
        $region101: #{tpu_custom_call.1} parent=99 // pred_check
          %p1572 = pneg %p354
        $region102: #{tpu_custom_call.1} parent=99 // pred_check_branch
          %1574 = sbr.rel (%p1572) target = $region104
        $region103: #{tpu_custom_call.1} parent=99 // pred_region
          %s1575 = sand.u32 %s339, 1
          %s1576 = scalar_lea.sflag [#allocation5], %s1575
          %s1577 = sand.u32 %s339, 1
          %s1578 = smul.addr %s1577, 8
          %s1579 = scalar_lea.vmem [#allocation11], %s1578
          %1580 = dma.done %s1576, 128
        $region104: #{tpu_custom_call.1} parent=99 // pred_fallthru
          _
      $region100: #{tpu_custom_call.1} parent=5 // pred_fallthru
        _
    $region6: #{tpu_custom_call.1} parent=1 // loop_footer
      %s30 = sadd.s32 1, %s26
    $region7: #{tpu_custom_call.1} parent=1 // loop_footer_branch
      %25 = sbr.rel target = $region3
    $region8: #{tpu_custom_call.1} parent=1 // loop_exit
      _
    %1581 = vsyncpa [#allocation4], 1
    %s1582 = scalar_lea.sflag [#allocation4], 1
    %1583 = vsyncpa %s1582, 1
    %1584 = vsyncpa [#allocation7], 1
    %1585 = vsyncpa [#allocation10], 1
    %1586 = vsyncpa [#allocation5], 1
    %s1587 = scalar_lea.sflag [#allocation5], 1
    %1588 = vsyncpa %s1587, 1

</llo_original>
